<compile_context>
chip_gen: v7x
topology: tpu7x:2x2x1
jax: 0.10.0
libtpu: 0.0.40
codegen_flags: <defaults>
</compile_context>

<pallas_src>
import math

import jax
import jax.numpy as jnp
from jax.experimental import pallas as pl
from jax.experimental.pallas import tpu as pltpu

_EPSILON = 1e-6
_HALF_LOG_2PI = 0.5 * math.log(2.0 * math.pi)


def _round_up(x, m):
    return ((x + m - 1) // m) * m


# ----------------------------------------------------------------------------
# Fused multi-layer LSTM stack: one kernel invocation for the whole sequence
# and all N layers.
# ----------------------------------------------------------------------------
def _make_lstm_stack_kernel(n_layers, T, Bp, H):
    """Builds the fused LSTM-stack kernel.

    Kernel args: x_ref (T*Bp, Din), then per layer (w_ih, w_hh, b), then
    out_ref (T*Bp, n_layers*H), then scratch: gates_x (T*Bp, 4H),
    h_seq (T*Bp, H), h (Bp, H), c (Bp, H).
    """

    def kernel(x_ref, *args):
        w_refs = args[:3 * n_layers]
        out_ref = args[3 * n_layers]
        gx_sc, hseq_sc, h_sc, c_sc = args[3 * n_layers + 1:]

        for layer in range(n_layers):           # static, unrolled over layers
            w_ih = w_refs[3 * layer]
            w_hh = w_refs[3 * layer + 1]
            b = w_refs[3 * layer + 2]

            # Hoisted input projection: one (T*Bp, Din_l) x (Din_l, 4H) MXU
            # matmul instead of T tiny matmuls on the serial path.
            src = x_ref[...] if layer == 0 else hseq_sc[...]
            gx_sc[...] = (
                jnp.dot(src, w_ih[...], preferred_element_type=jnp.float32)
                + b[...])

            h_sc[...] = jnp.zeros_like(h_sc)
            c_sc[...] = jnp.zeros_like(c_sc)

            def step(t, carry):
                row = pl.multiple_of(t * Bp, Bp)          # 8-aligned row start
                gates = (gx_sc[pl.ds(row, Bp), :]
                         + jnp.dot(h_sc[...], w_hh[...],
                                   preferred_element_type=jnp.float32))
                i = jax.nn.sigmoid(gates[:, 0 * H:1 * H])
                f = jax.nn.sigmoid(gates[:, 1 * H:2 * H])
                g = jnp.tanh(gates[:, 2 * H:3 * H])
                o = jax.nn.sigmoid(gates[:, 3 * H:4 * H])
                c = f * c_sc[...] + i * g
                h = o * jnp.tanh(c)
                c_sc[...] = c
                h_sc[...] = h
                hseq_sc[pl.ds(row, Bp), :] = h
                return carry

            # Short fixed trip count -> fully unrolled for LLO visibility.
            jax.lax.fori_loop(0, T, step, 0, unroll=True)

            # One store of the whole layer slab into its channel slice
            # (N stores total, not N*T).
            out_ref[:, layer * H:(layer + 1) * H] = hseq_sc[...]

    return kernel


def lstm_stack(x, lstm_params):
    """Stacked LSTM with zero initial state.

    x: (T, B, Din) -> (T, B, N*H)  (hidden states of all layers, concatenated
    along the feature axis, i.e. the `torch.cat(h, -1)` of the module).
    """
    T, B, Din = x.shape
    n_layers = len(lstm_params)
    H = lstm_params[0][1].shape[0]

    # Pad batch to a multiple of 8 sublanes; padded rows are independent and
    # sliced off at the end (LSTM math is row-independent).
    Bp = _round_up(B, 8)
    if Bp != B:
        x = jnp.pad(x, ((0, 0), (0, Bp - B), (0, 0)))
    M = T * Bp
    x2 = x.reshape(M, Din)                       # row index = t*Bp + b

    weight_args = []
    in_specs = [pl.BlockSpec((M, Din), lambda i: (0, 0))]
    for (w_ih, w_hh, b) in lstm_params:
        weight_args += [w_ih, w_hh, b]
        in_specs += [
            pl.BlockSpec(w_ih.shape, lambda i: (0, 0)),
            pl.BlockSpec(w_hh.shape, lambda i: (0, 0)),
            pl.BlockSpec(b.shape, lambda i: (0, 0)),
        ]

    kernel = _make_lstm_stack_kernel(n_layers, T, Bp, H)
    out = pl.pallas_call(
        kernel,
        out_shape=jax.ShapeDtypeStruct((M, n_layers * H), jnp.float32),
        grid=(1,),
        in_specs=in_specs,
        out_specs=pl.BlockSpec((M, n_layers * H), lambda i: (0, 0)),
        scratch_shapes=[
            pltpu.VMEM((M, 4 * H), jnp.float32),   # hoisted input-proj gates
            pltpu.VMEM((M, H), jnp.float32),       # current layer h over all t
            pltpu.VMEM((Bp, H), jnp.float32),      # h_t
            pltpu.VMEM((Bp, H), jnp.float32),      # c_t
        ],
        # Sequential recurrence; total VMEM footprint is a few hundred KiB so
        # no vmem_limit_bytes override is needed (fits v7x's 64 MiB easily).
        compiler_params=pltpu.CompilerParams(
            dimension_semantics=("arbitrary",)),
    )(x2, *weight_args)

    return out.reshape(T, Bp, n_layers * H)[:, :B]


# ----------------------------------------------------------------------------
# Head kernel: fused loc|scale linear + softplus + Gaussian NLL reduction.
# ----------------------------------------------------------------------------
def _head_kernel(h_ref, w_ref, b_ref, y_ref, out_ref, nll_ref):
    d = y_ref.shape[1]
    h = h_ref[...]                                             # (M, K)
    # One matmul for both heads: columns [0:d] -> loc, [d:2d] -> scale preact.
    ls = jnp.dot(h, w_ref[...], preferred_element_type=jnp.float32) + b_ref[...]
    loc = ls[:, :d]
    scale = jax.nn.softplus(ls[:, d:]) + _EPSILON
    out_ref[:, :d] = loc
    out_ref[:, d:] = scale

    y = y_ref[...]
    log_prob = (-(y - loc) ** 2 / (2.0 * scale * scale)
                - jnp.log(scale)
                - _HALF_LOG_2PI)
    nll_ref[...] = (-jnp.mean(log_prob)).reshape(1, 1)


def head(h_pred, w_loc, b_loc, w_scale, b_scale, y_pred):
    Tq, B, K = h_pred.shape
    D = w_loc.shape[1]
    M = Tq * B
    h2 = h_pred.reshape(M, K)
    y2 = y_pred.reshape(M, D)
    # Fuse the two heads -> one matmul, one output slab (split in the wrapper).
    w = jnp.concatenate([w_loc, w_scale], axis=1)      # (K, 2D)
    b = jnp.concatenate([b_loc, b_scale], axis=1)      # (1, 2D)

    out, nll = pl.pallas_call(
        _head_kernel,
        out_shape=(jax.ShapeDtypeStruct((M, 2 * D), jnp.float32),
                   jax.ShapeDtypeStruct((1, 1), jnp.float32)),
        grid=(1,),
        in_specs=[
            pl.BlockSpec((M, K), lambda i: (0, 0)),
            pl.BlockSpec((K, 2 * D), lambda i: (0, 0)),
            pl.BlockSpec((1, 2 * D), lambda i: (0, 0)),
            pl.BlockSpec((M, D), lambda i: (0, 0)),
        ],
        out_specs=(pl.BlockSpec((M, 2 * D), lambda i: (0, 0)),
                   pl.BlockSpec((1, 1), lambda i: (0, 0))),
    )(h2, w, b, y2)
    loc = out[:, :D].reshape(Tq, B, D)
    scale = out[:, D:].reshape(Tq, B, D)
    return loc, scale, nll[0, 0]


# ----------------------------------------------------------------------------
# Full forward (eval mode)
# ----------------------------------------------------------------------------
def deepar_cedar_forward(params, X_emb, X_cov, X_lag, y, d_outputseqlen):
    dim_seq = X_lag.shape[0]

    # Embedding lookups (gather glue stays in plain JAX)
    x_emb = [jnp.take(emb_w, X_emb[:, :, i], axis=0)
             for i, emb_w in enumerate(params["emb"])]
    if x_emb:
        x_emb = jnp.concatenate(x_emb, axis=-1)
        inputs = jnp.concatenate(
            (X_lag, X_cov[:dim_seq], x_emb[:dim_seq]), axis=-1)
    else:
        inputs = jnp.concatenate((X_lag, X_cov[:dim_seq]), axis=-1)

    # One fused kernel: all N LSTM layers + channel concat. Dropout = identity
    # in eval mode.
    h = lstm_stack(inputs, params["lstm"])          # (T, B, N*H)
    h_pred = h[-d_outputseqlen:]

    y_hat_loc, y_hat_scale, loss_y = head(
        h_pred, params["w_loc"], params["b_loc"],
        params["w_scale"], params["b_scale"], y[-d_outputseqlen:])

    penalty = 0.0  # eval mode (TODO(synk): MMD domain penalty not implemented)
    total_loss = loss_y + penalty
    y_hat_distr = (y_hat_loc, y_hat_scale)  # Normal(loc, scale) parameters
    return total_loss, loss_y, y_hat_distr, y_hat_loc, y_hat_scale


# ----------------------------------------------------------------------------
# Pure-JAX reference (numerical sanity check only)
# ----------------------------------------------------------------------------
_HI = jax.lax.Precision.HIGHEST


def _ref_lstm_layer(x, w_ih, w_hh, b):
    T, B, Din = x.shape
    H = w_hh.shape[0]

    def step(carry, xt):
        h, c = carry
        gates = (jnp.dot(xt, w_ih, precision=_HI)
                 + jnp.dot(h, w_hh, precision=_HI) + b)
        i = jax.nn.sigmoid(gates[:, :H])
        f = jax.nn.sigmoid(gates[:, H:2 * H])
        g = jnp.tanh(gates[:, 2 * H:3 * H])
        o = jax.nn.sigmoid(gates[:, 3 * H:])
        c = f * c + i * g
        h = o * jnp.tanh(c)
        return (h, c), h

    init = (jnp.zeros((B, H), jnp.float32), jnp.zeros((B, H), jnp.float32))
    _, hs = jax.lax.scan(step, init, x)
    return hs


def _ref_forward(params, X_emb, X_cov, X_lag, y, d_outputseqlen):
    dim_seq = X_lag.shape[0]
    x_emb = [jnp.take(emb_w, X_emb[:, :, i], axis=0)
             for i, emb_w in enumerate(params["emb"])]
    if x_emb:
        x_emb = jnp.concatenate(x_emb, axis=-1)
        inputs = jnp.concatenate(
            (X_lag, X_cov[:dim_seq], x_emb[:dim_seq]), axis=-1)
    else:
        inputs = jnp.concatenate((X_lag, X_cov[:dim_seq]), axis=-1)
    h = []
    for (w_ih, w_hh, b) in params["lstm"]:
        outputs = _ref_lstm_layer(inputs, w_ih, w_hh, b)
        inputs = outputs
        h.append(outputs)
    h = jnp.concatenate(h, axis=-1)
    h_pred = h[-d_outputseqlen:]
    loc = jnp.dot(h_pred, params["w_loc"], precision=_HI) + params["b_loc"]
    scale = jax.nn.softplus(
        jnp.dot(h_pred, params["w_scale"], precision=_HI)
        + params["b_scale"]) + _EPSILON
    yp = y[-d_outputseqlen:]
    log_prob = (-(yp - loc) ** 2 / (2.0 * scale * scale)
                - jnp.log(scale) - _HALF_LOG_2PI)
    loss_y = -jnp.mean(log_prob)
    return loss_y, loc, scale


# ----------------------------------------------------------------------------
if __name__ == "__main__":
    # Hyperparameters (small, consistent with the module's __init__)
    d_lag, d_cov = 2, 3
    d_emb = [(5, 2), (7, 3)]          # (num_embeddings, embedding_dim) per table
    d_emb_tot = sum(d for _, d in d_emb)
    d_output = 2
    d_hidden = 32
    N = 2                              # number of stacked LSTM layers
    seq = 8
    batch = 2
    d_outputseqlen = 4

    key = jax.random.PRNGKey(0)
    keys = jax.random.split(key, 32)
    k = iter(range(32))

    params = {}
    params["emb"] = [0.1 * jax.random.normal(keys[next(k)], (n, d), jnp.float32)
                     for (n, d) in d_emb]

    lstm_params = []
    din = d_lag + d_cov + d_emb_tot
    for _ in range(N):
        w_ih = 0.1 * jax.random.normal(keys[next(k)], (din, 4 * d_hidden), jnp.float32)
        w_hh = 0.1 * jax.random.normal(keys[next(k)], (d_hidden, 4 * d_hidden), jnp.float32)
        b = 0.1 * jax.random.normal(keys[next(k)], (1, 4 * d_hidden), jnp.float32)
        lstm_params.append((w_ih, w_hh, b))
        din = d_hidden
    params["lstm"] = lstm_params

    params["w_loc"] = 0.1 * jax.random.normal(keys[next(k)], (d_hidden * N, d_output), jnp.float32)
    params["b_loc"] = 0.1 * jax.random.normal(keys[next(k)], (1, d_output), jnp.float32)
    params["w_scale"] = 0.1 * jax.random.normal(keys[next(k)], (d_hidden * N, d_output), jnp.float32)
    params["b_scale"] = 0.1 * jax.random.normal(keys[next(k)], (1, d_output), jnp.float32)

    # Inputs (seq, batch, feature) — PyTorch LSTM layout
    X_emb = jax.random.randint(keys[next(k)], (seq, batch, len(d_emb)), 0, 5)
    X_cov = jax.random.normal(keys[next(k)], (seq, batch, d_cov), jnp.float32)
    X_lag = jax.random.normal(keys[next(k)], (seq, batch, d_lag), jnp.float32)
    y = jax.random.normal(keys[next(k)], (seq, batch, d_output), jnp.float32)

    total_loss, loss_y, y_hat_distr, y_hat_loc, y_hat_scale = deepar_cedar_forward(
        params, X_emb, X_cov, X_lag, y, d_outputseqlen)
    jax.block_until_ready((total_loss, loss_y, y_hat_loc, y_hat_scale))

    # Sanity check against a pure-JAX reference (tightened tolerance; small
    # slack left for MXU pass-count / transcendental-approximation differences).
    ref_loss, ref_loc, ref_scale = _ref_forward(
        params, X_emb, X_cov, X_lag, y, d_outputseqlen)
    assert jnp.allclose(loss_y, ref_loss, rtol=1e-3, atol=1e-3)
    assert jnp.allclose(y_hat_loc, ref_loc, rtol=1e-3, atol=1e-3)
    assert jnp.allclose(y_hat_scale, ref_scale, rtol=1e-3, atol=1e-3)
    assert total_loss.shape == ()
    assert y_hat_loc.shape == (d_outputseqlen, batch, d_output)
    assert y_hat_scale.shape == (d_outputseqlen, batch, d_output)

    print("KERNEL_OK")
</pallas_src>

<mosaic_0001>
module attributes {stable_mosaic.version = 11 : i64} {
  func.func @kernel(%arg0: i32, %arg1: memref<64x10xf32, #tpu.memory_space<vmem>>, %arg2: memref<10x128xf32, #tpu.memory_space<vmem>>, %arg3: memref<32x128xf32, #tpu.memory_space<vmem>>, %arg4: memref<1x128xf32, #tpu.memory_space<vmem>>, %arg5: memref<32x128xf32, #tpu.memory_space<vmem>>, %arg6: memref<32x128xf32, #tpu.memory_space<vmem>>, %arg7: memref<1x128xf32, #tpu.memory_space<vmem>>, %arg8: memref<64x64xf32, #tpu.memory_space<vmem>>, %arg9: memref<64x128xf32, #tpu.memory_space<vmem>>, %arg10: memref<64x32xf32, #tpu.memory_space<vmem>>, %arg11: memref<8x32xf32, #tpu.memory_space<vmem>>, %arg12: memref<8x32xf32, #tpu.memory_space<vmem>>) attributes {dimension_semantics = [#tpu.dimension_semantics<arbitrary>], iteration_bounds = array<i64: 1>, scalar_prefetch = 0 : i64, scratch_operands = 4 : i64, tpu.core_type = #tpu.core_type<tc>, window_params = [{pipeline_mode = #tpu.pipeline_mode<synchronous>, transform_indices = @transform_0, window_bounds = array<i64: 64, 10>}, {pipeline_mode = #tpu.pipeline_mode<synchronous>, transform_indices = @transform_1, window_bounds = array<i64: 10, 128>}, {pipeline_mode = #tpu.pipeline_mode<synchronous>, transform_indices = @transform_2, window_bounds = array<i64: 32, 128>}, {pipeline_mode = #tpu.pipeline_mode<synchronous>, transform_indices = @transform_3, window_bounds = array<i64: 1, 128>}, {pipeline_mode = #tpu.pipeline_mode<synchronous>, transform_indices = @transform_4, window_bounds = array<i64: 32, 128>}, {pipeline_mode = #tpu.pipeline_mode<synchronous>, transform_indices = @transform_5, window_bounds = array<i64: 32, 128>}, {pipeline_mode = #tpu.pipeline_mode<synchronous>, transform_indices = @transform_6, window_bounds = array<i64: 1, 128>}, {pipeline_mode = #tpu.pipeline_mode<synchronous>, transform_indices = @transform_7, window_bounds = array<i64: 64, 64>}]} {
    %c0 = arith.constant 0 : index
    %c0_0 = arith.constant 0 : index
    %0 = vector.load %arg1[%c0, %c0_0] : memref<64x10xf32, #tpu.memory_space<vmem>>, vector<64x10xf32>
    %c0_1 = arith.constant 0 : index
    %c0_2 = arith.constant 0 : index
    %1 = vector.load %arg2[%c0_1, %c0_2] : memref<10x128xf32, #tpu.memory_space<vmem>>, vector<10x128xf32>
    %cst = arith.constant dense<0.000000e+00> : vector<64x128xf32>
    %2 = tpu.matmul %0, %1, %cst {dimension_numbers = #tpu.dot_dimension_numbers<[1], [0], [0], [1], [0, 0, 1, 1], [], []>} : vector<64x10xf32>, vector<10x128xf32>, vector<64x128xf32> -> vector<64x128xf32>
    %c0_3 = arith.constant 0 : index
    %c0_4 = arith.constant 0 : index
    %3 = vector.load %arg4[%c0_3, %c0_4] : memref<1x128xf32, #tpu.memory_space<vmem>>, vector<1x128xf32>
    %4 = vector.broadcast %3 : vector<1x128xf32> to vector<64x128xf32>
    %5 = arith.addf %2, %4 : vector<64x128xf32>
    %c0_5 = arith.constant 0 : index
    %c0_6 = arith.constant 0 : index
    %6 = vector.load %arg9[%c0_5, %c0_6] : memref<64x128xf32, #tpu.memory_space<vmem>>, vector<64x128xf32>
    tpu.vector_store %arg9[%c0_5, %c0_6], %5 {strides = array<i32>} : memref<64x128xf32, #tpu.memory_space<vmem>>, vector<64x128xf32>,
    %cst_7 = arith.constant 0.000000e+00 : f32
    %7 = vector.broadcast %cst_7 : f32 to vector<8x32xf32>
    %c0_8 = arith.constant 0 : index
    %c0_9 = arith.constant 0 : index
    %8 = vector.load %arg11[%c0_8, %c0_9] : memref<8x32xf32, #tpu.memory_space<vmem>>, vector<8x32xf32>
    tpu.vector_store %arg11[%c0_8, %c0_9], %7 {strides = array<i32>} : memref<8x32xf32, #tpu.memory_space<vmem>>, vector<8x32xf32>,
    %cst_10 = arith.constant 0.000000e+00 : f32
    %9 = vector.broadcast %cst_10 : f32 to vector<8x32xf32>
    %c0_11 = arith.constant 0 : index
    %c0_12 = arith.constant 0 : index
    %10 = vector.load %arg12[%c0_11, %c0_12] : memref<8x32xf32, #tpu.memory_space<vmem>>, vector<8x32xf32>
    tpu.vector_store %arg12[%c0_11, %c0_12], %9 {strides = array<i32>} : memref<8x32xf32, #tpu.memory_space<vmem>>, vector<8x32xf32>,
    %c0_i32 = arith.constant 0 : i32
    %c8_i32 = arith.constant 8 : i32
    %11 = arith.muli %c0_i32, %c8_i32 : i32
    %12 = tpu.assume_multiple %11, 8 : i32
    %13 = arith.index_cast %12 : i32 to index
    %c0_13 = arith.constant 0 : index
    %14 = vector.load %arg9[%13, %c0_13] : memref<64x128xf32, #tpu.memory_space<vmem>>, vector<8x128xf32>
    %c0_14 = arith.constant 0 : index
    %c0_15 = arith.constant 0 : index
    %15 = vector.load %arg11[%c0_14, %c0_15] : memref<8x32xf32, #tpu.memory_space<vmem>>, vector<8x32xf32>
    %c0_16 = arith.constant 0 : index
    %c0_17 = arith.constant 0 : index
    %16 = vector.load %arg3[%c0_16, %c0_17] : memref<32x128xf32, #tpu.memory_space<vmem>>, vector<32x128xf32>
    %cst_18 = arith.constant dense<0.000000e+00> : vector<8x128xf32>
    %17 = tpu.matmul %15, %16, %cst_18 {dimension_numbers = #tpu.dot_dimension_numbers<[1], [0], [0], [1], [0, 0, 1, 1], [], []>} : vector<8x32xf32>, vector<32x128xf32>, vector<8x128xf32> -> vector<8x128xf32>
    %18 = arith.addf %14, %17 : vector<8x128xf32>
    %19 = vector.extract_strided_slice %18 {offsets = [0, 0], sizes = [8, 32], strides = [1, 1]} : vector<8x128xf32> to vector<8x32xf32>
    %20 = arith.negf %19 : vector<8x32xf32>
    %21 = math.exp %20 : vector<8x32xf32>
    %cst_19 = arith.constant 1.000000e+00 : f32
    %22 = vector.broadcast %cst_19 : f32 to vector<8x32xf32>
    %23 = arith.addf %22, %21 : vector<8x32xf32>
    %24 = arith.divf %22, %23 : vector<8x32xf32>
    %25 = vector.extract_strided_slice %18 {offsets = [0, 32], sizes = [8, 32], strides = [1, 1]} : vector<8x128xf32> to vector<8x32xf32>
    %26 = arith.negf %25 : vector<8x32xf32>
    %27 = math.exp %26 : vector<8x32xf32>
    %cst_20 = arith.constant 1.000000e+00 : f32
    %28 = vector.broadcast %cst_20 : f32 to vector<8x32xf32>
    %29 = arith.addf %28, %27 : vector<8x32xf32>
    %30 = arith.divf %28, %29 : vector<8x32xf32>
    %31 = vector.extract_strided_slice %18 {offsets = [0, 64], sizes = [8, 32], strides = [1, 1]} : vector<8x128xf32> to vector<8x32xf32>
    %32 = math.tanh %31 : vector<8x32xf32>
    %33 = vector.extract_strided_slice %18 {offsets = [0, 96], sizes = [8, 32], strides = [1, 1]} : vector<8x128xf32> to vector<8x32xf32>
    %34 = arith.negf %33 : vector<8x32xf32>
    %35 = math.exp %34 : vector<8x32xf32>
    %cst_21 = arith.constant 1.000000e+00 : f32
    %36 = vector.broadcast %cst_21 : f32 to vector<8x32xf32>
    %37 = arith.addf %36, %35 : vector<8x32xf32>
    %38 = arith.divf %36, %37 : vector<8x32xf32>
    %c0_22 = arith.constant 0 : index
    %c0_23 = arith.constant 0 : index
    %39 = vector.load %arg12[%c0_22, %c0_23] : memref<8x32xf32, #tpu.memory_space<vmem>>, vector<8x32xf32>
    %40 = arith.mulf %30, %39 : vector<8x32xf32>
    %41 = arith.mulf %24, %32 : vector<8x32xf32>
    %42 = arith.addf %40, %41 : vector<8x32xf32>
    %43 = math.tanh %42 : vector<8x32xf32>
    %44 = arith.mulf %38, %43 : vector<8x32xf32>
    %c0_24 = arith.constant 0 : index
    %c0_25 = arith.constant 0 : index
    %45 = vector.load %arg12[%c0_24, %c0_25] : memref<8x32xf32, #tpu.memory_space<vmem>>, vector<8x32xf32>
    tpu.vector_store %arg12[%c0_24, %c0_25], %42 {strides = array<i32>} : memref<8x32xf32, #tpu.memory_space<vmem>>, vector<8x32xf32>,
    %c0_26 = arith.constant 0 : index
    %c0_27 = arith.constant 0 : index
    %46 = vector.load %arg11[%c0_26, %c0_27] : memref<8x32xf32, #tpu.memory_space<vmem>>, vector<8x32xf32>
    tpu.vector_store %arg11[%c0_26, %c0_27], %44 {strides = array<i32>} : memref<8x32xf32, #tpu.memory_space<vmem>>, vector<8x32xf32>,
    %47 = arith.index_cast %12 : i32 to index
    %c0_28 = arith.constant 0 : index
    %48 = vector.load %arg10[%47, %c0_28] : memref<64x32xf32, #tpu.memory_space<vmem>>, vector<8x32xf32>
    tpu.vector_store %arg10[%47, %c0_28], %44 {strides = array<i32>} : memref<64x32xf32, #tpu.memory_space<vmem>>, vector<8x32xf32>,
    %c1_i32 = arith.constant 1 : i32
    %c8_i32_29 = arith.constant 8 : i32
    %49 = arith.muli %c1_i32, %c8_i32_29 : i32
    %50 = tpu.assume_multiple %49, 8 : i32
    %51 = arith.index_cast %50 : i32 to index
    %c0_30 = arith.constant 0 : index
    %52 = vector.load %arg9[%51, %c0_30] : memref<64x128xf32, #tpu.memory_space<vmem>>, vector<8x128xf32>
    %c0_31 = arith.constant 0 : index
    %c0_32 = arith.constant 0 : index
    %53 = vector.load %arg11[%c0_31, %c0_32] : memref<8x32xf32, #tpu.memory_space<vmem>>, vector<8x32xf32>
    %c0_33 = arith.constant 0 : index
    %c0_34 = arith.constant 0 : index
    %54 = vector.load %arg3[%c0_33, %c0_34] : memref<32x128xf32, #tpu.memory_space<vmem>>, vector<32x128xf32>
    %cst_35 = arith.constant dense<0.000000e+00> : vector<8x128xf32>
    %55 = tpu.matmul %53, %54, %cst_35 {dimension_numbers = #tpu.dot_dimension_numbers<[1], [0], [0], [1], [0, 0, 1, 1], [], []>} : vector<8x32xf32>, vector<32x128xf32>, vector<8x128xf32> -> vector<8x128xf32>
    %56 = arith.addf %52, %55 : vector<8x128xf32>
    %57 = vector.extract_strided_slice %56 {offsets = [0, 0], sizes = [8, 32], strides = [1, 1]} : vector<8x128xf32> to vector<8x32xf32>
    %58 = arith.negf %57 : vector<8x32xf32>
    %59 = math.exp %58 : vector<8x32xf32>
    %cst_36 = arith.constant 1.000000e+00 : f32
    %60 = vector.broadcast %cst_36 : f32 to vector<8x32xf32>
    %61 = arith.addf %60, %59 : vector<8x32xf32>
    %62 = arith.divf %60, %61 : vector<8x32xf32>
    %63 = vector.extract_strided_slice %56 {offsets = [0, 32], sizes = [8, 32], strides = [1, 1]} : vector<8x128xf32> to vector<8x32xf32>
    %64 = arith.negf %63 : vector<8x32xf32>
    %65 = math.exp %64 : vector<8x32xf32>
    %cst_37 = arith.constant 1.000000e+00 : f32
    %66 = vector.broadcast %cst_37 : f32 to vector<8x32xf32>
    %67 = arith.addf %66, %65 : vector<8x32xf32>
    %68 = arith.divf %66, %67 : vector<8x32xf32>
    %69 = vector.extract_strided_slice %56 {offsets = [0, 64], sizes = [8, 32], strides = [1, 1]} : vector<8x128xf32> to vector<8x32xf32>
    %70 = math.tanh %69 : vector<8x32xf32>
    %71 = vector.extract_strided_slice %56 {offsets = [0, 96], sizes = [8, 32], strides = [1, 1]} : vector<8x128xf32> to vector<8x32xf32>
    %72 = arith.negf %71 : vector<8x32xf32>
    %73 = math.exp %72 : vector<8x32xf32>
    %cst_38 = arith.constant 1.000000e+00 : f32
    %74 = vector.broadcast %cst_38 : f32 to vector<8x32xf32>
    %75 = arith.addf %74, %73 : vector<8x32xf32>
    %76 = arith.divf %74, %75 : vector<8x32xf32>
    %c0_39 = arith.constant 0 : index
    %c0_40 = arith.constant 0 : index
    %77 = vector.load %arg12[%c0_39, %c0_40] : memref<8x32xf32, #tpu.memory_space<vmem>>, vector<8x32xf32>
    %78 = arith.mulf %68, %77 : vector<8x32xf32>
    %79 = arith.mulf %62, %70 : vector<8x32xf32>
    %80 = arith.addf %78, %79 : vector<8x32xf32>
    %81 = math.tanh %80 : vector<8x32xf32>
    %82 = arith.mulf %76, %81 : vector<8x32xf32>
    %c0_41 = arith.constant 0 : index
    %c0_42 = arith.constant 0 : index
    %83 = vector.load %arg12[%c0_41, %c0_42] : memref<8x32xf32, #tpu.memory_space<vmem>>, vector<8x32xf32>
    tpu.vector_store %arg12[%c0_41, %c0_42], %80 {strides = array<i32>} : memref<8x32xf32, #tpu.memory_space<vmem>>, vector<8x32xf32>,
    %c0_43 = arith.constant 0 : index
    %c0_44 = arith.constant 0 : index
    %84 = vector.load %arg11[%c0_43, %c0_44] : memref<8x32xf32, #tpu.memory_space<vmem>>, vector<8x32xf32>
    tpu.vector_store %arg11[%c0_43, %c0_44], %82 {strides = array<i32>} : memref<8x32xf32, #tpu.memory_space<vmem>>, vector<8x32xf32>,
    %85 = arith.index_cast %50 : i32 to index
    %c0_45 = arith.constant 0 : index
    %86 = vector.load %arg10[%85, %c0_45] : memref<64x32xf32, #tpu.memory_space<vmem>>, vector<8x32xf32>
    tpu.vector_store %arg10[%85, %c0_45], %82 {strides = array<i32>} : memref<64x32xf32, #tpu.memory_space<vmem>>, vector<8x32xf32>,
    %c2_i32 = arith.constant 2 : i32
    %c8_i32_46 = arith.constant 8 : i32
    %87 = arith.muli %c2_i32, %c8_i32_46 : i32
    %88 = tpu.assume_multiple %87, 8 : i32
    %89 = arith.index_cast %88 : i32 to index
    %c0_47 = arith.constant 0 : index
    %90 = vector.load %arg9[%89, %c0_47] : memref<64x128xf32, #tpu.memory_space<vmem>>, vector<8x128xf32>
    %c0_48 = arith.constant 0 : index
    %c0_49 = arith.constant 0 : index
    %91 = vector.load %arg11[%c0_48, %c0_49] : memref<8x32xf32, #tpu.memory_space<vmem>>, vector<8x32xf32>
    %c0_50 = arith.constant 0 : index
    %c0_51 = arith.constant 0 : index
    %92 = vector.load %arg3[%c0_50, %c0_51] : memref<32x128xf32, #tpu.memory_space<vmem>>, vector<32x128xf32>
    %cst_52 = arith.constant dense<0.000000e+00> : vector<8x128xf32>
    %93 = tpu.matmul %91, %92, %cst_52 {dimension_numbers = #tpu.dot_dimension_numbers<[1], [0], [0], [1], [0, 0, 1, 1], [], []>} : vector<8x32xf32>, vector<32x128xf32>, vector<8x128xf32> -> vector<8x128xf32>
    %94 = arith.addf %90, %93 : vector<8x128xf32>
    %95 = vector.extract_strided_slice %94 {offsets = [0, 0], sizes = [8, 32], strides = [1, 1]} : vector<8x128xf32> to vector<8x32xf32>
    %96 = arith.negf %95 : vector<8x32xf32>
    %97 = math.exp %96 : vector<8x32xf32>
    %cst_53 = arith.constant 1.000000e+00 : f32
    %98 = vector.broadcast %cst_53 : f32 to vector<8x32xf32>
    %99 = arith.addf %98, %97 : vector<8x32xf32>
    %100 = arith.divf %98, %99 : vector<8x32xf32>
    %101 = vector.extract_strided_slice %94 {offsets = [0, 32], sizes = [8, 32], strides = [1, 1]} : vector<8x128xf32> to vector<8x32xf32>
    %102 = arith.negf %101 : vector<8x32xf32>
    %103 = math.exp %102 : vector<8x32xf32>
    %cst_54 = arith.constant 1.000000e+00 : f32
    %104 = vector.broadcast %cst_54 : f32 to vector<8x32xf32>
    %105 = arith.addf %104, %103 : vector<8x32xf32>
    %106 = arith.divf %104, %105 : vector<8x32xf32>
    %107 = vector.extract_strided_slice %94 {offsets = [0, 64], sizes = [8, 32], strides = [1, 1]} : vector<8x128xf32> to vector<8x32xf32>
    %108 = math.tanh %107 : vector<8x32xf32>
    %109 = vector.extract_strided_slice %94 {offsets = [0, 96], sizes = [8, 32], strides = [1, 1]} : vector<8x128xf32> to vector<8x32xf32>
    %110 = arith.negf %109 : vector<8x32xf32>
    %111 = math.exp %110 : vector<8x32xf32>
    %cst_55 = arith.constant 1.000000e+00 : f32
    %112 = vector.broadcast %cst_55 : f32 to vector<8x32xf32>
    %113 = arith.addf %112, %111 : vector<8x32xf32>
    %114 = arith.divf %112, %113 : vector<8x32xf32>
    %c0_56 = arith.constant 0 : index
    %c0_57 = arith.constant 0 : index
    %115 = vector.load %arg12[%c0_56, %c0_57] : memref<8x32xf32, #tpu.memory_space<vmem>>, vector<8x32xf32>
    %116 = arith.mulf %106, %115 : vector<8x32xf32>
    %117 = arith.mulf %100, %108 : vector<8x32xf32>
    %118 = arith.addf %116, %117 : vector<8x32xf32>
    %119 = math.tanh %118 : vector<8x32xf32>
    %120 = arith.mulf %114, %119 : vector<8x32xf32>
    %c0_58 = arith.constant 0 : index
    %c0_59 = arith.constant 0 : index
    %121 = vector.load %arg12[%c0_58, %c0_59] : memref<8x32xf32, #tpu.memory_space<vmem>>, vector<8x32xf32>
    tpu.vector_store %arg12[%c0_58, %c0_59], %118 {strides = array<i32>} : memref<8x32xf32, #tpu.memory_space<vmem>>, vector<8x32xf32>,
    %c0_60 = arith.constant 0 : index
    %c0_61 = arith.constant 0 : index
    %122 = vector.load %arg11[%c0_60, %c0_61] : memref<8x32xf32, #tpu.memory_space<vmem>>, vector<8x32xf32>
    tpu.vector_store %arg11[%c0_60, %c0_61], %120 {strides = array<i32>} : memref<8x32xf32, #tpu.memory_space<vmem>>, vector<8x32xf32>,
    %123 = arith.index_cast %88 : i32 to index
    %c0_62 = arith.constant 0 : index
    %124 = vector.load %arg10[%123, %c0_62] : memref<64x32xf32, #tpu.memory_space<vmem>>, vector<8x32xf32>
    tpu.vector_store %arg10[%123, %c0_62], %120 {strides = array<i32>} : memref<64x32xf32, #tpu.memory_space<vmem>>, vector<8x32xf32>,
    %c3_i32 = arith.constant 3 : i32
    %c8_i32_63 = arith.constant 8 : i32
    %125 = arith.muli %c3_i32, %c8_i32_63 : i32
    %126 = tpu.assume_multiple %125, 8 : i32
    %127 = arith.index_cast %126 : i32 to index
    %c0_64 = arith.constant 0 : index
    %128 = vector.load %arg9[%127, %c0_64] : memref<64x128xf32, #tpu.memory_space<vmem>>, vector<8x128xf32>
    %c0_65 = arith.constant 0 : index
    %c0_66 = arith.constant 0 : index
    %129 = vector.load %arg11[%c0_65, %c0_66] : memref<8x32xf32, #tpu.memory_space<vmem>>, vector<8x32xf32>
    %c0_67 = arith.constant 0 : index
    %c0_68 = arith.constant 0 : index
    %130 = vector.load %arg3[%c0_67, %c0_68] : memref<32x128xf32, #tpu.memory_space<vmem>>, vector<32x128xf32>
    %cst_69 = arith.constant dense<0.000000e+00> : vector<8x128xf32>
    %131 = tpu.matmul %129, %130, %cst_69 {dimension_numbers = #tpu.dot_dimension_numbers<[1], [0], [0], [1], [0, 0, 1, 1], [], []>} : vector<8x32xf32>, vector<32x128xf32>, vector<8x128xf32> -> vector<8x128xf32>
    %132 = arith.addf %128, %131 : vector<8x128xf32>
    %133 = vector.extract_strided_slice %132 {offsets = [0, 0], sizes = [8, 32], strides = [1, 1]} : vector<8x128xf32> to vector<8x32xf32>
    %134 = arith.negf %133 : vector<8x32xf32>
    %135 = math.exp %134 : vector<8x32xf32>
    %cst_70 = arith.constant 1.000000e+00 : f32
    %136 = vector.broadcast %cst_70 : f32 to vector<8x32xf32>
    %137 = arith.addf %136, %135 : vector<8x32xf32>
    %138 = arith.divf %136, %137 : vector<8x32xf32>
    %139 = vector.extract_strided_slice %132 {offsets = [0, 32], sizes = [8, 32], strides = [1, 1]} : vector<8x128xf32> to vector<8x32xf32>
    %140 = arith.negf %139 : vector<8x32xf32>
    %141 = math.exp %140 : vector<8x32xf32>
    %cst_71 = arith.constant 1.000000e+00 : f32
    %142 = vector.broadcast %cst_71 : f32 to vector<8x32xf32>
    %143 = arith.addf %142, %141 : vector<8x32xf32>
    %144 = arith.divf %142, %143 : vector<8x32xf32>
    %145 = vector.extract_strided_slice %132 {offsets = [0, 64], sizes = [8, 32], strides = [1, 1]} : vector<8x128xf32> to vector<8x32xf32>
    %146 = math.tanh %145 : vector<8x32xf32>
    %147 = vector.extract_strided_slice %132 {offsets = [0, 96], sizes = [8, 32], strides = [1, 1]} : vector<8x128xf32> to vector<8x32xf32>
    %148 = arith.negf %147 : vector<8x32xf32>
    %149 = math.exp %148 : vector<8x32xf32>
    %cst_72 = arith.constant 1.000000e+00 : f32
    %150 = vector.broadcast %cst_72 : f32 to vector<8x32xf32>
    %151 = arith.addf %150, %149 : vector<8x32xf32>
    %152 = arith.divf %150, %151 : vector<8x32xf32>
    %c0_73 = arith.constant 0 : index
    %c0_74 = arith.constant 0 : index
    %153 = vector.load %arg12[%c0_73, %c0_74] : memref<8x32xf32, #tpu.memory_space<vmem>>, vector<8x32xf32>
    %154 = arith.mulf %144, %153 : vector<8x32xf32>
    %155 = arith.mulf %138, %146 : vector<8x32xf32>
    %156 = arith.addf %154, %155 : vector<8x32xf32>
    %157 = math.tanh %156 : vector<8x32xf32>
    %158 = arith.mulf %152, %157 : vector<8x32xf32>
    %c0_75 = arith.constant 0 : index
    %c0_76 = arith.constant 0 : index
    %159 = vector.load %arg12[%c0_75, %c0_76] : memref<8x32xf32, #tpu.memory_space<vmem>>, vector<8x32xf32>
    tpu.vector_store %arg12[%c0_75, %c0_76], %156 {strides = array<i32>} : memref<8x32xf32, #tpu.memory_space<vmem>>, vector<8x32xf32>,
    %c0_77 = arith.constant 0 : index
    %c0_78 = arith.constant 0 : index
    %160 = vector.load %arg11[%c0_77, %c0_78] : memref<8x32xf32, #tpu.memory_space<vmem>>, vector<8x32xf32>
    tpu.vector_store %arg11[%c0_77, %c0_78], %158 {strides = array<i32>} : memref<8x32xf32, #tpu.memory_space<vmem>>, vector<8x32xf32>,
    %161 = arith.index_cast %126 : i32 to index
    %c0_79 = arith.constant 0 : index
    %162 = vector.load %arg10[%161, %c0_79] : memref<64x32xf32, #tpu.memory_space<vmem>>, vector<8x32xf32>
    tpu.vector_store %arg10[%161, %c0_79], %158 {strides = array<i32>} : memref<64x32xf32, #tpu.memory_space<vmem>>, vector<8x32xf32>,
    %c4_i32 = arith.constant 4 : i32
    %c8_i32_80 = arith.constant 8 : i32
    %163 = arith.muli %c4_i32, %c8_i32_80 : i32
    %164 = tpu.assume_multiple %163, 8 : i32
    %165 = arith.index_cast %164 : i32 to index
    %c0_81 = arith.constant 0 : index
    %166 = vector.load %arg9[%165, %c0_81] : memref<64x128xf32, #tpu.memory_space<vmem>>, vector<8x128xf32>
    %c0_82 = arith.constant 0 : index
    %c0_83 = arith.constant 0 : index
    %167 = vector.load %arg11[%c0_82, %c0_83] : memref<8x32xf32, #tpu.memory_space<vmem>>, vector<8x32xf32>
    %c0_84 = arith.constant 0 : index
    %c0_85 = arith.constant 0 : index
    %168 = vector.load %arg3[%c0_84, %c0_85] : memref<32x128xf32, #tpu.memory_space<vmem>>, vector<32x128xf32>
    %cst_86 = arith.constant dense<0.000000e+00> : vector<8x128xf32>
    %169 = tpu.matmul %167, %168, %cst_86 {dimension_numbers = #tpu.dot_dimension_numbers<[1], [0], [0], [1], [0, 0, 1, 1], [], []>} : vector<8x32xf32>, vector<32x128xf32>, vector<8x128xf32> -> vector<8x128xf32>
    %170 = arith.addf %166, %169 : vector<8x128xf32>
    %171 = vector.extract_strided_slice %170 {offsets = [0, 0], sizes = [8, 32], strides = [1, 1]} : vector<8x128xf32> to vector<8x32xf32>
    %172 = arith.negf %171 : vector<8x32xf32>
    %173 = math.exp %172 : vector<8x32xf32>
    %cst_87 = arith.constant 1.000000e+00 : f32
    %174 = vector.broadcast %cst_87 : f32 to vector<8x32xf32>
    %175 = arith.addf %174, %173 : vector<8x32xf32>
    %176 = arith.divf %174, %175 : vector<8x32xf32>
    %177 = vector.extract_strided_slice %170 {offsets = [0, 32], sizes = [8, 32], strides = [1, 1]} : vector<8x128xf32> to vector<8x32xf32>
    %178 = arith.negf %177 : vector<8x32xf32>
    %179 = math.exp %178 : vector<8x32xf32>
    %cst_88 = arith.constant 1.000000e+00 : f32
    %180 = vector.broadcast %cst_88 : f32 to vector<8x32xf32>
    %181 = arith.addf %180, %179 : vector<8x32xf32>
    %182 = arith.divf %180, %181 : vector<8x32xf32>
    %183 = vector.extract_strided_slice %170 {offsets = [0, 64], sizes = [8, 32], strides = [1, 1]} : vector<8x128xf32> to vector<8x32xf32>
    %184 = math.tanh %183 : vector<8x32xf32>
    %185 = vector.extract_strided_slice %170 {offsets = [0, 96], sizes = [8, 32], strides = [1, 1]} : vector<8x128xf32> to vector<8x32xf32>
    %186 = arith.negf %185 : vector<8x32xf32>
    %187 = math.exp %186 : vector<8x32xf32>
    %cst_89 = arith.constant 1.000000e+00 : f32
    %188 = vector.broadcast %cst_89 : f32 to vector<8x32xf32>
    %189 = arith.addf %188, %187 : vector<8x32xf32>
    %190 = arith.divf %188, %189 : vector<8x32xf32>
    %c0_90 = arith.constant 0 : index
    %c0_91 = arith.constant 0 : index
    %191 = vector.load %arg12[%c0_90, %c0_91] : memref<8x32xf32, #tpu.memory_space<vmem>>, vector<8x32xf32>
    %192 = arith.mulf %182, %191 : vector<8x32xf32>
    %193 = arith.mulf %176, %184 : vector<8x32xf32>
    %194 = arith.addf %192, %193 : vector<8x32xf32>
    %195 = math.tanh %194 : vector<8x32xf32>
    %196 = arith.mulf %190, %195 : vector<8x32xf32>
    %c0_92 = arith.constant 0 : index
    %c0_93 = arith.constant 0 : index
    %197 = vector.load %arg12[%c0_92, %c0_93] : memref<8x32xf32, #tpu.memory_space<vmem>>, vector<8x32xf32>
    tpu.vector_store %arg12[%c0_92, %c0_93], %194 {strides = array<i32>} : memref<8x32xf32, #tpu.memory_space<vmem>>, vector<8x32xf32>,
    %c0_94 = arith.constant 0 : index
    %c0_95 = arith.constant 0 : index
    %198 = vector.load %arg11[%c0_94, %c0_95] : memref<8x32xf32, #tpu.memory_space<vmem>>, vector<8x32xf32>
    tpu.vector_store %arg11[%c0_94, %c0_95], %196 {strides = array<i32>} : memref<8x32xf32, #tpu.memory_space<vmem>>, vector<8x32xf32>,
    %199 = arith.index_cast %164 : i32 to index
    %c0_96 = arith.constant 0 : index
    %200 = vector.load %arg10[%199, %c0_96] : memref<64x32xf32, #tpu.memory_space<vmem>>, vector<8x32xf32>
    tpu.vector_store %arg10[%199, %c0_96], %196 {strides = array<i32>} : memref<64x32xf32, #tpu.memory_space<vmem>>, vector<8x32xf32>,
    %c5_i32 = arith.constant 5 : i32
    %c8_i32_97 = arith.constant 8 : i32
    %201 = arith.muli %c5_i32, %c8_i32_97 : i32
    %202 = tpu.assume_multiple %201, 8 : i32
    %203 = arith.index_cast %202 : i32 to index
    %c0_98 = arith.constant 0 : index
    %204 = vector.load %arg9[%203, %c0_98] : memref<64x128xf32, #tpu.memory_space<vmem>>, vector<8x128xf32>
    %c0_99 = arith.constant 0 : index
    %c0_100 = arith.constant 0 : index
    %205 = vector.load %arg11[%c0_99, %c0_100] : memref<8x32xf32, #tpu.memory_space<vmem>>, vector<8x32xf32>
    %c0_101 = arith.constant 0 : index
    %c0_102 = arith.constant 0 : index
    %206 = vector.load %arg3[%c0_101, %c0_102] : memref<32x128xf32, #tpu.memory_space<vmem>>, vector<32x128xf32>
    %cst_103 = arith.constant dense<0.000000e+00> : vector<8x128xf32>
    %207 = tpu.matmul %205, %206, %cst_103 {dimension_numbers = #tpu.dot_dimension_numbers<[1], [0], [0], [1], [0, 0, 1, 1], [], []>} : vector<8x32xf32>, vector<32x128xf32>, vector<8x128xf32> -> vector<8x128xf32>
    %208 = arith.addf %204, %207 : vector<8x128xf32>
    %209 = vector.extract_strided_slice %208 {offsets = [0, 0], sizes = [8, 32], strides = [1, 1]} : vector<8x128xf32> to vector<8x32xf32>
    %210 = arith.negf %209 : vector<8x32xf32>
    %211 = math.exp %210 : vector<8x32xf32>
    %cst_104 = arith.constant 1.000000e+00 : f32
    %212 = vector.broadcast %cst_104 : f32 to vector<8x32xf32>
    %213 = arith.addf %212, %211 : vector<8x32xf32>
    %214 = arith.divf %212, %213 : vector<8x32xf32>
    %215 = vector.extract_strided_slice %208 {offsets = [0, 32], sizes = [8, 32], strides = [1, 1]} : vector<8x128xf32> to vector<8x32xf32>
    %216 = arith.negf %215 : vector<8x32xf32>
    %217 = math.exp %216 : vector<8x32xf32>
    %cst_105 = arith.constant 1.000000e+00 : f32
    %218 = vector.broadcast %cst_105 : f32 to vector<8x32xf32>
    %219 = arith.addf %218, %217 : vector<8x32xf32>
    %220 = arith.divf %218, %219 : vector<8x32xf32>
    %221 = vector.extract_strided_slice %208 {offsets = [0, 64], sizes = [8, 32], strides = [1, 1]} : vector<8x128xf32> to vector<8x32xf32>
    %222 = math.tanh %221 : vector<8x32xf32>
    %223 = vector.extract_strided_slice %208 {offsets = [0, 96], sizes = [8, 32], strides = [1, 1]} : vector<8x128xf32> to vector<8x32xf32>
    %224 = arith.negf %223 : vector<8x32xf32>
    %225 = math.exp %224 : vector<8x32xf32>
    %cst_106 = arith.constant 1.000000e+00 : f32
    %226 = vector.broadcast %cst_106 : f32 to vector<8x32xf32>
    %227 = arith.addf %226, %225 : vector<8x32xf32>
    %228 = arith.divf %226, %227 : vector<8x32xf32>
    %c0_107 = arith.constant 0 : index
    %c0_108 = arith.constant 0 : index
    %229 = vector.load %arg12[%c0_107, %c0_108] : memref<8x32xf32, #tpu.memory_space<vmem>>, vector<8x32xf32>
    %230 = arith.mulf %220, %229 : vector<8x32xf32>
    %231 = arith.mulf %214, %222 : vector<8x32xf32>
    %232 = arith.addf %230, %231 : vector<8x32xf32>
    %233 = math.tanh %232 : vector<8x32xf32>
    %234 = arith.mulf %228, %233 : vector<8x32xf32>
    %c0_109 = arith.constant 0 : index
    %c0_110 = arith.constant 0 : index
    %235 = vector.load %arg12[%c0_109, %c0_110] : memref<8x32xf32, #tpu.memory_space<vmem>>, vector<8x32xf32>
    tpu.vector_store %arg12[%c0_109, %c0_110], %232 {strides = array<i32>} : memref<8x32xf32, #tpu.memory_space<vmem>>, vector<8x32xf32>,
    %c0_111 = arith.constant 0 : index
    %c0_112 = arith.constant 0 : index
    %236 = vector.load %arg11[%c0_111, %c0_112] : memref<8x32xf32, #tpu.memory_space<vmem>>, vector<8x32xf32>
    tpu.vector_store %arg11[%c0_111, %c0_112], %234 {strides = array<i32>} : memref<8x32xf32, #tpu.memory_space<vmem>>, vector<8x32xf32>,
    %237 = arith.index_cast %202 : i32 to index
    %c0_113 = arith.constant 0 : index
    %238 = vector.load %arg10[%237, %c0_113] : memref<64x32xf32, #tpu.memory_space<vmem>>, vector<8x32xf32>
    tpu.vector_store %arg10[%237, %c0_113], %234 {strides = array<i32>} : memref<64x32xf32, #tpu.memory_space<vmem>>, vector<8x32xf32>,
    %c6_i32 = arith.constant 6 : i32
    %c8_i32_114 = arith.constant 8 : i32
    %239 = arith.muli %c6_i32, %c8_i32_114 : i32
    %240 = tpu.assume_multiple %239, 8 : i32
    %241 = arith.index_cast %240 : i32 to index
    %c0_115 = arith.constant 0 : index
    %242 = vector.load %arg9[%241, %c0_115] : memref<64x128xf32, #tpu.memory_space<vmem>>, vector<8x128xf32>
    %c0_116 = arith.constant 0 : index
    %c0_117 = arith.constant 0 : index
    %243 = vector.load %arg11[%c0_116, %c0_117] : memref<8x32xf32, #tpu.memory_space<vmem>>, vector<8x32xf32>
    %c0_118 = arith.constant 0 : index
    %c0_119 = arith.constant 0 : index
    %244 = vector.load %arg3[%c0_118, %c0_119] : memref<32x128xf32, #tpu.memory_space<vmem>>, vector<32x128xf32>
    %cst_120 = arith.constant dense<0.000000e+00> : vector<8x128xf32>
    %245 = tpu.matmul %243, %244, %cst_120 {dimension_numbers = #tpu.dot_dimension_numbers<[1], [0], [0], [1], [0, 0, 1, 1], [], []>} : vector<8x32xf32>, vector<32x128xf32>, vector<8x128xf32> -> vector<8x128xf32>
    %246 = arith.addf %242, %245 : vector<8x128xf32>
    %247 = vector.extract_strided_slice %246 {offsets = [0, 0], sizes = [8, 32], strides = [1, 1]} : vector<8x128xf32> to vector<8x32xf32>
    %248 = arith.negf %247 : vector<8x32xf32>
    %249 = math.exp %248 : vector<8x32xf32>
    %cst_121 = arith.constant 1.000000e+00 : f32
    %250 = vector.broadcast %cst_121 : f32 to vector<8x32xf32>
    %251 = arith.addf %250, %249 : vector<8x32xf32>
    %252 = arith.divf %250, %251 : vector<8x32xf32>
    %253 = vector.extract_strided_slice %246 {offsets = [0, 32], sizes = [8, 32], strides = [1, 1]} : vector<8x128xf32> to vector<8x32xf32>
    %254 = arith.negf %253 : vector<8x32xf32>
    %255 = math.exp %254 : vector<8x32xf32>
    %cst_122 = arith.constant 1.000000e+00 : f32
    %256 = vector.broadcast %cst_122 : f32 to vector<8x32xf32>
    %257 = arith.addf %256, %255 : vector<8x32xf32>
    %258 = arith.divf %256, %257 : vector<8x32xf32>
    %259 = vector.extract_strided_slice %246 {offsets = [0, 64], sizes = [8, 32], strides = [1, 1]} : vector<8x128xf32> to vector<8x32xf32>
    %260 = math.tanh %259 : vector<8x32xf32>
    %261 = vector.extract_strided_slice %246 {offsets = [0, 96], sizes = [8, 32], strides = [1, 1]} : vector<8x128xf32> to vector<8x32xf32>
    %262 = arith.negf %261 : vector<8x32xf32>
    %263 = math.exp %262 : vector<8x32xf32>
    %cst_123 = arith.constant 1.000000e+00 : f32
    %264 = vector.broadcast %cst_123 : f32 to vector<8x32xf32>
    %265 = arith.addf %264, %263 : vector<8x32xf32>
    %266 = arith.divf %264, %265 : vector<8x32xf32>
    %c0_124 = arith.constant 0 : index
    %c0_125 = arith.constant 0 : index
    %267 = vector.load %arg12[%c0_124, %c0_125] : memref<8x32xf32, #tpu.memory_space<vmem>>, vector<8x32xf32>
    %268 = arith.mulf %258, %267 : vector<8x32xf32>
    %269 = arith.mulf %252, %260 : vector<8x32xf32>
    %270 = arith.addf %268, %269 : vector<8x32xf32>
    %271 = math.tanh %270 : vector<8x32xf32>
    %272 = arith.mulf %266, %271 : vector<8x32xf32>
    %c0_126 = arith.constant 0 : index
    %c0_127 = arith.constant 0 : index
    %273 = vector.load %arg12[%c0_126, %c0_127] : memref<8x32xf32, #tpu.memory_space<vmem>>, vector<8x32xf32>
    tpu.vector_store %arg12[%c0_126, %c0_127], %270 {strides = array<i32>} : memref<8x32xf32, #tpu.memory_space<vmem>>, vector<8x32xf32>,
    %c0_128 = arith.constant 0 : index
    %c0_129 = arith.constant 0 : index
    %274 = vector.load %arg11[%c0_128, %c0_129] : memref<8x32xf32, #tpu.memory_space<vmem>>, vector<8x32xf32>
    tpu.vector_store %arg11[%c0_128, %c0_129], %272 {strides = array<i32>} : memref<8x32xf32, #tpu.memory_space<vmem>>, vector<8x32xf32>,
    %275 = arith.index_cast %240 : i32 to index
    %c0_130 = arith.constant 0 : index
    %276 = vector.load %arg10[%275, %c0_130] : memref<64x32xf32, #tpu.memory_space<vmem>>, vector<8x32xf32>
    tpu.vector_store %arg10[%275, %c0_130], %272 {strides = array<i32>} : memref<64x32xf32, #tpu.memory_space<vmem>>, vector<8x32xf32>,
    %c7_i32 = arith.constant 7 : i32
    %c8_i32_131 = arith.constant 8 : i32
    %277 = arith.muli %c7_i32, %c8_i32_131 : i32
    %278 = tpu.assume_multiple %277, 8 : i32
    %279 = arith.index_cast %278 : i32 to index
    %c0_132 = arith.constant 0 : index
    %280 = vector.load %arg9[%279, %c0_132] : memref<64x128xf32, #tpu.memory_space<vmem>>, vector<8x128xf32>
    %c0_133 = arith.constant 0 : index
    %c0_134 = arith.constant 0 : index
    %281 = vector.load %arg11[%c0_133, %c0_134] : memref<8x32xf32, #tpu.memory_space<vmem>>, vector<8x32xf32>
    %c0_135 = arith.constant 0 : index
    %c0_136 = arith.constant 0 : index
    %282 = vector.load %arg3[%c0_135, %c0_136] : memref<32x128xf32, #tpu.memory_space<vmem>>, vector<32x128xf32>
    %cst_137 = arith.constant dense<0.000000e+00> : vector<8x128xf32>
    %283 = tpu.matmul %281, %282, %cst_137 {dimension_numbers = #tpu.dot_dimension_numbers<[1], [0], [0], [1], [0, 0, 1, 1], [], []>} : vector<8x32xf32>, vector<32x128xf32>, vector<8x128xf32> -> vector<8x128xf32>
    %284 = arith.addf %280, %283 : vector<8x128xf32>
    %285 = vector.extract_strided_slice %284 {offsets = [0, 0], sizes = [8, 32], strides = [1, 1]} : vector<8x128xf32> to vector<8x32xf32>
    %286 = arith.negf %285 : vector<8x32xf32>
    %287 = math.exp %286 : vector<8x32xf32>
    %cst_138 = arith.constant 1.000000e+00 : f32
    %288 = vector.broadcast %cst_138 : f32 to vector<8x32xf32>
    %289 = arith.addf %288, %287 : vector<8x32xf32>
    %290 = arith.divf %288, %289 : vector<8x32xf32>
    %291 = vector.extract_strided_slice %284 {offsets = [0, 32], sizes = [8, 32], strides = [1, 1]} : vector<8x128xf32> to vector<8x32xf32>
    %292 = arith.negf %291 : vector<8x32xf32>
    %293 = math.exp %292 : vector<8x32xf32>
    %cst_139 = arith.constant 1.000000e+00 : f32
    %294 = vector.broadcast %cst_139 : f32 to vector<8x32xf32>
    %295 = arith.addf %294, %293 : vector<8x32xf32>
    %296 = arith.divf %294, %295 : vector<8x32xf32>
    %297 = vector.extract_strided_slice %284 {offsets = [0, 64], sizes = [8, 32], strides = [1, 1]} : vector<8x128xf32> to vector<8x32xf32>
    %298 = math.tanh %297 : vector<8x32xf32>
    %299 = vector.extract_strided_slice %284 {offsets = [0, 96], sizes = [8, 32], strides = [1, 1]} : vector<8x128xf32> to vector<8x32xf32>
    %300 = arith.negf %299 : vector<8x32xf32>
    %301 = math.exp %300 : vector<8x32xf32>
    %cst_140 = arith.constant 1.000000e+00 : f32
    %302 = vector.broadcast %cst_140 : f32 to vector<8x32xf32>
    %303 = arith.addf %302, %301 : vector<8x32xf32>
    %304 = arith.divf %302, %303 : vector<8x32xf32>
    %c0_141 = arith.constant 0 : index
    %c0_142 = arith.constant 0 : index
    %305 = vector.load %arg12[%c0_141, %c0_142] : memref<8x32xf32, #tpu.memory_space<vmem>>, vector<8x32xf32>
    %306 = arith.mulf %296, %305 : vector<8x32xf32>
    %307 = arith.mulf %290, %298 : vector<8x32xf32>
    %308 = arith.addf %306, %307 : vector<8x32xf32>
    %309 = math.tanh %308 : vector<8x32xf32>
    %310 = arith.mulf %304, %309 : vector<8x32xf32>
    %c0_143 = arith.constant 0 : index
    %c0_144 = arith.constant 0 : index
    %311 = vector.load %arg12[%c0_143, %c0_144] : memref<8x32xf32, #tpu.memory_space<vmem>>, vector<8x32xf32>
    tpu.vector_store %arg12[%c0_143, %c0_144], %308 {strides = array<i32>} : memref<8x32xf32, #tpu.memory_space<vmem>>, vector<8x32xf32>,
    %c0_145 = arith.constant 0 : index
    %c0_146 = arith.constant 0 : index
    %312 = vector.load %arg11[%c0_145, %c0_146] : memref<8x32xf32, #tpu.memory_space<vmem>>, vector<8x32xf32>
    tpu.vector_store %arg11[%c0_145, %c0_146], %310 {strides = array<i32>} : memref<8x32xf32, #tpu.memory_space<vmem>>, vector<8x32xf32>,
    %313 = arith.index_cast %278 : i32 to index
    %c0_147 = arith.constant 0 : index
    %314 = vector.load %arg10[%313, %c0_147] : memref<64x32xf32, #tpu.memory_space<vmem>>, vector<8x32xf32>
    tpu.vector_store %arg10[%313, %c0_147], %310 {strides = array<i32>} : memref<64x32xf32, #tpu.memory_space<vmem>>, vector<8x32xf32>,
    %c8_i32_148 = arith.constant 8 : i32
    %c0_149 = arith.constant 0 : index
    %c0_150 = arith.constant 0 : index
    %315 = vector.load %arg10[%c0_149, %c0_150] : memref<64x32xf32, #tpu.memory_space<vmem>>, vector<64x32xf32>
    %c0_151 = arith.constant 0 : index
    %c0_152 = arith.constant 0 : index
    %316 = vector.load %arg8[%c0_151, %c0_152] : memref<64x64xf32, #tpu.memory_space<vmem>>, vector<64x32xf32>
    tpu.vector_store %arg8[%c0_151, %c0_152], %315 {strides = array<i32>} : memref<64x64xf32, #tpu.memory_space<vmem>>, vector<64x32xf32>,
    %c0_153 = arith.constant 0 : index
    %c0_154 = arith.constant 0 : index
    %317 = vector.load %arg10[%c0_153, %c0_154] : memref<64x32xf32, #tpu.memory_space<vmem>>, vector<64x32xf32>
    %c0_155 = arith.constant 0 : index
    %c0_156 = arith.constant 0 : index
    %318 = vector.load %arg5[%c0_155, %c0_156] : memref<32x128xf32, #tpu.memory_space<vmem>>, vector<32x128xf32>
    %cst_157 = arith.constant dense<0.000000e+00> : vector<64x128xf32>
    %319 = tpu.matmul %317, %318, %cst_157 {dimension_numbers = #tpu.dot_dimension_numbers<[1], [0], [0], [1], [0, 0, 1, 1], [], []>} : vector<64x32xf32>, vector<32x128xf32>, vector<64x128xf32> -> vector<64x128xf32>
    %c0_158 = arith.constant 0 : index
    %c0_159 = arith.constant 0 : index
    %320 = vector.load %arg7[%c0_158, %c0_159] : memref<1x128xf32, #tpu.memory_space<vmem>>, vector<1x128xf32>
    %321 = vector.broadcast %320 : vector<1x128xf32> to vector<64x128xf32>
    %322 = arith.addf %319, %321 : vector<64x128xf32>
    %c0_160 = arith.constant 0 : index
    %c0_161 = arith.constant 0 : index
    %323 = vector.load %arg9[%c0_160, %c0_161] : memref<64x128xf32, #tpu.memory_space<vmem>>, vector<64x128xf32>
    tpu.vector_store %arg9[%c0_160, %c0_161], %322 {strides = array<i32>} : memref<64x128xf32, #tpu.memory_space<vmem>>, vector<64x128xf32>,
    %cst_162 = arith.constant 0.000000e+00 : f32
    %324 = vector.broadcast %cst_162 : f32 to vector<8x32xf32>
    %c0_163 = arith.constant 0 : index
    %c0_164 = arith.constant 0 : index
    %325 = vector.load %arg11[%c0_163, %c0_164] : memref<8x32xf32, #tpu.memory_space<vmem>>, vector<8x32xf32>
    tpu.vector_store %arg11[%c0_163, %c0_164], %324 {strides = array<i32>} : memref<8x32xf32, #tpu.memory_space<vmem>>, vector<8x32xf32>,
    %cst_165 = arith.constant 0.000000e+00 : f32
    %326 = vector.broadcast %cst_165 : f32 to vector<8x32xf32>
    %c0_166 = arith.constant 0 : index
    %c0_167 = arith.constant 0 : index
    %327 = vector.load %arg12[%c0_166, %c0_167] : memref<8x32xf32, #tpu.memory_space<vmem>>, vector<8x32xf32>
    tpu.vector_store %arg12[%c0_166, %c0_167], %326 {strides = array<i32>} : memref<8x32xf32, #tpu.memory_space<vmem>>, vector<8x32xf32>,
    %c0_i32_168 = arith.constant 0 : i32
    %c8_i32_169 = arith.constant 8 : i32
    %328 = arith.muli %c0_i32_168, %c8_i32_169 : i32
    %329 = tpu.assume_multiple %328, 8 : i32
    %330 = arith.index_cast %329 : i32 to index
    %c0_170 = arith.constant 0 : index
    %331 = vector.load %arg9[%330, %c0_170] : memref<64x128xf32, #tpu.memory_space<vmem>>, vector<8x128xf32>
    %c0_171 = arith.constant 0 : index
    %c0_172 = arith.constant 0 : index
    %332 = vector.load %arg11[%c0_171, %c0_172] : memref<8x32xf32, #tpu.memory_space<vmem>>, vector<8x32xf32>
    %c0_173 = arith.constant 0 : index
    %c0_174 = arith.constant 0 : index
    %333 = vector.load %arg6[%c0_173, %c0_174] : memref<32x128xf32, #tpu.memory_space<vmem>>, vector<32x128xf32>
    %cst_175 = arith.constant dense<0.000000e+00> : vector<8x128xf32>
    %334 = tpu.matmul %332, %333, %cst_175 {dimension_numbers = #tpu.dot_dimension_numbers<[1], [0], [0], [1], [0, 0, 1, 1], [], []>} : vector<8x32xf32>, vector<32x128xf32>, vector<8x128xf32> -> vector<8x128xf32>
    %335 = arith.addf %331, %334 : vector<8x128xf32>
    %336 = vector.extract_strided_slice %335 {offsets = [0, 0], sizes = [8, 32], strides = [1, 1]} : vector<8x128xf32> to vector<8x32xf32>
    %337 = arith.negf %336 : vector<8x32xf32>
    %338 = math.exp %337 : vector<8x32xf32>
    %cst_176 = arith.constant 1.000000e+00 : f32
    %339 = vector.broadcast %cst_176 : f32 to vector<8x32xf32>
    %340 = arith.addf %339, %338 : vector<8x32xf32>
    %341 = arith.divf %339, %340 : vector<8x32xf32>
    %342 = vector.extract_strided_slice %335 {offsets = [0, 32], sizes = [8, 32], strides = [1, 1]} : vector<8x128xf32> to vector<8x32xf32>
    %343 = arith.negf %342 : vector<8x32xf32>
    %344 = math.exp %343 : vector<8x32xf32>
    %cst_177 = arith.constant 1.000000e+00 : f32
    %345 = vector.broadcast %cst_177 : f32 to vector<8x32xf32>
    %346 = arith.addf %345, %344 : vector<8x32xf32>
    %347 = arith.divf %345, %346 : vector<8x32xf32>
    %348 = vector.extract_strided_slice %335 {offsets = [0, 64], sizes = [8, 32], strides = [1, 1]} : vector<8x128xf32> to vector<8x32xf32>
    %349 = math.tanh %348 : vector<8x32xf32>
    %350 = vector.extract_strided_slice %335 {offsets = [0, 96], sizes = [8, 32], strides = [1, 1]} : vector<8x128xf32> to vector<8x32xf32>
    %351 = arith.negf %350 : vector<8x32xf32>
    %352 = math.exp %351 : vector<8x32xf32>
    %cst_178 = arith.constant 1.000000e+00 : f32
    %353 = vector.broadcast %cst_178 : f32 to vector<8x32xf32>
    %354 = arith.addf %353, %352 : vector<8x32xf32>
    %355 = arith.divf %353, %354 : vector<8x32xf32>
    %c0_179 = arith.constant 0 : index
    %c0_180 = arith.constant 0 : index
    %356 = vector.load %arg12[%c0_179, %c0_180] : memref<8x32xf32, #tpu.memory_space<vmem>>, vector<8x32xf32>
    %357 = arith.mulf %347, %356 : vector<8x32xf32>
    %358 = arith.mulf %341, %349 : vector<8x32xf32>
    %359 = arith.addf %357, %358 : vector<8x32xf32>
    %360 = math.tanh %359 : vector<8x32xf32>
    %361 = arith.mulf %355, %360 : vector<8x32xf32>
    %c0_181 = arith.constant 0 : index
    %c0_182 = arith.constant 0 : index
    %362 = vector.load %arg12[%c0_181, %c0_182] : memref<8x32xf32, #tpu.memory_space<vmem>>, vector<8x32xf32>
    tpu.vector_store %arg12[%c0_181, %c0_182], %359 {strides = array<i32>} : memref<8x32xf32, #tpu.memory_space<vmem>>, vector<8x32xf32>,
    %c0_183 = arith.constant 0 : index
    %c0_184 = arith.constant 0 : index
    %363 = vector.load %arg11[%c0_183, %c0_184] : memref<8x32xf32, #tpu.memory_space<vmem>>, vector<8x32xf32>
    tpu.vector_store %arg11[%c0_183, %c0_184], %361 {strides = array<i32>} : memref<8x32xf32, #tpu.memory_space<vmem>>, vector<8x32xf32>,
    %364 = arith.index_cast %329 : i32 to index
    %c0_185 = arith.constant 0 : index
    %365 = vector.load %arg10[%364, %c0_185] : memref<64x32xf32, #tpu.memory_space<vmem>>, vector<8x32xf32>
    tpu.vector_store %arg10[%364, %c0_185], %361 {strides = array<i32>} : memref<64x32xf32, #tpu.memory_space<vmem>>, vector<8x32xf32>,
    %c1_i32_186 = arith.constant 1 : i32
    %c8_i32_187 = arith.constant 8 : i32
    %366 = arith.muli %c1_i32_186, %c8_i32_187 : i32
    %367 = tpu.assume_multiple %366, 8 : i32
    %368 = arith.index_cast %367 : i32 to index
    %c0_188 = arith.constant 0 : index
    %369 = vector.load %arg9[%368, %c0_188] : memref<64x128xf32, #tpu.memory_space<vmem>>, vector<8x128xf32>
    %c0_189 = arith.constant 0 : index
    %c0_190 = arith.constant 0 : index
    %370 = vector.load %arg11[%c0_189, %c0_190] : memref<8x32xf32, #tpu.memory_space<vmem>>, vector<8x32xf32>
    %c0_191 = arith.constant 0 : index
    %c0_192 = arith.constant 0 : index
    %371 = vector.load %arg6[%c0_191, %c0_192] : memref<32x128xf32, #tpu.memory_space<vmem>>, vector<32x128xf32>
    %cst_193 = arith.constant dense<0.000000e+00> : vector<8x128xf32>
    %372 = tpu.matmul %370, %371, %cst_193 {dimension_numbers = #tpu.dot_dimension_numbers<[1], [0], [0], [1], [0, 0, 1, 1], [], []>} : vector<8x32xf32>, vector<32x128xf32>, vector<8x128xf32> -> vector<8x128xf32>
    %373 = arith.addf %369, %372 : vector<8x128xf32>
    %374 = vector.extract_strided_slice %373 {offsets = [0, 0], sizes = [8, 32], strides = [1, 1]} : vector<8x128xf32> to vector<8x32xf32>
    %375 = arith.negf %374 : vector<8x32xf32>
    %376 = math.exp %375 : vector<8x32xf32>
    %cst_194 = arith.constant 1.000000e+00 : f32
    %377 = vector.broadcast %cst_194 : f32 to vector<8x32xf32>
    %378 = arith.addf %377, %376 : vector<8x32xf32>
    %379 = arith.divf %377, %378 : vector<8x32xf32>
    %380 = vector.extract_strided_slice %373 {offsets = [0, 32], sizes = [8, 32], strides = [1, 1]} : vector<8x128xf32> to vector<8x32xf32>
    %381 = arith.negf %380 : vector<8x32xf32>
    %382 = math.exp %381 : vector<8x32xf32>
    %cst_195 = arith.constant 1.000000e+00 : f32
    %383 = vector.broadcast %cst_195 : f32 to vector<8x32xf32>
    %384 = arith.addf %383, %382 : vector<8x32xf32>
    %385 = arith.divf %383, %384 : vector<8x32xf32>
    %386 = vector.extract_strided_slice %373 {offsets = [0, 64], sizes = [8, 32], strides = [1, 1]} : vector<8x128xf32> to vector<8x32xf32>
    %387 = math.tanh %386 : vector<8x32xf32>
    %388 = vector.extract_strided_slice %373 {offsets = [0, 96], sizes = [8, 32], strides = [1, 1]} : vector<8x128xf32> to vector<8x32xf32>
    %389 = arith.negf %388 : vector<8x32xf32>
    %390 = math.exp %389 : vector<8x32xf32>
    %cst_196 = arith.constant 1.000000e+00 : f32
    %391 = vector.broadcast %cst_196 : f32 to vector<8x32xf32>
    %392 = arith.addf %391, %390 : vector<8x32xf32>
    %393 = arith.divf %391, %392 : vector<8x32xf32>
    %c0_197 = arith.constant 0 : index
    %c0_198 = arith.constant 0 : index
    %394 = vector.load %arg12[%c0_197, %c0_198] : memref<8x32xf32, #tpu.memory_space<vmem>>, vector<8x32xf32>
    %395 = arith.mulf %385, %394 : vector<8x32xf32>
    %396 = arith.mulf %379, %387 : vector<8x32xf32>
    %397 = arith.addf %395, %396 : vector<8x32xf32>
    %398 = math.tanh %397 : vector<8x32xf32>
    %399 = arith.mulf %393, %398 : vector<8x32xf32>
    %c0_199 = arith.constant 0 : index
    %c0_200 = arith.constant 0 : index
    %400 = vector.load %arg12[%c0_199, %c0_200] : memref<8x32xf32, #tpu.memory_space<vmem>>, vector<8x32xf32>
    tpu.vector_store %arg12[%c0_199, %c0_200], %397 {strides = array<i32>} : memref<8x32xf32, #tpu.memory_space<vmem>>, vector<8x32xf32>,
    %c0_201 = arith.constant 0 : index
    %c0_202 = arith.constant 0 : index
    %401 = vector.load %arg11[%c0_201, %c0_202] : memref<8x32xf32, #tpu.memory_space<vmem>>, vector<8x32xf32>
    tpu.vector_store %arg11[%c0_201, %c0_202], %399 {strides = array<i32>} : memref<8x32xf32, #tpu.memory_space<vmem>>, vector<8x32xf32>,
    %402 = arith.index_cast %367 : i32 to index
    %c0_203 = arith.constant 0 : index
    %403 = vector.load %arg10[%402, %c0_203] : memref<64x32xf32, #tpu.memory_space<vmem>>, vector<8x32xf32>
    tpu.vector_store %arg10[%402, %c0_203], %399 {strides = array<i32>} : memref<64x32xf32, #tpu.memory_space<vmem>>, vector<8x32xf32>,
    %c2_i32_204 = arith.constant 2 : i32
    %c8_i32_205 = arith.constant 8 : i32
    %404 = arith.muli %c2_i32_204, %c8_i32_205 : i32
    %405 = tpu.assume_multiple %404, 8 : i32
    %406 = arith.index_cast %405 : i32 to index
    %c0_206 = arith.constant 0 : index
    %407 = vector.load %arg9[%406, %c0_206] : memref<64x128xf32, #tpu.memory_space<vmem>>, vector<8x128xf32>
    %c0_207 = arith.constant 0 : index
    %c0_208 = arith.constant 0 : index
    %408 = vector.load %arg11[%c0_207, %c0_208] : memref<8x32xf32, #tpu.memory_space<vmem>>, vector<8x32xf32>
    %c0_209 = arith.constant 0 : index
    %c0_210 = arith.constant 0 : index
    %409 = vector.load %arg6[%c0_209, %c0_210] : memref<32x128xf32, #tpu.memory_space<vmem>>, vector<32x128xf32>
    %cst_211 = arith.constant dense<0.000000e+00> : vector<8x128xf32>
    %410 = tpu.matmul %408, %409, %cst_211 {dimension_numbers = #tpu.dot_dimension_numbers<[1], [0], [0], [1], [0, 0, 1, 1], [], []>} : vector<8x32xf32>, vector<32x128xf32>, vector<8x128xf32> -> vector<8x128xf32>
    %411 = arith.addf %407, %410 : vector<8x128xf32>
    %412 = vector.extract_strided_slice %411 {offsets = [0, 0], sizes = [8, 32], strides = [1, 1]} : vector<8x128xf32> to vector<8x32xf32>
    %413 = arith.negf %412 : vector<8x32xf32>
    %414 = math.exp %413 : vector<8x32xf32>
    %cst_212 = arith.constant 1.000000e+00 : f32
    %415 = vector.broadcast %cst_212 : f32 to vector<8x32xf32>
    %416 = arith.addf %415, %414 : vector<8x32xf32>
    %417 = arith.divf %415, %416 : vector<8x32xf32>
    %418 = vector.extract_strided_slice %411 {offsets = [0, 32], sizes = [8, 32], strides = [1, 1]} : vector<8x128xf32> to vector<8x32xf32>
    %419 = arith.negf %418 : vector<8x32xf32>
    %420 = math.exp %419 : vector<8x32xf32>
    %cst_213 = arith.constant 1.000000e+00 : f32
    %421 = vector.broadcast %cst_213 : f32 to vector<8x32xf32>
    %422 = arith.addf %421, %420 : vector<8x32xf32>
    %423 = arith.divf %421, %422 : vector<8x32xf32>
    %424 = vector.extract_strided_slice %411 {offsets = [0, 64], sizes = [8, 32], strides = [1, 1]} : vector<8x128xf32> to vector<8x32xf32>
    %425 = math.tanh %424 : vector<8x32xf32>
    %426 = vector.extract_strided_slice %411 {offsets = [0, 96], sizes = [8, 32], strides = [1, 1]} : vector<8x128xf32> to vector<8x32xf32>
    %427 = arith.negf %426 : vector<8x32xf32>
    %428 = math.exp %427 : vector<8x32xf32>
    %cst_214 = arith.constant 1.000000e+00 : f32
    %429 = vector.broadcast %cst_214 : f32 to vector<8x32xf32>
    %430 = arith.addf %429, %428 : vector<8x32xf32>
    %431 = arith.divf %429, %430 : vector<8x32xf32>
    %c0_215 = arith.constant 0 : index
    %c0_216 = arith.constant 0 : index
    %432 = vector.load %arg12[%c0_215, %c0_216] : memref<8x32xf32, #tpu.memory_space<vmem>>, vector<8x32xf32>
    %433 = arith.mulf %423, %432 : vector<8x32xf32>
    %434 = arith.mulf %417, %425 : vector<8x32xf32>
    %435 = arith.addf %433, %434 : vector<8x32xf32>
    %436 = math.tanh %435 : vector<8x32xf32>
    %437 = arith.mulf %431, %436 : vector<8x32xf32>
    %c0_217 = arith.constant 0 : index
    %c0_218 = arith.constant 0 : index
    %438 = vector.load %arg12[%c0_217, %c0_218] : memref<8x32xf32, #tpu.memory_space<vmem>>, vector<8x32xf32>
    tpu.vector_store %arg12[%c0_217, %c0_218], %435 {strides = array<i32>} : memref<8x32xf32, #tpu.memory_space<vmem>>, vector<8x32xf32>,
    %c0_219 = arith.constant 0 : index
    %c0_220 = arith.constant 0 : index
    %439 = vector.load %arg11[%c0_219, %c0_220] : memref<8x32xf32, #tpu.memory_space<vmem>>, vector<8x32xf32>
    tpu.vector_store %arg11[%c0_219, %c0_220], %437 {strides = array<i32>} : memref<8x32xf32, #tpu.memory_space<vmem>>, vector<8x32xf32>,
    %440 = arith.index_cast %405 : i32 to index
    %c0_221 = arith.constant 0 : index
    %441 = vector.load %arg10[%440, %c0_221] : memref<64x32xf32, #tpu.memory_space<vmem>>, vector<8x32xf32>
    tpu.vector_store %arg10[%440, %c0_221], %437 {strides = array<i32>} : memref<64x32xf32, #tpu.memory_space<vmem>>, vector<8x32xf32>,
    %c3_i32_222 = arith.constant 3 : i32
    %c8_i32_223 = arith.constant 8 : i32
    %442 = arith.muli %c3_i32_222, %c8_i32_223 : i32
    %443 = tpu.assume_multiple %442, 8 : i32
    %444 = arith.index_cast %443 : i32 to index
    %c0_224 = arith.constant 0 : index
    %445 = vector.load %arg9[%444, %c0_224] : memref<64x128xf32, #tpu.memory_space<vmem>>, vector<8x128xf32>
    %c0_225 = arith.constant 0 : index
    %c0_226 = arith.constant 0 : index
    %446 = vector.load %arg11[%c0_225, %c0_226] : memref<8x32xf32, #tpu.memory_space<vmem>>, vector<8x32xf32>
    %c0_227 = arith.constant 0 : index
    %c0_228 = arith.constant 0 : index
    %447 = vector.load %arg6[%c0_227, %c0_228] : memref<32x128xf32, #tpu.memory_space<vmem>>, vector<32x128xf32>
    %cst_229 = arith.constant dense<0.000000e+00> : vector<8x128xf32>
    %448 = tpu.matmul %446, %447, %cst_229 {dimension_numbers = #tpu.dot_dimension_numbers<[1], [0], [0], [1], [0, 0, 1, 1], [], []>} : vector<8x32xf32>, vector<32x128xf32>, vector<8x128xf32> -> vector<8x128xf32>
    %449 = arith.addf %445, %448 : vector<8x128xf32>
    %450 = vector.extract_strided_slice %449 {offsets = [0, 0], sizes = [8, 32], strides = [1, 1]} : vector<8x128xf32> to vector<8x32xf32>
    %451 = arith.negf %450 : vector<8x32xf32>
    %452 = math.exp %451 : vector<8x32xf32>
    %cst_230 = arith.constant 1.000000e+00 : f32
    %453 = vector.broadcast %cst_230 : f32 to vector<8x32xf32>
    %454 = arith.addf %453, %452 : vector<8x32xf32>
    %455 = arith.divf %453, %454 : vector<8x32xf32>
    %456 = vector.extract_strided_slice %449 {offsets = [0, 32], sizes = [8, 32], strides = [1, 1]} : vector<8x128xf32> to vector<8x32xf32>
    %457 = arith.negf %456 : vector<8x32xf32>
    %458 = math.exp %457 : vector<8x32xf32>
    %cst_231 = arith.constant 1.000000e+00 : f32
    %459 = vector.broadcast %cst_231 : f32 to vector<8x32xf32>
    %460 = arith.addf %459, %458 : vector<8x32xf32>
    %461 = arith.divf %459, %460 : vector<8x32xf32>
    %462 = vector.extract_strided_slice %449 {offsets = [0, 64], sizes = [8, 32], strides = [1, 1]} : vector<8x128xf32> to vector<8x32xf32>
    %463 = math.tanh %462 : vector<8x32xf32>
    %464 = vector.extract_strided_slice %449 {offsets = [0, 96], sizes = [8, 32], strides = [1, 1]} : vector<8x128xf32> to vector<8x32xf32>
    %465 = arith.negf %464 : vector<8x32xf32>
    %466 = math.exp %465 : vector<8x32xf32>
    %cst_232 = arith.constant 1.000000e+00 : f32
    %467 = vector.broadcast %cst_232 : f32 to vector<8x32xf32>
    %468 = arith.addf %467, %466 : vector<8x32xf32>
    %469 = arith.divf %467, %468 : vector<8x32xf32>
    %c0_233 = arith.constant 0 : index
    %c0_234 = arith.constant 0 : index
    %470 = vector.load %arg12[%c0_233, %c0_234] : memref<8x32xf32, #tpu.memory_space<vmem>>, vector<8x32xf32>
    %471 = arith.mulf %461, %470 : vector<8x32xf32>
    %472 = arith.mulf %455, %463 : vector<8x32xf32>
    %473 = arith.addf %471, %472 : vector<8x32xf32>
    %474 = math.tanh %473 : vector<8x32xf32>
    %475 = arith.mulf %469, %474 : vector<8x32xf32>
    %c0_235 = arith.constant 0 : index
    %c0_236 = arith.constant 0 : index
    %476 = vector.load %arg12[%c0_235, %c0_236] : memref<8x32xf32, #tpu.memory_space<vmem>>, vector<8x32xf32>
    tpu.vector_store %arg12[%c0_235, %c0_236], %473 {strides = array<i32>} : memref<8x32xf32, #tpu.memory_space<vmem>>, vector<8x32xf32>,
    %c0_237 = arith.constant 0 : index
    %c0_238 = arith.constant 0 : index
    %477 = vector.load %arg11[%c0_237, %c0_238] : memref<8x32xf32, #tpu.memory_space<vmem>>, vector<8x32xf32>
    tpu.vector_store %arg11[%c0_237, %c0_238], %475 {strides = array<i32>} : memref<8x32xf32, #tpu.memory_space<vmem>>, vector<8x32xf32>,
    %478 = arith.index_cast %443 : i32 to index
    %c0_239 = arith.constant 0 : index
    %479 = vector.load %arg10[%478, %c0_239] : memref<64x32xf32, #tpu.memory_space<vmem>>, vector<8x32xf32>
    tpu.vector_store %arg10[%478, %c0_239], %475 {strides = array<i32>} : memref<64x32xf32, #tpu.memory_space<vmem>>, vector<8x32xf32>,
    %c4_i32_240 = arith.constant 4 : i32
    %c8_i32_241 = arith.constant 8 : i32
    %480 = arith.muli %c4_i32_240, %c8_i32_241 : i32
    %481 = tpu.assume_multiple %480, 8 : i32
    %482 = arith.index_cast %481 : i32 to index
    %c0_242 = arith.constant 0 : index
    %483 = vector.load %arg9[%482, %c0_242] : memref<64x128xf32, #tpu.memory_space<vmem>>, vector<8x128xf32>
    %c0_243 = arith.constant 0 : index
    %c0_244 = arith.constant 0 : index
    %484 = vector.load %arg11[%c0_243, %c0_244] : memref<8x32xf32, #tpu.memory_space<vmem>>, vector<8x32xf32>
    %c0_245 = arith.constant 0 : index
    %c0_246 = arith.constant 0 : index
    %485 = vector.load %arg6[%c0_245, %c0_246] : memref<32x128xf32, #tpu.memory_space<vmem>>, vector<32x128xf32>
    %cst_247 = arith.constant dense<0.000000e+00> : vector<8x128xf32>
    %486 = tpu.matmul %484, %485, %cst_247 {dimension_numbers = #tpu.dot_dimension_numbers<[1], [0], [0], [1], [0, 0, 1, 1], [], []>} : vector<8x32xf32>, vector<32x128xf32>, vector<8x128xf32> -> vector<8x128xf32>
    %487 = arith.addf %483, %486 : vector<8x128xf32>
    %488 = vector.extract_strided_slice %487 {offsets = [0, 0], sizes = [8, 32], strides = [1, 1]} : vector<8x128xf32> to vector<8x32xf32>
    %489 = arith.negf %488 : vector<8x32xf32>
    %490 = math.exp %489 : vector<8x32xf32>
    %cst_248 = arith.constant 1.000000e+00 : f32
    %491 = vector.broadcast %cst_248 : f32 to vector<8x32xf32>
    %492 = arith.addf %491, %490 : vector<8x32xf32>
    %493 = arith.divf %491, %492 : vector<8x32xf32>
    %494 = vector.extract_strided_slice %487 {offsets = [0, 32], sizes = [8, 32], strides = [1, 1]} : vector<8x128xf32> to vector<8x32xf32>
    %495 = arith.negf %494 : vector<8x32xf32>
    %496 = math.exp %495 : vector<8x32xf32>
    %cst_249 = arith.constant 1.000000e+00 : f32
    %497 = vector.broadcast %cst_249 : f32 to vector<8x32xf32>
    %498 = arith.addf %497, %496 : vector<8x32xf32>
    %499 = arith.divf %497, %498 : vector<8x32xf32>
    %500 = vector.extract_strided_slice %487 {offsets = [0, 64], sizes = [8, 32], strides = [1, 1]} : vector<8x128xf32> to vector<8x32xf32>
    %501 = math.tanh %500 : vector<8x32xf32>
    %502 = vector.extract_strided_slice %487 {offsets = [0, 96], sizes = [8, 32], strides = [1, 1]} : vector<8x128xf32> to vector<8x32xf32>
    %503 = arith.negf %502 : vector<8x32xf32>
    %504 = math.exp %503 : vector<8x32xf32>
    %cst_250 = arith.constant 1.000000e+00 : f32
    %505 = vector.broadcast %cst_250 : f32 to vector<8x32xf32>
    %506 = arith.addf %505, %504 : vector<8x32xf32>
    %507 = arith.divf %505, %506 : vector<8x32xf32>
    %c0_251 = arith.constant 0 : index
    %c0_252 = arith.constant 0 : index
    %508 = vector.load %arg12[%c0_251, %c0_252] : memref<8x32xf32, #tpu.memory_space<vmem>>, vector<8x32xf32>
    %509 = arith.mulf %499, %508 : vector<8x32xf32>
    %510 = arith.mulf %493, %501 : vector<8x32xf32>
    %511 = arith.addf %509, %510 : vector<8x32xf32>
    %512 = math.tanh %511 : vector<8x32xf32>
    %513 = arith.mulf %507, %512 : vector<8x32xf32>
    %c0_253 = arith.constant 0 : index
    %c0_254 = arith.constant 0 : index
    %514 = vector.load %arg12[%c0_253, %c0_254] : memref<8x32xf32, #tpu.memory_space<vmem>>, vector<8x32xf32>
    tpu.vector_store %arg12[%c0_253, %c0_254], %511 {strides = array<i32>} : memref<8x32xf32, #tpu.memory_space<vmem>>, vector<8x32xf32>,
    %c0_255 = arith.constant 0 : index
    %c0_256 = arith.constant 0 : index
    %515 = vector.load %arg11[%c0_255, %c0_256] : memref<8x32xf32, #tpu.memory_space<vmem>>, vector<8x32xf32>
    tpu.vector_store %arg11[%c0_255, %c0_256], %513 {strides = array<i32>} : memref<8x32xf32, #tpu.memory_space<vmem>>, vector<8x32xf32>,
    %516 = arith.index_cast %481 : i32 to index
    %c0_257 = arith.constant 0 : index
    %517 = vector.load %arg10[%516, %c0_257] : memref<64x32xf32, #tpu.memory_space<vmem>>, vector<8x32xf32>
    tpu.vector_store %arg10[%516, %c0_257], %513 {strides = array<i32>} : memref<64x32xf32, #tpu.memory_space<vmem>>, vector<8x32xf32>,
    %c5_i32_258 = arith.constant 5 : i32
    %c8_i32_259 = arith.constant 8 : i32
    %518 = arith.muli %c5_i32_258, %c8_i32_259 : i32
    %519 = tpu.assume_multiple %518, 8 : i32
    %520 = arith.index_cast %519 : i32 to index
    %c0_260 = arith.constant 0 : index
    %521 = vector.load %arg9[%520, %c0_260] : memref<64x128xf32, #tpu.memory_space<vmem>>, vector<8x128xf32>
    %c0_261 = arith.constant 0 : index
    %c0_262 = arith.constant 0 : index
    %522 = vector.load %arg11[%c0_261, %c0_262] : memref<8x32xf32, #tpu.memory_space<vmem>>, vector<8x32xf32>
    %c0_263 = arith.constant 0 : index
    %c0_264 = arith.constant 0 : index
    %523 = vector.load %arg6[%c0_263, %c0_264] : memref<32x128xf32, #tpu.memory_space<vmem>>, vector<32x128xf32>
    %cst_265 = arith.constant dense<0.000000e+00> : vector<8x128xf32>
    %524 = tpu.matmul %522, %523, %cst_265 {dimension_numbers = #tpu.dot_dimension_numbers<[1], [0], [0], [1], [0, 0, 1, 1], [], []>} : vector<8x32xf32>, vector<32x128xf32>, vector<8x128xf32> -> vector<8x128xf32>
    %525 = arith.addf %521, %524 : vector<8x128xf32>
    %526 = vector.extract_strided_slice %525 {offsets = [0, 0], sizes = [8, 32], strides = [1, 1]} : vector<8x128xf32> to vector<8x32xf32>
    %527 = arith.negf %526 : vector<8x32xf32>
    %528 = math.exp %527 : vector<8x32xf32>
    %cst_266 = arith.constant 1.000000e+00 : f32
    %529 = vector.broadcast %cst_266 : f32 to vector<8x32xf32>
    %530 = arith.addf %529, %528 : vector<8x32xf32>
    %531 = arith.divf %529, %530 : vector<8x32xf32>
    %532 = vector.extract_strided_slice %525 {offsets = [0, 32], sizes = [8, 32], strides = [1, 1]} : vector<8x128xf32> to vector<8x32xf32>
    %533 = arith.negf %532 : vector<8x32xf32>
    %534 = math.exp %533 : vector<8x32xf32>
    %cst_267 = arith.constant 1.000000e+00 : f32
    %535 = vector.broadcast %cst_267 : f32 to vector<8x32xf32>
    %536 = arith.addf %535, %534 : vector<8x32xf32>
    %537 = arith.divf %535, %536 : vector<8x32xf32>
    %538 = vector.extract_strided_slice %525 {offsets = [0, 64], sizes = [8, 32], strides = [1, 1]} : vector<8x128xf32> to vector<8x32xf32>
    %539 = math.tanh %538 : vector<8x32xf32>
    %540 = vector.extract_strided_slice %525 {offsets = [0, 96], sizes = [8, 32], strides = [1, 1]} : vector<8x128xf32> to vector<8x32xf32>
    %541 = arith.negf %540 : vector<8x32xf32>
    %542 = math.exp %541 : vector<8x32xf32>
    %cst_268 = arith.constant 1.000000e+00 : f32
    %543 = vector.broadcast %cst_268 : f32 to vector<8x32xf32>
    %544 = arith.addf %543, %542 : vector<8x32xf32>
    %545 = arith.divf %543, %544 : vector<8x32xf32>
    %c0_269 = arith.constant 0 : index
    %c0_270 = arith.constant 0 : index
    %546 = vector.load %arg12[%c0_269, %c0_270] : memref<8x32xf32, #tpu.memory_space<vmem>>, vector<8x32xf32>
    %547 = arith.mulf %537, %546 : vector<8x32xf32>
    %548 = arith.mulf %531, %539 : vector<8x32xf32>
    %549 = arith.addf %547, %548 : vector<8x32xf32>
    %550 = math.tanh %549 : vector<8x32xf32>
    %551 = arith.mulf %545, %550 : vector<8x32xf32>
    %c0_271 = arith.constant 0 : index
    %c0_272 = arith.constant 0 : index
    %552 = vector.load %arg12[%c0_271, %c0_272] : memref<8x32xf32, #tpu.memory_space<vmem>>, vector<8x32xf32>
    tpu.vector_store %arg12[%c0_271, %c0_272], %549 {strides = array<i32>} : memref<8x32xf32, #tpu.memory_space<vmem>>, vector<8x32xf32>,
    %c0_273 = arith.constant 0 : index
    %c0_274 = arith.constant 0 : index
    %553 = vector.load %arg11[%c0_273, %c0_274] : memref<8x32xf32, #tpu.memory_space<vmem>>, vector<8x32xf32>
    tpu.vector_store %arg11[%c0_273, %c0_274], %551 {strides = array<i32>} : memref<8x32xf32, #tpu.memory_space<vmem>>, vector<8x32xf32>,
    %554 = arith.index_cast %519 : i32 to index
    %c0_275 = arith.constant 0 : index
    %555 = vector.load %arg10[%554, %c0_275] : memref<64x32xf32, #tpu.memory_space<vmem>>, vector<8x32xf32>
    tpu.vector_store %arg10[%554, %c0_275], %551 {strides = array<i32>} : memref<64x32xf32, #tpu.memory_space<vmem>>, vector<8x32xf32>,
    %c6_i32_276 = arith.constant 6 : i32
    %c8_i32_277 = arith.constant 8 : i32
    %556 = arith.muli %c6_i32_276, %c8_i32_277 : i32
    %557 = tpu.assume_multiple %556, 8 : i32
    %558 = arith.index_cast %557 : i32 to index
    %c0_278 = arith.constant 0 : index
    %559 = vector.load %arg9[%558, %c0_278] : memref<64x128xf32, #tpu.memory_space<vmem>>, vector<8x128xf32>
    %c0_279 = arith.constant 0 : index
    %c0_280 = arith.constant 0 : index
    %560 = vector.load %arg11[%c0_279, %c0_280] : memref<8x32xf32, #tpu.memory_space<vmem>>, vector<8x32xf32>
    %c0_281 = arith.constant 0 : index
    %c0_282 = arith.constant 0 : index
    %561 = vector.load %arg6[%c0_281, %c0_282] : memref<32x128xf32, #tpu.memory_space<vmem>>, vector<32x128xf32>
    %cst_283 = arith.constant dense<0.000000e+00> : vector<8x128xf32>
    %562 = tpu.matmul %560, %561, %cst_283 {dimension_numbers = #tpu.dot_dimension_numbers<[1], [0], [0], [1], [0, 0, 1, 1], [], []>} : vector<8x32xf32>, vector<32x128xf32>, vector<8x128xf32> -> vector<8x128xf32>
    %563 = arith.addf %559, %562 : vector<8x128xf32>
    %564 = vector.extract_strided_slice %563 {offsets = [0, 0], sizes = [8, 32], strides = [1, 1]} : vector<8x128xf32> to vector<8x32xf32>
    %565 = arith.negf %564 : vector<8x32xf32>
    %566 = math.exp %565 : vector<8x32xf32>
    %cst_284 = arith.constant 1.000000e+00 : f32
    %567 = vector.broadcast %cst_284 : f32 to vector<8x32xf32>
    %568 = arith.addf %567, %566 : vector<8x32xf32>
    %569 = arith.divf %567, %568 : vector<8x32xf32>
    %570 = vector.extract_strided_slice %563 {offsets = [0, 32], sizes = [8, 32], strides = [1, 1]} : vector<8x128xf32> to vector<8x32xf32>
    %571 = arith.negf %570 : vector<8x32xf32>
    %572 = math.exp %571 : vector<8x32xf32>
    %cst_285 = arith.constant 1.000000e+00 : f32
    %573 = vector.broadcast %cst_285 : f32 to vector<8x32xf32>
    %574 = arith.addf %573, %572 : vector<8x32xf32>
    %575 = arith.divf %573, %574 : vector<8x32xf32>
    %576 = vector.extract_strided_slice %563 {offsets = [0, 64], sizes = [8, 32], strides = [1, 1]} : vector<8x128xf32> to vector<8x32xf32>
    %577 = math.tanh %576 : vector<8x32xf32>
    %578 = vector.extract_strided_slice %563 {offsets = [0, 96], sizes = [8, 32], strides = [1, 1]} : vector<8x128xf32> to vector<8x32xf32>
    %579 = arith.negf %578 : vector<8x32xf32>
    %580 = math.exp %579 : vector<8x32xf32>
    %cst_286 = arith.constant 1.000000e+00 : f32
    %581 = vector.broadcast %cst_286 : f32 to vector<8x32xf32>
    %582 = arith.addf %581, %580 : vector<8x32xf32>
    %583 = arith.divf %581, %582 : vector<8x32xf32>
    %c0_287 = arith.constant 0 : index
    %c0_288 = arith.constant 0 : index
    %584 = vector.load %arg12[%c0_287, %c0_288] : memref<8x32xf32, #tpu.memory_space<vmem>>, vector<8x32xf32>
    %585 = arith.mulf %575, %584 : vector<8x32xf32>
    %586 = arith.mulf %569, %577 : vector<8x32xf32>
    %587 = arith.addf %585, %586 : vector<8x32xf32>
    %588 = math.tanh %587 : vector<8x32xf32>
    %589 = arith.mulf %583, %588 : vector<8x32xf32>
    %c0_289 = arith.constant 0 : index
    %c0_290 = arith.constant 0 : index
    %590 = vector.load %arg12[%c0_289, %c0_290] : memref<8x32xf32, #tpu.memory_space<vmem>>, vector<8x32xf32>
    tpu.vector_store %arg12[%c0_289, %c0_290], %587 {strides = array<i32>} : memref<8x32xf32, #tpu.memory_space<vmem>>, vector<8x32xf32>,
    %c0_291 = arith.constant 0 : index
    %c0_292 = arith.constant 0 : index
    %591 = vector.load %arg11[%c0_291, %c0_292] : memref<8x32xf32, #tpu.memory_space<vmem>>, vector<8x32xf32>
    tpu.vector_store %arg11[%c0_291, %c0_292], %589 {strides = array<i32>} : memref<8x32xf32, #tpu.memory_space<vmem>>, vector<8x32xf32>,
    %592 = arith.index_cast %557 : i32 to index
    %c0_293 = arith.constant 0 : index
    %593 = vector.load %arg10[%592, %c0_293] : memref<64x32xf32, #tpu.memory_space<vmem>>, vector<8x32xf32>
    tpu.vector_store %arg10[%592, %c0_293], %589 {strides = array<i32>} : memref<64x32xf32, #tpu.memory_space<vmem>>, vector<8x32xf32>,
    %c7_i32_294 = arith.constant 7 : i32
    %c8_i32_295 = arith.constant 8 : i32
    %594 = arith.muli %c7_i32_294, %c8_i32_295 : i32
    %595 = tpu.assume_multiple %594, 8 : i32
    %596 = arith.index_cast %595 : i32 to index
    %c0_296 = arith.constant 0 : index
    %597 = vector.load %arg9[%596, %c0_296] : memref<64x128xf32, #tpu.memory_space<vmem>>, vector<8x128xf32>
    %c0_297 = arith.constant 0 : index
    %c0_298 = arith.constant 0 : index
    %598 = vector.load %arg11[%c0_297, %c0_298] : memref<8x32xf32, #tpu.memory_space<vmem>>, vector<8x32xf32>
    %c0_299 = arith.constant 0 : index
    %c0_300 = arith.constant 0 : index
    %599 = vector.load %arg6[%c0_299, %c0_300] : memref<32x128xf32, #tpu.memory_space<vmem>>, vector<32x128xf32>
    %cst_301 = arith.constant dense<0.000000e+00> : vector<8x128xf32>
    %600 = tpu.matmul %598, %599, %cst_301 {dimension_numbers = #tpu.dot_dimension_numbers<[1], [0], [0], [1], [0, 0, 1, 1], [], []>} : vector<8x32xf32>, vector<32x128xf32>, vector<8x128xf32> -> vector<8x128xf32>
    %601 = arith.addf %597, %600 : vector<8x128xf32>
    %602 = vector.extract_strided_slice %601 {offsets = [0, 0], sizes = [8, 32], strides = [1, 1]} : vector<8x128xf32> to vector<8x32xf32>
    %603 = arith.negf %602 : vector<8x32xf32>
    %604 = math.exp %603 : vector<8x32xf32>
    %cst_302 = arith.constant 1.000000e+00 : f32
    %605 = vector.broadcast %cst_302 : f32 to vector<8x32xf32>
    %606 = arith.addf %605, %604 : vector<8x32xf32>
    %607 = arith.divf %605, %606 : vector<8x32xf32>
    %608 = vector.extract_strided_slice %601 {offsets = [0, 32], sizes = [8, 32], strides = [1, 1]} : vector<8x128xf32> to vector<8x32xf32>
    %609 = arith.negf %608 : vector<8x32xf32>
    %610 = math.exp %609 : vector<8x32xf32>
    %cst_303 = arith.constant 1.000000e+00 : f32
    %611 = vector.broadcast %cst_303 : f32 to vector<8x32xf32>
    %612 = arith.addf %611, %610 : vector<8x32xf32>
    %613 = arith.divf %611, %612 : vector<8x32xf32>
    %614 = vector.extract_strided_slice %601 {offsets = [0, 64], sizes = [8, 32], strides = [1, 1]} : vector<8x128xf32> to vector<8x32xf32>
    %615 = math.tanh %614 : vector<8x32xf32>
    %616 = vector.extract_strided_slice %601 {offsets = [0, 96], sizes = [8, 32], strides = [1, 1]} : vector<8x128xf32> to vector<8x32xf32>
    %617 = arith.negf %616 : vector<8x32xf32>
    %618 = math.exp %617 : vector<8x32xf32>
    %cst_304 = arith.constant 1.000000e+00 : f32
    %619 = vector.broadcast %cst_304 : f32 to vector<8x32xf32>
    %620 = arith.addf %619, %618 : vector<8x32xf32>
    %621 = arith.divf %619, %620 : vector<8x32xf32>
    %c0_305 = arith.constant 0 : index
    %c0_306 = arith.constant 0 : index
    %622 = vector.load %arg12[%c0_305, %c0_306] : memref<8x32xf32, #tpu.memory_space<vmem>>, vector<8x32xf32>
    %623 = arith.mulf %613, %622 : vector<8x32xf32>
    %624 = arith.mulf %607, %615 : vector<8x32xf32>
    %625 = arith.addf %623, %624 : vector<8x32xf32>
    %626 = math.tanh %625 : vector<8x32xf32>
    %627 = arith.mulf %621, %626 : vector<8x32xf32>
    %c0_307 = arith.constant 0 : index
    %c0_308 = arith.constant 0 : index
    %628 = vector.load %arg12[%c0_307, %c0_308] : memref<8x32xf32, #tpu.memory_space<vmem>>, vector<8x32xf32>
    tpu.vector_store %arg12[%c0_307, %c0_308], %625 {strides = array<i32>} : memref<8x32xf32, #tpu.memory_space<vmem>>, vector<8x32xf32>,
    %c0_309 = arith.constant 0 : index
    %c0_310 = arith.constant 0 : index
    %629 = vector.load %arg11[%c0_309, %c0_310] : memref<8x32xf32, #tpu.memory_space<vmem>>, vector<8x32xf32>
    tpu.vector_store %arg11[%c0_309, %c0_310], %627 {strides = array<i32>} : memref<8x32xf32, #tpu.memory_space<vmem>>, vector<8x32xf32>,
    %630 = arith.index_cast %595 : i32 to index
    %c0_311 = arith.constant 0 : index
    %631 = vector.load %arg10[%630, %c0_311] : memref<64x32xf32, #tpu.memory_space<vmem>>, vector<8x32xf32>
    tpu.vector_store %arg10[%630, %c0_311], %627 {strides = array<i32>} : memref<64x32xf32, #tpu.memory_space<vmem>>, vector<8x32xf32>,
    %c8_i32_312 = arith.constant 8 : i32
    %c0_313 = arith.constant 0 : index
    %c0_314 = arith.constant 0 : index
    %632 = vector.load %arg10[%c0_313, %c0_314] : memref<64x32xf32, #tpu.memory_space<vmem>>, vector<64x32xf32>
    %c0_315 = arith.constant 0 : index
    %c32 = arith.constant 32 : index
    %633 = vector.load %arg8[%c0_315, %c32] : memref<64x64xf32, #tpu.memory_space<vmem>>, vector<64x32xf32>
    tpu.vector_store %arg8[%c0_315, %c32], %632 {strides = array<i32>} : memref<64x64xf32, #tpu.memory_space<vmem>>, vector<64x32xf32>,
    return
  }
  func.func @transform_0(%arg0: i32) -> (i32, i32) {
    %c0_i32 = arith.constant 0 : i32
    %c0_i32_0 = arith.constant 0 : i32
    %c0_i32_1 = arith.constant 0 : i32
    return %c0_i32, %c0_i32_0 : i32, i32
  }
  func.func @transform_1(%arg0: i32) -> (i32, i32) {
    %c0_i32 = arith.constant 0 : i32
    %c0_i32_0 = arith.constant 0 : i32
    %c0_i32_1 = arith.constant 0 : i32
    return %c0_i32, %c0_i32_0 : i32, i32
  }
  func.func @transform_2(%arg0: i32) -> (i32, i32) {
    %c0_i32 = arith.constant 0 : i32
    %c0_i32_0 = arith.constant 0 : i32
    %c0_i32_1 = arith.constant 0 : i32
    return %c0_i32, %c0_i32_0 : i32, i32
  }
  func.func @transform_3(%arg0: i32) -> (i32, i32) {
    %c0_i32 = arith.constant 0 : i32
    %c0_i32_0 = arith.constant 0 : i32
    %c0_i32_1 = arith.constant 0 : i32
    return %c0_i32, %c0_i32_0 : i32, i32
  }
  func.func @transform_4(%arg0: i32) -> (i32, i32) {
    %c0_i32 = arith.constant 0 : i32
    %c0_i32_0 = arith.constant 0 : i32
    %c0_i32_1 = arith.constant 0 : i32
    return %c0_i32, %c0_i32_0 : i32, i32
  }
  func.func @transform_5(%arg0: i32) -> (i32, i32) {
    %c0_i32 = arith.constant 0 : i32
    %c0_i32_0 = arith.constant 0 : i32
    %c0_i32_1 = arith.constant 0 : i32
    return %c0_i32, %c0_i32_0 : i32, i32
  }
  func.func @transform_6(%arg0: i32) -> (i32, i32) {
    %c0_i32 = arith.constant 0 : i32
    %c0_i32_0 = arith.constant 0 : i32
    %c0_i32_1 = arith.constant 0 : i32
    return %c0_i32, %c0_i32_0 : i32, i32
  }
  func.func @transform_7(%arg0: i32) -> (i32, i32) {
    %c0_i32 = arith.constant 0 : i32
    %c0_i32_0 = arith.constant 0 : i32
    %c0_i32_1 = arith.constant 0 : i32
    return %c0_i32, %c0_i32_0 : i32, i32
  }
}

</mosaic_0001>

<llo_original>
// kernel: tpu_custom_call.1
$region0: #{tpu_custom_call.1}
  #allocation0 [shape = 'u32[]', space=smem, size = 0x4, offset = 0x4, fixed_abs, tag = 'smem constant byte address 0x4 - core index']
  #allocation1 [shape = 'u32[144,128]{1,0:T(1,128)}', space=vmem, size = 0x12000, scoped, tag = 'internal scratch']
  #allocation2 [shape = 'f32[64,128]{1,0:T(8,128)}', space=vmem, size = 0x8000, scoped, tag = 'scratch operand']
  #allocation3 [shape = 'f32[64,32]{1,0:T(8,128)}', space=vmem, size = 0x8000, scoped, tag = 'scratch operand']
  #allocation4 [shape = 'f32[8,32]{1,0:T(8,128)}', space=vmem, size = 0x1000, scoped, tag = 'scratch operand']
  #allocation5 [shape = 'f32[8,32]{1,0:T(8,128)}', space=vmem, size = 0x1000, scoped, tag = 'scratch operand']
  %s0 = inlined_call_operand.vmem [shape: f32[64,10], index: 0, kind: input, shape index: {}]
  %s1 = inlined_call_operand.hbm [shape: f32[10,128], index: 1, kind: input, shape index: {}]
  %s2 = inlined_call_operand.vmem [shape: f32[32,128], index: 2, kind: input, shape index: {}]
  %s3 = inlined_call_operand.vmem [shape: f32[1,128], index: 3, kind: input, shape index: {}]
  %s4 = inlined_call_operand.vmem [shape: f32[32,128], index: 4, kind: input, shape index: {}]
  %s5 = inlined_call_operand.vmem [shape: f32[32,128], index: 5, kind: input, shape index: {}]
  %s6 = inlined_call_operand.vmem [shape: f32[1,128], index: 6, kind: input, shape index: {}]
  %s7 = inlined_call_operand.hbm [shape: f32[64,64], index: 7, kind: output, shape index: {}]
  %s8 = sld [smem:[#allocation0]]
  $region42: #{tpu_custom_call.1} parent=0
    _
  %s10 = ssub.s32 1, %s8
  %s11 = scalar_select 0, %s10, %s8
  $region1: #{tpu_custom_call.1} parent=0
    #allocation6 [shape = 'u8[8192]{0}', space=vmem, size = 0x2000, scoped, tag = 'input window, operand 1, single buffered']
    #allocation7 [shape = 's32[1]{0}', space=sflag, size = 0x4, scoped, tag = 'scoped memory for tpu_custom_call.1']
    #allocation8 [shape = 's32[1]{0}', space=sflag, size = 0x4, scoped, tag = 'scoped memory for tpu_custom_call.1']
    #allocation9 [shape = 'u8[32768]{0}', space=vmem, size = 0x8000, scoped, tag = 'output window, operand 0, single buffered']
    %12 = vsyncpa [#allocation7], 0
    %13 = vsyncpa [#allocation8], 0
    // Predicated region
    $region2: #{tpu_custom_call.1} parent=1 // pred_check
      _
    $region3: #{tpu_custom_call.1} parent=1 // pred_check_branch
      %15 = sbr.rel (0) target = $region5
    $region4: #{tpu_custom_call.1} parent=1 // pred_region
      _
    $region5: #{tpu_custom_call.1} parent=1 // pred_fallthru
      _
    // Predicated region
    $region6: #{tpu_custom_call.1} parent=1 // pred_check
      _
    $region7: #{tpu_custom_call.1} parent=1 // pred_check_branch
      %17 = sbr.rel (0) target = $region9
    $region8: #{tpu_custom_call.1} parent=1 // pred_region
      %s19 = ssub.s32 256, 256
      %20 = vsyncadd [#allocation7], %s19
      %s21 = sshll.u32 [#allocation6], 4
      %s22 = int_to_ptr.vmem [resolvable:$true] %s21
      %27 = dma.hbm_to_vmem [thread:$0]  %s1, 256, %s22, [#allocation7], 128, 128, 8
    $region9: #{tpu_custom_call.1} parent=1 // pred_fallthru
      _
    // Predicated region
    $region10: #{tpu_custom_call.1} parent=1 // pred_check
      _
    $region11: #{tpu_custom_call.1} parent=1 // pred_check_branch
      %29 = sbr.rel (0) target = $region13
    $region12: #{tpu_custom_call.1} parent=1 // pred_region
      _
    $region13: #{tpu_custom_call.1} parent=1 // pred_fallthru
      _
    // Predicated region
    $region14: #{tpu_custom_call.1} parent=1 // pred_check
      _
    $region15: #{tpu_custom_call.1} parent=1 // pred_check_branch
      %31 = sbr.rel (0) target = $region17
    $region16: #{tpu_custom_call.1} parent=1 // pred_region
      _
    $region17: #{tpu_custom_call.1} parent=1 // pred_fallthru
      _
    // Predicated region
    $region18: #{tpu_custom_call.1} parent=1 // pred_check
      _
    $region19: #{tpu_custom_call.1} parent=1 // pred_check_branch
      %33 = sbr.rel (0) target = $region21
    $region20: #{tpu_custom_call.1} parent=1 // pred_region
      _
    $region21: #{tpu_custom_call.1} parent=1 // pred_fallthru
      _
    // Predicated region
    $region22: #{tpu_custom_call.1} parent=1 // pred_check
      _
    $region23: #{tpu_custom_call.1} parent=1 // pred_check_branch
      %35 = sbr.rel (0) target = $region25
    $region24: #{tpu_custom_call.1} parent=1 // pred_region
      _
    $region25: #{tpu_custom_call.1} parent=1 // pred_fallthru
      _
    // Predicated region
    $region26: #{tpu_custom_call.1} parent=1 // pred_check
      _
    $region27: #{tpu_custom_call.1} parent=1 // pred_check_branch
      %37 = sbr.rel (0) target = $region29
    $region28: #{tpu_custom_call.1} parent=1 // pred_region
      _
    $region29: #{tpu_custom_call.1} parent=1 // pred_fallthru
      _
    // Predicated region
    $region30: #{tpu_custom_call.1} parent=1 // pred_check
      _
    $region31: #{tpu_custom_call.1} parent=1 // pred_check_branch
      %39 = sbr.rel (0) target = $region33
    $region32: #{tpu_custom_call.1} parent=1 // pred_region
      %40 = dma.done [#allocation7], 256
    $region33: #{tpu_custom_call.1} parent=1 // pred_fallthru
      _
    %v41 = vld [vmem:[%s0] sm:$0xff]
    %v42 = vld [vmem:[%s0 + $0x8] sm:$0xff]
    %v43 = vld [vmem:[%s0 + $0x10] sm:$0xff]
    %v44 = vld [vmem:[%s0 + $0x18] sm:$0xff]
    %v45 = vld [vmem:[%s0 + $0x20] sm:$0xff]
    %v46 = vld [vmem:[%s0 + $0x28] sm:$0xff]
    %v47 = vld [vmem:[%s0 + $0x30] sm:$0xff]
    %v48 = vld [vmem:[%s0 + $0x38] sm:$0xff]
    %v49 = vld [vmem:[#allocation6] sm:$0xff]
    %v50 = vld [vmem:[#allocation6 + $0x8] sm:$0x3]
    %v51 = vld [vmem:[%s3] sm:$0x1]
    %v53 = vlaneseq
    %v54 = vshrl.u32 %v53, 7
    %v55 = vsub.s32 0, %v54
    %v56 = vrot.slane %v51, %v55
    %vm58 = vcmask 80896
    %v60 = vsel %vm58, %v41, 0
    %v63 = vsel %vm58, %v42, 0
    %v66 = vsel %vm58, %v43, 0
    %v69 = vsel %vm58, %v44, 0
    %v72 = vsel %vm58, %v45, 0
    %v75 = vsel %vm58, %v46, 0
    %v78 = vsel %vm58, %v47, 0
    %v81 = vsel %vm58, %v48, 0
    %vm83 = vcmask 1041408
    %v85 = vsel %vm83, %v50, 0
    %87 = vmatprep.subr.mxu0 0.0
    %88 = vmatpush1.msra.mxu0 %v49
    %89 = vmatprep.subr.mxu0 0.0
    %90 = vmatpush1.msra.mxu0 %v85
    %91 = vmatprep.subr.mxu0 0.0
    %92 = vmatpush1.msra.mxu0 0.0
    %93 = vmatprep.subr.mxu0 0.0
    %94 = vmatpush1.msra.mxu0 0.0
    %95 = vmatprep.subr.mxu0 0.0
    %96 = vmatpush1.msra.mxu0 0.0
    %97 = vmatprep.subr.mxu0 0.0
    %98 = vmatpush1.msra.mxu0 0.0
    %99 = vmatprep.subr.mxu0 0.0
    %100 = vmatpush1.msra.mxu0 0.0
    %101 = vmatprep.subr.mxu0 0.0
    %102 = vmatpush1.msra.mxu0 0.0
    %103 = vmatprep.subr.mxu0 0.0
    %104 = vmatpush1.msra.mxu0 0.0
    %105 = vmatprep.subr.mxu0 0.0
    %106 = vmatpush1.msra.mxu0 0.0
    %107 = vmatprep.subr.mxu0 0.0
    %108 = vmatpush1.msra.mxu0 0.0
    %109 = vmatprep.subr.mxu0 0.0
    %110 = vmatpush1.msra.mxu0 0.0
    %111 = vmatprep.subr.mxu0 0.0
    %112 = vmatpush1.msra.mxu0 0.0
    %113 = vmatprep.subr.mxu0 0.0
    %114 = vmatpush1.msra.mxu0 0.0
    %115 = vmatprep.subr.mxu0 0.0
    %116 = vmatpush1.msra.mxu0 0.0
    %117 = vmatprep.subr.mxu0 0.0
    %118 = vmatpush1.msra.mxu0 0.0
    %119 = vmatprep.subr.mxu0 0.0
    %120 = vmatpush1.msra.mxu0 0.0
    %121 = vmatprep.subr.mxu0 0.0
    %122 = vmatpush1.msra.mxu0 0.0
    %123 = vmatprep.subr.mxu0 0.0
    %124 = vmatpush1.msra.mxu0 0.0
    %125 = vmatprep.subr.mxu0 0.0
    %126 = vmatpush1.msra.mxu0 0.0
    %127 = vmatprep.subr.mxu0 0.0
    %128 = vmatpush1.msra.mxu0 0.0
    %129 = vmatprep.subr.mxu0 0.0
    %130 = vmatpush1.msra.mxu0 0.0
    %131 = vmatprep.subr.mxu0 0.0
    %132 = vmatpush1.msra.mxu0 0.0
    %133 = vmatprep.subr.mxu0 0.0
    %134 = vmatpush1.msra.mxu0 0.0
    %135 = vmatprep.subr.mxu0 0.0
    %136 = vmatpush1.msra.mxu0 0.0
    %137 = vmatprep.subr.mxu0 0.0
    %138 = vmatpush1.msra.mxu0 0.0
    %139 = vmatprep.subr.mxu0 0.0
    %140 = vmatpush1.msra.mxu0 0.0
    %141 = vmatprep.subr.mxu0 0.0
    %142 = vmatpush1.msra.mxu0 0.0
    %143 = vmatprep.subr.mxu0 0.0
    %144 = vmatpush1.msra.mxu0 0.0
    %145 = vmatprep.subr.mxu0 0.0
    %146 = vmatpush1.msra.mxu0 0.0
    %147 = vmatprep.subr.mxu0 0.0
    %148 = vmatpush1.msra.mxu0 0.0
    %149 = vmatprep.subr.mxu0 0.0
    %150 = vmatpush1.msra.mxu0 0.0
    %151 = vmatprep.mubr.f32.mxu0 0.0
    %152 = vmatmul.mubr.f32.gmra.mrb[0].mxu0 %v60
    %v153 = vpop.f32.mrb[0].mxu0
    %v154 = vadd.f32 %v56, %v153
    %v155 = vpop.f32.mrb[0].mxu0
    %156 = vmatprep.mubr.f32.mxu0 0.0
    %157 = vmatmul.mubr.f32.gmra.mrb[0].mxu0 %v63
    %v158 = vpop.f32.mrb[0].mxu0
    %v159 = vadd.f32 %v56, %v158
    %v160 = vpop.f32.mrb[0].mxu0
    %161 = vmatprep.mubr.f32.mxu0 0.0
    %162 = vmatmul.mubr.f32.gmra.mrb[0].mxu0 %v66
    %v163 = vpop.f32.mrb[0].mxu0
    %v164 = vadd.f32 %v56, %v163
    %v165 = vpop.f32.mrb[0].mxu0
    %166 = vmatprep.mubr.f32.mxu0 0.0
    %167 = vmatmul.mubr.f32.gmra.mrb[0].mxu0 %v69
    %v168 = vpop.f32.mrb[0].mxu0
    %v169 = vadd.f32 %v56, %v168
    %v170 = vpop.f32.mrb[0].mxu0
    %171 = vmatprep.mubr.f32.mxu0 0.0
    %172 = vmatmul.mubr.f32.gmra.mrb[0].mxu0 %v72
    %v173 = vpop.f32.mrb[0].mxu0
    %v174 = vadd.f32 %v56, %v173
    %v175 = vpop.f32.mrb[0].mxu0
    %176 = vmatprep.mubr.f32.mxu0 0.0
    %177 = vmatmul.mubr.f32.gmra.mrb[0].mxu0 %v75
    %v178 = vpop.f32.mrb[0].mxu0
    %v179 = vadd.f32 %v56, %v178
    %v180 = vpop.f32.mrb[0].mxu0
    %181 = vmatprep.mubr.f32.mxu0 0.0
    %182 = vmatmul.mubr.f32.gmra.mrb[0].mxu0 %v78
    %v183 = vpop.f32.mrb[0].mxu0
    %v184 = vadd.f32 %v56, %v183
    %v185 = vpop.f32.mrb[0].mxu0
    %186 = vmatprep.mubr.f32.mxu0 0.0
    %187 = vmatmul.mubr.f32.gmra.mrb[0].mxu0 %v81
    %v188 = vpop.f32.mrb[0].mxu0
    %v189 = vadd.f32 %v56, %v188
    %v190 = vpop.f32.mrb[0].mxu0
    %191 = vdwg.mxu0
    %192 = vst [vmem:[#allocation2] sm:$0xff] %v154
    %193 = vst [vmem:[#allocation2 + $0x8] sm:$0xff] %v159
    %194 = vst [vmem:[#allocation2 + $0x10] sm:$0xff] %v164
    %195 = vst [vmem:[#allocation2 + $0x18] sm:$0xff] %v169
    %196 = vst [vmem:[#allocation2 + $0x20] sm:$0xff] %v174
    %197 = vst [vmem:[#allocation2 + $0x28] sm:$0xff] %v179
    %198 = vst [vmem:[#allocation2 + $0x30] sm:$0xff] %v184
    %199 = vst [vmem:[#allocation2 + $0x38] sm:$0xff] %v189
    %vm200 = vcmask 261120
    %201 = vst.msk [vmem:[#allocation4] sm:$0xff] %vm200, 0.0
    %202 = vst.msk [vmem:[#allocation5] sm:$0xff] %vm200, 0.0
    %v203 = vld [vmem:[#allocation2] sm:$0xff]
    %v204 = vld [vmem:[#allocation4] sm:$0xff]
    %v205 = vld [vmem:[%s2] sm:$0xff]
    %v206 = vld [vmem:[%s2 + $0x8] sm:$0xff]
    %v207 = vld [vmem:[%s2 + $0x10] sm:$0xff]
    %v208 = vld [vmem:[%s2 + $0x18] sm:$0xff]
    %v210 = vsel %vm200, %v204, 0
    %212 = vmatprep.subr.mxu0 0.0
    %213 = vmatpush1.msra.mxu0 %v205
    %214 = vmatprep.subr.mxu0 0.0
    %215 = vmatpush1.msra.mxu0 %v206
    %216 = vmatprep.subr.mxu0 0.0
    %217 = vmatpush1.msra.mxu0 %v207
    %218 = vmatprep.subr.mxu0 0.0
    %219 = vmatpush1.msra.mxu0 %v208
    %220 = vmatprep.subr.mxu0 0.0
    %221 = vmatpush1.msra.mxu0 0.0
    %222 = vmatprep.subr.mxu0 0.0
    %223 = vmatpush1.msra.mxu0 0.0
    %224 = vmatprep.subr.mxu0 0.0
    %225 = vmatpush1.msra.mxu0 0.0
    %226 = vmatprep.subr.mxu0 0.0
    %227 = vmatpush1.msra.mxu0 0.0
    %228 = vmatprep.subr.mxu0 0.0
    %229 = vmatpush1.msra.mxu0 0.0
    %230 = vmatprep.subr.mxu0 0.0
    %231 = vmatpush1.msra.mxu0 0.0
    %232 = vmatprep.subr.mxu0 0.0
    %233 = vmatpush1.msra.mxu0 0.0
    %234 = vmatprep.subr.mxu0 0.0
    %235 = vmatpush1.msra.mxu0 0.0
    %236 = vmatprep.subr.mxu0 0.0
    %237 = vmatpush1.msra.mxu0 0.0
    %238 = vmatprep.subr.mxu0 0.0
    %239 = vmatpush1.msra.mxu0 0.0
    %240 = vmatprep.subr.mxu0 0.0
    %241 = vmatpush1.msra.mxu0 0.0
    %242 = vmatprep.subr.mxu0 0.0
    %243 = vmatpush1.msra.mxu0 0.0
    %244 = vmatprep.subr.mxu0 0.0
    %245 = vmatpush1.msra.mxu0 0.0
    %246 = vmatprep.subr.mxu0 0.0
    %247 = vmatpush1.msra.mxu0 0.0
    %248 = vmatprep.subr.mxu0 0.0
    %249 = vmatpush1.msra.mxu0 0.0
    %250 = vmatprep.subr.mxu0 0.0
    %251 = vmatpush1.msra.mxu0 0.0
    %252 = vmatprep.subr.mxu0 0.0
    %253 = vmatpush1.msra.mxu0 0.0
    %254 = vmatprep.subr.mxu0 0.0
    %255 = vmatpush1.msra.mxu0 0.0
    %256 = vmatprep.subr.mxu0 0.0
    %257 = vmatpush1.msra.mxu0 0.0
    %258 = vmatprep.subr.mxu0 0.0
    %259 = vmatpush1.msra.mxu0 0.0
    %260 = vmatprep.subr.mxu0 0.0
    %261 = vmatpush1.msra.mxu0 0.0
    %262 = vmatprep.subr.mxu0 0.0
    %263 = vmatpush1.msra.mxu0 0.0
    %264 = vmatprep.subr.mxu0 0.0
    %265 = vmatpush1.msra.mxu0 0.0
    %266 = vmatprep.subr.mxu0 0.0
    %267 = vmatpush1.msra.mxu0 0.0
    %268 = vmatprep.subr.mxu0 0.0
    %269 = vmatpush1.msra.mxu0 0.0
    %270 = vmatprep.subr.mxu0 0.0
    %271 = vmatpush1.msra.mxu0 0.0
    %272 = vmatprep.subr.mxu0 0.0
    %273 = vmatpush1.msra.mxu0 0.0
    %274 = vmatprep.subr.mxu0 0.0
    %275 = vmatpush1.msra.mxu0 0.0
    %276 = vmatprep.mubr.f32.mxu0 0.0
    %277 = vmatmul.mubr.f32.gmra.mrb[0].mxu0 %v210
    %v278 = vpop.f32.mrb[0].mxu0
    %v279 = vadd.f32 0.0, %v278
    %v280 = vpop.f32.mrb[0].mxu0
    %281 = vdwg.mxu0
    %v282 = vadd.f32 %v203, %v279
    %v283 = vxor.u32 %v282, 2147483648
    %v284 = vmul.f32 %v283, 1.442695
    %v285 = vpow.pop %v284
    %v286 = vadd.f32 %v285, 1.0
    %v287 = vrcp.pop %v286
    %v288 = vmul.f32 1.0, %v287
    %v289 = vtanh.pop %v282
    %v290 = vld [vmem:[#allocation5] sm:$0xff]
    %292 = vrot.lane.b32.xlu0 %v290, 32
    %v293 = vpop.permute.xlu0 %292
    %v295 = vmul.f32 %v288, %v293
    %297 = vrot.lane.b32.xlu0 %v289, 64
    %v298 = vpop.permute.xlu0 %297
    %v300 = vmul.f32 %v288, %v298
    %302 = vrot.lane.b32.xlu0 %v300, 32
    %v303 = vpop.permute.xlu0 %302
    %v305 = vadd.f32 %v295, %v303
    %v306 = vtanh.pop %v305
    %308 = vrot.lane.b32.xlu0 %v306, 64
    %v309 = vpop.permute.xlu0 %308
    %v311 = vmul.f32 %v288, %v309
    %313 = vrot.lane.b32.xlu0 %v305, 96
    %v314 = vpop.permute.xlu0 %313
    %316 = vst.msk [vmem:[#allocation5] sm:$0xff] %vm200, %v314
    %318 = vrot.lane.b32.xlu0 %v311, 32
    %v319 = vpop.permute.xlu0 %318
    %321 = vst.msk [vmem:[#allocation4] sm:$0xff] %vm200, %v319
    %322 = vst.msk [vmem:[#allocation3] sm:$0xff] %vm200, %v319
    %s323 = scalar_lea.vmem [#allocation2], 8
    %v324 = vld [vmem:[%s323] sm:$0xff]
    %v325 = vld [vmem:[#allocation4] sm:$0xff]
    %v326 = vld [vmem:[%s2] sm:$0xff]
    %v327 = vld [vmem:[%s2 + $0x8] sm:$0xff]
    %v328 = vld [vmem:[%s2 + $0x10] sm:$0xff]
    %v329 = vld [vmem:[%s2 + $0x18] sm:$0xff]
    %v331 = vsel %vm200, %v325, 0
    %333 = vmatprep.subr.mxu0 0.0
    %334 = vmatpush1.msra.mxu0 %v326
    %335 = vmatprep.subr.mxu0 0.0
    %336 = vmatpush1.msra.mxu0 %v327
    %337 = vmatprep.subr.mxu0 0.0
    %338 = vmatpush1.msra.mxu0 %v328
    %339 = vmatprep.subr.mxu0 0.0
    %340 = vmatpush1.msra.mxu0 %v329
    %341 = vmatprep.subr.mxu0 0.0
    %342 = vmatpush1.msra.mxu0 0.0
    %343 = vmatprep.subr.mxu0 0.0
    %344 = vmatpush1.msra.mxu0 0.0
    %345 = vmatprep.subr.mxu0 0.0
    %346 = vmatpush1.msra.mxu0 0.0
    %347 = vmatprep.subr.mxu0 0.0
    %348 = vmatpush1.msra.mxu0 0.0
    %349 = vmatprep.subr.mxu0 0.0
    %350 = vmatpush1.msra.mxu0 0.0
    %351 = vmatprep.subr.mxu0 0.0
    %352 = vmatpush1.msra.mxu0 0.0
    %353 = vmatprep.subr.mxu0 0.0
    %354 = vmatpush1.msra.mxu0 0.0
    %355 = vmatprep.subr.mxu0 0.0
    %356 = vmatpush1.msra.mxu0 0.0
    %357 = vmatprep.subr.mxu0 0.0
    %358 = vmatpush1.msra.mxu0 0.0
    %359 = vmatprep.subr.mxu0 0.0
    %360 = vmatpush1.msra.mxu0 0.0
    %361 = vmatprep.subr.mxu0 0.0
    %362 = vmatpush1.msra.mxu0 0.0
    %363 = vmatprep.subr.mxu0 0.0
    %364 = vmatpush1.msra.mxu0 0.0
    %365 = vmatprep.subr.mxu0 0.0
    %366 = vmatpush1.msra.mxu0 0.0
    %367 = vmatprep.subr.mxu0 0.0
    %368 = vmatpush1.msra.mxu0 0.0
    %369 = vmatprep.subr.mxu0 0.0
    %370 = vmatpush1.msra.mxu0 0.0
    %371 = vmatprep.subr.mxu0 0.0
    %372 = vmatpush1.msra.mxu0 0.0
    %373 = vmatprep.subr.mxu0 0.0
    %374 = vmatpush1.msra.mxu0 0.0
    %375 = vmatprep.subr.mxu0 0.0
    %376 = vmatpush1.msra.mxu0 0.0
    %377 = vmatprep.subr.mxu0 0.0
    %378 = vmatpush1.msra.mxu0 0.0
    %379 = vmatprep.subr.mxu0 0.0
    %380 = vmatpush1.msra.mxu0 0.0
    %381 = vmatprep.subr.mxu0 0.0
    %382 = vmatpush1.msra.mxu0 0.0
    %383 = vmatprep.subr.mxu0 0.0
    %384 = vmatpush1.msra.mxu0 0.0
    %385 = vmatprep.subr.mxu0 0.0
    %386 = vmatpush1.msra.mxu0 0.0
    %387 = vmatprep.subr.mxu0 0.0
    %388 = vmatpush1.msra.mxu0 0.0
    %389 = vmatprep.subr.mxu0 0.0
    %390 = vmatpush1.msra.mxu0 0.0
    %391 = vmatprep.subr.mxu0 0.0
    %392 = vmatpush1.msra.mxu0 0.0
    %393 = vmatprep.subr.mxu0 0.0
    %394 = vmatpush1.msra.mxu0 0.0
    %395 = vmatprep.subr.mxu0 0.0
    %396 = vmatpush1.msra.mxu0 0.0
    %397 = vmatprep.mubr.f32.mxu0 0.0
    %398 = vmatmul.mubr.f32.gmra.mrb[0].mxu0 %v331
    %v399 = vpop.f32.mrb[0].mxu0
    %v400 = vadd.f32 0.0, %v399
    %v401 = vpop.f32.mrb[0].mxu0
    %402 = vdwg.mxu0
    %v403 = vadd.f32 %v324, %v400
    %v404 = vxor.u32 %v403, 2147483648
    %v405 = vmul.f32 %v404, 1.442695
    %v406 = vpow.pop %v405
    %v407 = vadd.f32 %v406, 1.0
    %v408 = vrcp.pop %v407
    %v409 = vmul.f32 1.0, %v408
    %v410 = vtanh.pop %v403
    %v411 = vld [vmem:[#allocation5] sm:$0xff]
    %413 = vrot.lane.b32.xlu0 %v411, 32
    %v414 = vpop.permute.xlu0 %413
    %v416 = vmul.f32 %v409, %v414
    %418 = vrot.lane.b32.xlu0 %v410, 64
    %v419 = vpop.permute.xlu0 %418
    %v421 = vmul.f32 %v409, %v419
    %423 = vrot.lane.b32.xlu0 %v421, 32
    %v424 = vpop.permute.xlu0 %423
    %v426 = vadd.f32 %v416, %v424
    %v427 = vtanh.pop %v426
    %429 = vrot.lane.b32.xlu0 %v427, 64
    %v430 = vpop.permute.xlu0 %429
    %v432 = vmul.f32 %v409, %v430
    %434 = vrot.lane.b32.xlu0 %v426, 96
    %v435 = vpop.permute.xlu0 %434
    %437 = vst.msk [vmem:[#allocation5] sm:$0xff] %vm200, %v435
    %439 = vrot.lane.b32.xlu0 %v432, 32
    %v440 = vpop.permute.xlu0 %439
    %442 = vst.msk [vmem:[#allocation4] sm:$0xff] %vm200, %v440
    %s443 = scalar_lea.vmem [#allocation3], 8
    %444 = vst.msk [vmem:[%s443] sm:$0xff] %vm200, %v440
    %s445 = scalar_lea.vmem [#allocation2], 16
    %v446 = vld [vmem:[%s445] sm:$0xff]
    %v447 = vld [vmem:[#allocation4] sm:$0xff]
    %v448 = vld [vmem:[%s2] sm:$0xff]
    %v449 = vld [vmem:[%s2 + $0x8] sm:$0xff]
    %v450 = vld [vmem:[%s2 + $0x10] sm:$0xff]
    %v451 = vld [vmem:[%s2 + $0x18] sm:$0xff]
    %v453 = vsel %vm200, %v447, 0
    %455 = vmatprep.subr.mxu0 0.0
    %456 = vmatpush1.msra.mxu0 %v448
    %457 = vmatprep.subr.mxu0 0.0
    %458 = vmatpush1.msra.mxu0 %v449
    %459 = vmatprep.subr.mxu0 0.0
    %460 = vmatpush1.msra.mxu0 %v450
    %461 = vmatprep.subr.mxu0 0.0
    %462 = vmatpush1.msra.mxu0 %v451
    %463 = vmatprep.subr.mxu0 0.0
    %464 = vmatpush1.msra.mxu0 0.0
    %465 = vmatprep.subr.mxu0 0.0
    %466 = vmatpush1.msra.mxu0 0.0
    %467 = vmatprep.subr.mxu0 0.0
    %468 = vmatpush1.msra.mxu0 0.0
    %469 = vmatprep.subr.mxu0 0.0
    %470 = vmatpush1.msra.mxu0 0.0
    %471 = vmatprep.subr.mxu0 0.0
    %472 = vmatpush1.msra.mxu0 0.0
    %473 = vmatprep.subr.mxu0 0.0
    %474 = vmatpush1.msra.mxu0 0.0
    %475 = vmatprep.subr.mxu0 0.0
    %476 = vmatpush1.msra.mxu0 0.0
    %477 = vmatprep.subr.mxu0 0.0
    %478 = vmatpush1.msra.mxu0 0.0
    %479 = vmatprep.subr.mxu0 0.0
    %480 = vmatpush1.msra.mxu0 0.0
    %481 = vmatprep.subr.mxu0 0.0
    %482 = vmatpush1.msra.mxu0 0.0
    %483 = vmatprep.subr.mxu0 0.0
    %484 = vmatpush1.msra.mxu0 0.0
    %485 = vmatprep.subr.mxu0 0.0
    %486 = vmatpush1.msra.mxu0 0.0
    %487 = vmatprep.subr.mxu0 0.0
    %488 = vmatpush1.msra.mxu0 0.0
    %489 = vmatprep.subr.mxu0 0.0
    %490 = vmatpush1.msra.mxu0 0.0
    %491 = vmatprep.subr.mxu0 0.0
    %492 = vmatpush1.msra.mxu0 0.0
    %493 = vmatprep.subr.mxu0 0.0
    %494 = vmatpush1.msra.mxu0 0.0
    %495 = vmatprep.subr.mxu0 0.0
    %496 = vmatpush1.msra.mxu0 0.0
    %497 = vmatprep.subr.mxu0 0.0
    %498 = vmatpush1.msra.mxu0 0.0
    %499 = vmatprep.subr.mxu0 0.0
    %500 = vmatpush1.msra.mxu0 0.0
    %501 = vmatprep.subr.mxu0 0.0
    %502 = vmatpush1.msra.mxu0 0.0
    %503 = vmatprep.subr.mxu0 0.0
    %504 = vmatpush1.msra.mxu0 0.0
    %505 = vmatprep.subr.mxu0 0.0
    %506 = vmatpush1.msra.mxu0 0.0
    %507 = vmatprep.subr.mxu0 0.0
    %508 = vmatpush1.msra.mxu0 0.0
    %509 = vmatprep.subr.mxu0 0.0
    %510 = vmatpush1.msra.mxu0 0.0
    %511 = vmatprep.subr.mxu0 0.0
    %512 = vmatpush1.msra.mxu0 0.0
    %513 = vmatprep.subr.mxu0 0.0
    %514 = vmatpush1.msra.mxu0 0.0
    %515 = vmatprep.subr.mxu0 0.0
    %516 = vmatpush1.msra.mxu0 0.0
    %517 = vmatprep.subr.mxu0 0.0
    %518 = vmatpush1.msra.mxu0 0.0
    %519 = vmatprep.mubr.f32.mxu0 0.0
    %520 = vmatmul.mubr.f32.gmra.mrb[0].mxu0 %v453
    %v521 = vpop.f32.mrb[0].mxu0
    %v522 = vadd.f32 0.0, %v521
    %v523 = vpop.f32.mrb[0].mxu0
    %524 = vdwg.mxu0
    %v525 = vadd.f32 %v446, %v522
    %v526 = vxor.u32 %v525, 2147483648
    %v527 = vmul.f32 %v526, 1.442695
    %v528 = vpow.pop %v527
    %v529 = vadd.f32 %v528, 1.0
    %v530 = vrcp.pop %v529
    %v531 = vmul.f32 1.0, %v530
    %v532 = vtanh.pop %v525
    %v533 = vld [vmem:[#allocation5] sm:$0xff]
    %535 = vrot.lane.b32.xlu0 %v533, 32
    %v536 = vpop.permute.xlu0 %535
    %v538 = vmul.f32 %v531, %v536
    %540 = vrot.lane.b32.xlu0 %v532, 64
    %v541 = vpop.permute.xlu0 %540
    %v543 = vmul.f32 %v531, %v541
    %545 = vrot.lane.b32.xlu0 %v543, 32
    %v546 = vpop.permute.xlu0 %545
    %v548 = vadd.f32 %v538, %v546
    %v549 = vtanh.pop %v548
    %551 = vrot.lane.b32.xlu0 %v549, 64
    %v552 = vpop.permute.xlu0 %551
    %v554 = vmul.f32 %v531, %v552
    %556 = vrot.lane.b32.xlu0 %v548, 96
    %v557 = vpop.permute.xlu0 %556
    %559 = vst.msk [vmem:[#allocation5] sm:$0xff] %vm200, %v557
    %561 = vrot.lane.b32.xlu0 %v554, 32
    %v562 = vpop.permute.xlu0 %561
    %564 = vst.msk [vmem:[#allocation4] sm:$0xff] %vm200, %v562
    %s565 = scalar_lea.vmem [#allocation3], 16
    %566 = vst.msk [vmem:[%s565] sm:$0xff] %vm200, %v562
    %s567 = scalar_lea.vmem [#allocation2], 24
    %v568 = vld [vmem:[%s567] sm:$0xff]
    %v569 = vld [vmem:[#allocation4] sm:$0xff]
    %v570 = vld [vmem:[%s2] sm:$0xff]
    %v571 = vld [vmem:[%s2 + $0x8] sm:$0xff]
    %v572 = vld [vmem:[%s2 + $0x10] sm:$0xff]
    %v573 = vld [vmem:[%s2 + $0x18] sm:$0xff]
    %v575 = vsel %vm200, %v569, 0
    %577 = vmatprep.subr.mxu0 0.0
    %578 = vmatpush1.msra.mxu0 %v570
    %579 = vmatprep.subr.mxu0 0.0
    %580 = vmatpush1.msra.mxu0 %v571
    %581 = vmatprep.subr.mxu0 0.0
    %582 = vmatpush1.msra.mxu0 %v572
    %583 = vmatprep.subr.mxu0 0.0
    %584 = vmatpush1.msra.mxu0 %v573
    %585 = vmatprep.subr.mxu0 0.0
    %586 = vmatpush1.msra.mxu0 0.0
    %587 = vmatprep.subr.mxu0 0.0
    %588 = vmatpush1.msra.mxu0 0.0
    %589 = vmatprep.subr.mxu0 0.0
    %590 = vmatpush1.msra.mxu0 0.0
    %591 = vmatprep.subr.mxu0 0.0
    %592 = vmatpush1.msra.mxu0 0.0
    %593 = vmatprep.subr.mxu0 0.0
    %594 = vmatpush1.msra.mxu0 0.0
    %595 = vmatprep.subr.mxu0 0.0
    %596 = vmatpush1.msra.mxu0 0.0
    %597 = vmatprep.subr.mxu0 0.0
    %598 = vmatpush1.msra.mxu0 0.0
    %599 = vmatprep.subr.mxu0 0.0
    %600 = vmatpush1.msra.mxu0 0.0
    %601 = vmatprep.subr.mxu0 0.0
    %602 = vmatpush1.msra.mxu0 0.0
    %603 = vmatprep.subr.mxu0 0.0
    %604 = vmatpush1.msra.mxu0 0.0
    %605 = vmatprep.subr.mxu0 0.0
    %606 = vmatpush1.msra.mxu0 0.0
    %607 = vmatprep.subr.mxu0 0.0
    %608 = vmatpush1.msra.mxu0 0.0
    %609 = vmatprep.subr.mxu0 0.0
    %610 = vmatpush1.msra.mxu0 0.0
    %611 = vmatprep.subr.mxu0 0.0
    %612 = vmatpush1.msra.mxu0 0.0
    %613 = vmatprep.subr.mxu0 0.0
    %614 = vmatpush1.msra.mxu0 0.0
    %615 = vmatprep.subr.mxu0 0.0
    %616 = vmatpush1.msra.mxu0 0.0
    %617 = vmatprep.subr.mxu0 0.0
    %618 = vmatpush1.msra.mxu0 0.0
    %619 = vmatprep.subr.mxu0 0.0
    %620 = vmatpush1.msra.mxu0 0.0
    %621 = vmatprep.subr.mxu0 0.0
    %622 = vmatpush1.msra.mxu0 0.0
    %623 = vmatprep.subr.mxu0 0.0
    %624 = vmatpush1.msra.mxu0 0.0
    %625 = vmatprep.subr.mxu0 0.0
    %626 = vmatpush1.msra.mxu0 0.0
    %627 = vmatprep.subr.mxu0 0.0
    %628 = vmatpush1.msra.mxu0 0.0
    %629 = vmatprep.subr.mxu0 0.0
    %630 = vmatpush1.msra.mxu0 0.0
    %631 = vmatprep.subr.mxu0 0.0
    %632 = vmatpush1.msra.mxu0 0.0
    %633 = vmatprep.subr.mxu0 0.0
    %634 = vmatpush1.msra.mxu0 0.0
    %635 = vmatprep.subr.mxu0 0.0
    %636 = vmatpush1.msra.mxu0 0.0
    %637 = vmatprep.subr.mxu0 0.0
    %638 = vmatpush1.msra.mxu0 0.0
    %639 = vmatprep.subr.mxu0 0.0
    %640 = vmatpush1.msra.mxu0 0.0
    %641 = vmatprep.mubr.f32.mxu0 0.0
    %642 = vmatmul.mubr.f32.gmra.mrb[0].mxu0 %v575
    %v643 = vpop.f32.mrb[0].mxu0
    %v644 = vadd.f32 0.0, %v643
    %v645 = vpop.f32.mrb[0].mxu0
    %646 = vdwg.mxu0
    %v647 = vadd.f32 %v568, %v644
    %v648 = vxor.u32 %v647, 2147483648
    %v649 = vmul.f32 %v648, 1.442695
    %v650 = vpow.pop %v649
    %v651 = vadd.f32 %v650, 1.0
    %v652 = vrcp.pop %v651
    %v653 = vmul.f32 1.0, %v652
    %v654 = vtanh.pop %v647
    %v655 = vld [vmem:[#allocation5] sm:$0xff]
    %657 = vrot.lane.b32.xlu0 %v655, 32
    %v658 = vpop.permute.xlu0 %657
    %v660 = vmul.f32 %v653, %v658
    %662 = vrot.lane.b32.xlu0 %v654, 64
    %v663 = vpop.permute.xlu0 %662
    %v665 = vmul.f32 %v653, %v663
    %667 = vrot.lane.b32.xlu0 %v665, 32
    %v668 = vpop.permute.xlu0 %667
    %v670 = vadd.f32 %v660, %v668
    %v671 = vtanh.pop %v670
    %673 = vrot.lane.b32.xlu0 %v671, 64
    %v674 = vpop.permute.xlu0 %673
    %v676 = vmul.f32 %v653, %v674
    %678 = vrot.lane.b32.xlu0 %v670, 96
    %v679 = vpop.permute.xlu0 %678
    %681 = vst.msk [vmem:[#allocation5] sm:$0xff] %vm200, %v679
    %683 = vrot.lane.b32.xlu0 %v676, 32
    %v684 = vpop.permute.xlu0 %683
    %686 = vst.msk [vmem:[#allocation4] sm:$0xff] %vm200, %v684
    %s687 = scalar_lea.vmem [#allocation3], 24
    %688 = vst.msk [vmem:[%s687] sm:$0xff] %vm200, %v684
    %s689 = scalar_lea.vmem [#allocation2], 32
    %v690 = vld [vmem:[%s689] sm:$0xff]
    %v691 = vld [vmem:[#allocation4] sm:$0xff]
    %v692 = vld [vmem:[%s2] sm:$0xff]
    %v693 = vld [vmem:[%s2 + $0x8] sm:$0xff]
    %v694 = vld [vmem:[%s2 + $0x10] sm:$0xff]
    %v695 = vld [vmem:[%s2 + $0x18] sm:$0xff]
    %v697 = vsel %vm200, %v691, 0
    %699 = vmatprep.subr.mxu0 0.0
    %700 = vmatpush1.msra.mxu0 %v692
    %701 = vmatprep.subr.mxu0 0.0
    %702 = vmatpush1.msra.mxu0 %v693
    %703 = vmatprep.subr.mxu0 0.0
    %704 = vmatpush1.msra.mxu0 %v694
    %705 = vmatprep.subr.mxu0 0.0
    %706 = vmatpush1.msra.mxu0 %v695
    %707 = vmatprep.subr.mxu0 0.0
    %708 = vmatpush1.msra.mxu0 0.0
    %709 = vmatprep.subr.mxu0 0.0
    %710 = vmatpush1.msra.mxu0 0.0
    %711 = vmatprep.subr.mxu0 0.0
    %712 = vmatpush1.msra.mxu0 0.0
    %713 = vmatprep.subr.mxu0 0.0
    %714 = vmatpush1.msra.mxu0 0.0
    %715 = vmatprep.subr.mxu0 0.0
    %716 = vmatpush1.msra.mxu0 0.0
    %717 = vmatprep.subr.mxu0 0.0
    %718 = vmatpush1.msra.mxu0 0.0
    %719 = vmatprep.subr.mxu0 0.0
    %720 = vmatpush1.msra.mxu0 0.0
    %721 = vmatprep.subr.mxu0 0.0
    %722 = vmatpush1.msra.mxu0 0.0
    %723 = vmatprep.subr.mxu0 0.0
    %724 = vmatpush1.msra.mxu0 0.0
    %725 = vmatprep.subr.mxu0 0.0
    %726 = vmatpush1.msra.mxu0 0.0
    %727 = vmatprep.subr.mxu0 0.0
    %728 = vmatpush1.msra.mxu0 0.0
    %729 = vmatprep.subr.mxu0 0.0
    %730 = vmatpush1.msra.mxu0 0.0
    %731 = vmatprep.subr.mxu0 0.0
    %732 = vmatpush1.msra.mxu0 0.0
    %733 = vmatprep.subr.mxu0 0.0
    %734 = vmatpush1.msra.mxu0 0.0
    %735 = vmatprep.subr.mxu0 0.0
    %736 = vmatpush1.msra.mxu0 0.0
    %737 = vmatprep.subr.mxu0 0.0
    %738 = vmatpush1.msra.mxu0 0.0
    %739 = vmatprep.subr.mxu0 0.0
    %740 = vmatpush1.msra.mxu0 0.0
    %741 = vmatprep.subr.mxu0 0.0
    %742 = vmatpush1.msra.mxu0 0.0
    %743 = vmatprep.subr.mxu0 0.0
    %744 = vmatpush1.msra.mxu0 0.0
    %745 = vmatprep.subr.mxu0 0.0
    %746 = vmatpush1.msra.mxu0 0.0
    %747 = vmatprep.subr.mxu0 0.0
    %748 = vmatpush1.msra.mxu0 0.0
    %749 = vmatprep.subr.mxu0 0.0
    %750 = vmatpush1.msra.mxu0 0.0
    %751 = vmatprep.subr.mxu0 0.0
    %752 = vmatpush1.msra.mxu0 0.0
    %753 = vmatprep.subr.mxu0 0.0
    %754 = vmatpush1.msra.mxu0 0.0
    %755 = vmatprep.subr.mxu0 0.0
    %756 = vmatpush1.msra.mxu0 0.0
    %757 = vmatprep.subr.mxu0 0.0
    %758 = vmatpush1.msra.mxu0 0.0
    %759 = vmatprep.subr.mxu0 0.0
    %760 = vmatpush1.msra.mxu0 0.0
    %761 = vmatprep.subr.mxu0 0.0
    %762 = vmatpush1.msra.mxu0 0.0
    %763 = vmatprep.mubr.f32.mxu0 0.0
    %764 = vmatmul.mubr.f32.gmra.mrb[0].mxu0 %v697
    %v765 = vpop.f32.mrb[0].mxu0
    %v766 = vadd.f32 0.0, %v765
    %v767 = vpop.f32.mrb[0].mxu0
    %768 = vdwg.mxu0
    %v769 = vadd.f32 %v690, %v766
    %v770 = vxor.u32 %v769, 2147483648
    %v771 = vmul.f32 %v770, 1.442695
    %v772 = vpow.pop %v771
    %v773 = vadd.f32 %v772, 1.0
    %v774 = vrcp.pop %v773
    %v775 = vmul.f32 1.0, %v774
    %v776 = vtanh.pop %v769
    %v777 = vld [vmem:[#allocation5] sm:$0xff]
    %779 = vrot.lane.b32.xlu0 %v777, 32
    %v780 = vpop.permute.xlu0 %779
    %v782 = vmul.f32 %v775, %v780
    %784 = vrot.lane.b32.xlu0 %v776, 64
    %v785 = vpop.permute.xlu0 %784
    %v787 = vmul.f32 %v775, %v785
    %789 = vrot.lane.b32.xlu0 %v787, 32
    %v790 = vpop.permute.xlu0 %789
    %v792 = vadd.f32 %v782, %v790
    %v793 = vtanh.pop %v792
    %795 = vrot.lane.b32.xlu0 %v793, 64
    %v796 = vpop.permute.xlu0 %795
    %v798 = vmul.f32 %v775, %v796
    %800 = vrot.lane.b32.xlu0 %v792, 96
    %v801 = vpop.permute.xlu0 %800
    %803 = vst.msk [vmem:[#allocation5] sm:$0xff] %vm200, %v801
    %805 = vrot.lane.b32.xlu0 %v798, 32
    %v806 = vpop.permute.xlu0 %805
    %808 = vst.msk [vmem:[#allocation4] sm:$0xff] %vm200, %v806
    %s809 = scalar_lea.vmem [#allocation3], 32
    %810 = vst.msk [vmem:[%s809] sm:$0xff] %vm200, %v806
    %s811 = scalar_lea.vmem [#allocation2], 40
    %v812 = vld [vmem:[%s811] sm:$0xff]
    %v813 = vld [vmem:[#allocation4] sm:$0xff]
    %v814 = vld [vmem:[%s2] sm:$0xff]
    %v815 = vld [vmem:[%s2 + $0x8] sm:$0xff]
    %v816 = vld [vmem:[%s2 + $0x10] sm:$0xff]
    %v817 = vld [vmem:[%s2 + $0x18] sm:$0xff]
    %v819 = vsel %vm200, %v813, 0
    %821 = vmatprep.subr.mxu0 0.0
    %822 = vmatpush1.msra.mxu0 %v814
    %823 = vmatprep.subr.mxu0 0.0
    %824 = vmatpush1.msra.mxu0 %v815
    %825 = vmatprep.subr.mxu0 0.0
    %826 = vmatpush1.msra.mxu0 %v816
    %827 = vmatprep.subr.mxu0 0.0
    %828 = vmatpush1.msra.mxu0 %v817
    %829 = vmatprep.subr.mxu0 0.0
    %830 = vmatpush1.msra.mxu0 0.0
    %831 = vmatprep.subr.mxu0 0.0
    %832 = vmatpush1.msra.mxu0 0.0
    %833 = vmatprep.subr.mxu0 0.0
    %834 = vmatpush1.msra.mxu0 0.0
    %835 = vmatprep.subr.mxu0 0.0
    %836 = vmatpush1.msra.mxu0 0.0
    %837 = vmatprep.subr.mxu0 0.0
    %838 = vmatpush1.msra.mxu0 0.0
    %839 = vmatprep.subr.mxu0 0.0
    %840 = vmatpush1.msra.mxu0 0.0
    %841 = vmatprep.subr.mxu0 0.0
    %842 = vmatpush1.msra.mxu0 0.0
    %843 = vmatprep.subr.mxu0 0.0
    %844 = vmatpush1.msra.mxu0 0.0
    %845 = vmatprep.subr.mxu0 0.0
    %846 = vmatpush1.msra.mxu0 0.0
    %847 = vmatprep.subr.mxu0 0.0
    %848 = vmatpush1.msra.mxu0 0.0
    %849 = vmatprep.subr.mxu0 0.0
    %850 = vmatpush1.msra.mxu0 0.0
    %851 = vmatprep.subr.mxu0 0.0
    %852 = vmatpush1.msra.mxu0 0.0
    %853 = vmatprep.subr.mxu0 0.0
    %854 = vmatpush1.msra.mxu0 0.0
    %855 = vmatprep.subr.mxu0 0.0
    %856 = vmatpush1.msra.mxu0 0.0
    %857 = vmatprep.subr.mxu0 0.0
    %858 = vmatpush1.msra.mxu0 0.0
    %859 = vmatprep.subr.mxu0 0.0
    %860 = vmatpush1.msra.mxu0 0.0
    %861 = vmatprep.subr.mxu0 0.0
    %862 = vmatpush1.msra.mxu0 0.0
    %863 = vmatprep.subr.mxu0 0.0
    %864 = vmatpush1.msra.mxu0 0.0
    %865 = vmatprep.subr.mxu0 0.0
    %866 = vmatpush1.msra.mxu0 0.0
    %867 = vmatprep.subr.mxu0 0.0
    %868 = vmatpush1.msra.mxu0 0.0
    %869 = vmatprep.subr.mxu0 0.0
    %870 = vmatpush1.msra.mxu0 0.0
    %871 = vmatprep.subr.mxu0 0.0
    %872 = vmatpush1.msra.mxu0 0.0
    %873 = vmatprep.subr.mxu0 0.0
    %874 = vmatpush1.msra.mxu0 0.0
    %875 = vmatprep.subr.mxu0 0.0
    %876 = vmatpush1.msra.mxu0 0.0
    %877 = vmatprep.subr.mxu0 0.0
    %878 = vmatpush1.msra.mxu0 0.0
    %879 = vmatprep.subr.mxu0 0.0
    %880 = vmatpush1.msra.mxu0 0.0
    %881 = vmatprep.subr.mxu0 0.0
    %882 = vmatpush1.msra.mxu0 0.0
    %883 = vmatprep.subr.mxu0 0.0
    %884 = vmatpush1.msra.mxu0 0.0
    %885 = vmatprep.mubr.f32.mxu0 0.0
    %886 = vmatmul.mubr.f32.gmra.mrb[0].mxu0 %v819
    %v887 = vpop.f32.mrb[0].mxu0
    %v888 = vadd.f32 0.0, %v887
    %v889 = vpop.f32.mrb[0].mxu0
    %890 = vdwg.mxu0
    %v891 = vadd.f32 %v812, %v888
    %v892 = vxor.u32 %v891, 2147483648
    %v893 = vmul.f32 %v892, 1.442695
    %v894 = vpow.pop %v893
    %v895 = vadd.f32 %v894, 1.0
    %v896 = vrcp.pop %v895
    %v897 = vmul.f32 1.0, %v896
    %v898 = vtanh.pop %v891
    %v899 = vld [vmem:[#allocation5] sm:$0xff]
    %901 = vrot.lane.b32.xlu0 %v899, 32
    %v902 = vpop.permute.xlu0 %901
    %v904 = vmul.f32 %v897, %v902
    %906 = vrot.lane.b32.xlu0 %v898, 64
    %v907 = vpop.permute.xlu0 %906
    %v909 = vmul.f32 %v897, %v907
    %911 = vrot.lane.b32.xlu0 %v909, 32
    %v912 = vpop.permute.xlu0 %911
    %v914 = vadd.f32 %v904, %v912
    %v915 = vtanh.pop %v914
    %917 = vrot.lane.b32.xlu0 %v915, 64
    %v918 = vpop.permute.xlu0 %917
    %v920 = vmul.f32 %v897, %v918
    %922 = vrot.lane.b32.xlu0 %v914, 96
    %v923 = vpop.permute.xlu0 %922
    %925 = vst.msk [vmem:[#allocation5] sm:$0xff] %vm200, %v923
    %927 = vrot.lane.b32.xlu0 %v920, 32
    %v928 = vpop.permute.xlu0 %927
    %930 = vst.msk [vmem:[#allocation4] sm:$0xff] %vm200, %v928
    %s931 = scalar_lea.vmem [#allocation3], 40
    %932 = vst.msk [vmem:[%s931] sm:$0xff] %vm200, %v928
    %s933 = scalar_lea.vmem [#allocation2], 48
    %v934 = vld [vmem:[%s933] sm:$0xff]
    %v935 = vld [vmem:[#allocation4] sm:$0xff]
    %v936 = vld [vmem:[%s2] sm:$0xff]
    %v937 = vld [vmem:[%s2 + $0x8] sm:$0xff]
    %v938 = vld [vmem:[%s2 + $0x10] sm:$0xff]
    %v939 = vld [vmem:[%s2 + $0x18] sm:$0xff]
    %v941 = vsel %vm200, %v935, 0
    %943 = vmatprep.subr.mxu0 0.0
    %944 = vmatpush1.msra.mxu0 %v936
    %945 = vmatprep.subr.mxu0 0.0
    %946 = vmatpush1.msra.mxu0 %v937
    %947 = vmatprep.subr.mxu0 0.0
    %948 = vmatpush1.msra.mxu0 %v938
    %949 = vmatprep.subr.mxu0 0.0
    %950 = vmatpush1.msra.mxu0 %v939
    %951 = vmatprep.subr.mxu0 0.0
    %952 = vmatpush1.msra.mxu0 0.0
    %953 = vmatprep.subr.mxu0 0.0
    %954 = vmatpush1.msra.mxu0 0.0
    %955 = vmatprep.subr.mxu0 0.0
    %956 = vmatpush1.msra.mxu0 0.0
    %957 = vmatprep.subr.mxu0 0.0
    %958 = vmatpush1.msra.mxu0 0.0
    %959 = vmatprep.subr.mxu0 0.0
    %960 = vmatpush1.msra.mxu0 0.0
    %961 = vmatprep.subr.mxu0 0.0
    %962 = vmatpush1.msra.mxu0 0.0
    %963 = vmatprep.subr.mxu0 0.0
    %964 = vmatpush1.msra.mxu0 0.0
    %965 = vmatprep.subr.mxu0 0.0
    %966 = vmatpush1.msra.mxu0 0.0
    %967 = vmatprep.subr.mxu0 0.0
    %968 = vmatpush1.msra.mxu0 0.0
    %969 = vmatprep.subr.mxu0 0.0
    %970 = vmatpush1.msra.mxu0 0.0
    %971 = vmatprep.subr.mxu0 0.0
    %972 = vmatpush1.msra.mxu0 0.0
    %973 = vmatprep.subr.mxu0 0.0
    %974 = vmatpush1.msra.mxu0 0.0
    %975 = vmatprep.subr.mxu0 0.0
    %976 = vmatpush1.msra.mxu0 0.0
    %977 = vmatprep.subr.mxu0 0.0
    %978 = vmatpush1.msra.mxu0 0.0
    %979 = vmatprep.subr.mxu0 0.0
    %980 = vmatpush1.msra.mxu0 0.0
    %981 = vmatprep.subr.mxu0 0.0
    %982 = vmatpush1.msra.mxu0 0.0
    %983 = vmatprep.subr.mxu0 0.0
    %984 = vmatpush1.msra.mxu0 0.0
    %985 = vmatprep.subr.mxu0 0.0
    %986 = vmatpush1.msra.mxu0 0.0
    %987 = vmatprep.subr.mxu0 0.0
    %988 = vmatpush1.msra.mxu0 0.0
    %989 = vmatprep.subr.mxu0 0.0
    %990 = vmatpush1.msra.mxu0 0.0
    %991 = vmatprep.subr.mxu0 0.0
    %992 = vmatpush1.msra.mxu0 0.0
    %993 = vmatprep.subr.mxu0 0.0
    %994 = vmatpush1.msra.mxu0 0.0
    %995 = vmatprep.subr.mxu0 0.0
    %996 = vmatpush1.msra.mxu0 0.0
    %997 = vmatprep.subr.mxu0 0.0
    %998 = vmatpush1.msra.mxu0 0.0
    %999 = vmatprep.subr.mxu0 0.0
    %1000 = vmatpush1.msra.mxu0 0.0
    %1001 = vmatprep.subr.mxu0 0.0
    %1002 = vmatpush1.msra.mxu0 0.0
    %1003 = vmatprep.subr.mxu0 0.0
    %1004 = vmatpush1.msra.mxu0 0.0
    %1005 = vmatprep.subr.mxu0 0.0
    %1006 = vmatpush1.msra.mxu0 0.0
    %1007 = vmatprep.mubr.f32.mxu0 0.0
    %1008 = vmatmul.mubr.f32.gmra.mrb[0].mxu0 %v941
    %v1009 = vpop.f32.mrb[0].mxu0
    %v1010 = vadd.f32 0.0, %v1009
    %v1011 = vpop.f32.mrb[0].mxu0
    %1012 = vdwg.mxu0
    %v1013 = vadd.f32 %v934, %v1010
    %v1014 = vxor.u32 %v1013, 2147483648
    %v1015 = vmul.f32 %v1014, 1.442695
    %v1016 = vpow.pop %v1015
    %v1017 = vadd.f32 %v1016, 1.0
    %v1018 = vrcp.pop %v1017
    %v1019 = vmul.f32 1.0, %v1018
    %v1020 = vtanh.pop %v1013
    %v1021 = vld [vmem:[#allocation5] sm:$0xff]
    %1023 = vrot.lane.b32.xlu0 %v1021, 32
    %v1024 = vpop.permute.xlu0 %1023
    %v1026 = vmul.f32 %v1019, %v1024
    %1028 = vrot.lane.b32.xlu0 %v1020, 64
    %v1029 = vpop.permute.xlu0 %1028
    %v1031 = vmul.f32 %v1019, %v1029
    %1033 = vrot.lane.b32.xlu0 %v1031, 32
    %v1034 = vpop.permute.xlu0 %1033
    %v1036 = vadd.f32 %v1026, %v1034
    %v1037 = vtanh.pop %v1036
    %1039 = vrot.lane.b32.xlu0 %v1037, 64
    %v1040 = vpop.permute.xlu0 %1039
    %v1042 = vmul.f32 %v1019, %v1040
    %1044 = vrot.lane.b32.xlu0 %v1036, 96
    %v1045 = vpop.permute.xlu0 %1044
    %1047 = vst.msk [vmem:[#allocation5] sm:$0xff] %vm200, %v1045
    %1049 = vrot.lane.b32.xlu0 %v1042, 32
    %v1050 = vpop.permute.xlu0 %1049
    %1052 = vst.msk [vmem:[#allocation4] sm:$0xff] %vm200, %v1050
    %s1053 = scalar_lea.vmem [#allocation3], 48
    %1054 = vst.msk [vmem:[%s1053] sm:$0xff] %vm200, %v1050
    %s1055 = scalar_lea.vmem [#allocation2], 56
    %v1056 = vld [vmem:[%s1055] sm:$0xff]
    %v1057 = vld [vmem:[#allocation4] sm:$0xff]
    %v1058 = vld [vmem:[%s2] sm:$0xff]
    %v1059 = vld [vmem:[%s2 + $0x8] sm:$0xff]
    %v1060 = vld [vmem:[%s2 + $0x10] sm:$0xff]
    %v1061 = vld [vmem:[%s2 + $0x18] sm:$0xff]
    %v1063 = vsel %vm200, %v1057, 0
    %1065 = vmatprep.subr.mxu0 0.0
    %1066 = vmatpush1.msra.mxu0 %v1058
    %1067 = vmatprep.subr.mxu0 0.0
    %1068 = vmatpush1.msra.mxu0 %v1059
    %1069 = vmatprep.subr.mxu0 0.0
    %1070 = vmatpush1.msra.mxu0 %v1060
    %1071 = vmatprep.subr.mxu0 0.0
    %1072 = vmatpush1.msra.mxu0 %v1061
    %1073 = vmatprep.subr.mxu0 0.0
    %1074 = vmatpush1.msra.mxu0 0.0
    %1075 = vmatprep.subr.mxu0 0.0
    %1076 = vmatpush1.msra.mxu0 0.0
    %1077 = vmatprep.subr.mxu0 0.0
    %1078 = vmatpush1.msra.mxu0 0.0
    %1079 = vmatprep.subr.mxu0 0.0
    %1080 = vmatpush1.msra.mxu0 0.0
    %1081 = vmatprep.subr.mxu0 0.0
    %1082 = vmatpush1.msra.mxu0 0.0
    %1083 = vmatprep.subr.mxu0 0.0
    %1084 = vmatpush1.msra.mxu0 0.0
    %1085 = vmatprep.subr.mxu0 0.0
    %1086 = vmatpush1.msra.mxu0 0.0
    %1087 = vmatprep.subr.mxu0 0.0
    %1088 = vmatpush1.msra.mxu0 0.0
    %1089 = vmatprep.subr.mxu0 0.0
    %1090 = vmatpush1.msra.mxu0 0.0
    %1091 = vmatprep.subr.mxu0 0.0
    %1092 = vmatpush1.msra.mxu0 0.0
    %1093 = vmatprep.subr.mxu0 0.0
    %1094 = vmatpush1.msra.mxu0 0.0
    %1095 = vmatprep.subr.mxu0 0.0
    %1096 = vmatpush1.msra.mxu0 0.0
    %1097 = vmatprep.subr.mxu0 0.0
    %1098 = vmatpush1.msra.mxu0 0.0
    %1099 = vmatprep.subr.mxu0 0.0
    %1100 = vmatpush1.msra.mxu0 0.0
    %1101 = vmatprep.subr.mxu0 0.0
    %1102 = vmatpush1.msra.mxu0 0.0
    %1103 = vmatprep.subr.mxu0 0.0
    %1104 = vmatpush1.msra.mxu0 0.0
    %1105 = vmatprep.subr.mxu0 0.0
    %1106 = vmatpush1.msra.mxu0 0.0
    %1107 = vmatprep.subr.mxu0 0.0
    %1108 = vmatpush1.msra.mxu0 0.0
    %1109 = vmatprep.subr.mxu0 0.0
    %1110 = vmatpush1.msra.mxu0 0.0
    %1111 = vmatprep.subr.mxu0 0.0
    %1112 = vmatpush1.msra.mxu0 0.0
    %1113 = vmatprep.subr.mxu0 0.0
    %1114 = vmatpush1.msra.mxu0 0.0
    %1115 = vmatprep.subr.mxu0 0.0
    %1116 = vmatpush1.msra.mxu0 0.0
    %1117 = vmatprep.subr.mxu0 0.0
    %1118 = vmatpush1.msra.mxu0 0.0
    %1119 = vmatprep.subr.mxu0 0.0
    %1120 = vmatpush1.msra.mxu0 0.0
    %1121 = vmatprep.subr.mxu0 0.0
    %1122 = vmatpush1.msra.mxu0 0.0
    %1123 = vmatprep.subr.mxu0 0.0
    %1124 = vmatpush1.msra.mxu0 0.0
    %1125 = vmatprep.subr.mxu0 0.0
    %1126 = vmatpush1.msra.mxu0 0.0
    %1127 = vmatprep.subr.mxu0 0.0
    %1128 = vmatpush1.msra.mxu0 0.0
    %1129 = vmatprep.mubr.f32.mxu0 0.0
    %1130 = vmatmul.mubr.f32.gmra.mrb[0].mxu0 %v1063
    %v1131 = vpop.f32.mrb[0].mxu0
    %v1132 = vadd.f32 0.0, %v1131
    %v1133 = vpop.f32.mrb[0].mxu0
    %1134 = vdwg.mxu0
    %v1135 = vadd.f32 %v1056, %v1132
    %v1136 = vxor.u32 %v1135, 2147483648
    %v1137 = vmul.f32 %v1136, 1.442695
    %v1138 = vpow.pop %v1137
    %v1139 = vadd.f32 %v1138, 1.0
    %v1140 = vrcp.pop %v1139
    %v1141 = vmul.f32 1.0, %v1140
    %v1142 = vtanh.pop %v1135
    %v1143 = vld [vmem:[#allocation5] sm:$0xff]
    %1145 = vrot.lane.b32.xlu0 %v1143, 32
    %v1146 = vpop.permute.xlu0 %1145
    %v1148 = vmul.f32 %v1141, %v1146
    %1150 = vrot.lane.b32.xlu0 %v1142, 64
    %v1151 = vpop.permute.xlu0 %1150
    %v1153 = vmul.f32 %v1141, %v1151
    %1155 = vrot.lane.b32.xlu0 %v1153, 32
    %v1156 = vpop.permute.xlu0 %1155
    %v1158 = vadd.f32 %v1148, %v1156
    %v1159 = vtanh.pop %v1158
    %1161 = vrot.lane.b32.xlu0 %v1159, 64
    %v1162 = vpop.permute.xlu0 %1161
    %v1164 = vmul.f32 %v1141, %v1162
    %1166 = vrot.lane.b32.xlu0 %v1158, 96
    %v1167 = vpop.permute.xlu0 %1166
    %1169 = vst.msk [vmem:[#allocation5] sm:$0xff] %vm200, %v1167
    %1171 = vrot.lane.b32.xlu0 %v1164, 32
    %v1172 = vpop.permute.xlu0 %1171
    %1174 = vst.msk [vmem:[#allocation4] sm:$0xff] %vm200, %v1172
    %s1175 = scalar_lea.vmem [#allocation3], 56
    %1176 = vst.msk [vmem:[%s1175] sm:$0xff] %vm200, %v1172
    %v1177 = vld [vmem:[#allocation3] sm:$0xff]
    %v1178 = vld [vmem:[#allocation3 + $0x8] sm:$0xff]
    %v1179 = vld [vmem:[#allocation3 + $0x10] sm:$0xff]
    %v1180 = vld [vmem:[#allocation3 + $0x18] sm:$0xff]
    %v1181 = vld [vmem:[#allocation3 + $0x20] sm:$0xff]
    %v1182 = vld [vmem:[#allocation3 + $0x28] sm:$0xff]
    %v1183 = vld [vmem:[#allocation3 + $0x30] sm:$0xff]
    %v1184 = vld [vmem:[#allocation3 + $0x38] sm:$0xff]
    %1185 = vst.msk [vmem:[#allocation9] sm:$0xff] %vm200, %v1177
    %1186 = vst.msk [vmem:[#allocation9 + $0x8] sm:$0xff] %vm200, %v1178
    %1187 = vst.msk [vmem:[#allocation9 + $0x10] sm:$0xff] %vm200, %v1179
    %1188 = vst.msk [vmem:[#allocation9 + $0x18] sm:$0xff] %vm200, %v1180
    %1189 = vst.msk [vmem:[#allocation9 + $0x20] sm:$0xff] %vm200, %v1181
    %1190 = vst.msk [vmem:[#allocation9 + $0x28] sm:$0xff] %vm200, %v1182
    %1191 = vst.msk [vmem:[#allocation9 + $0x30] sm:$0xff] %vm200, %v1183
    %1192 = vst.msk [vmem:[#allocation9 + $0x38] sm:$0xff] %vm200, %v1184
    %v1193 = vld [vmem:[#allocation3] sm:$0xff]
    %v1194 = vld [vmem:[#allocation3 + $0x8] sm:$0xff]
    %v1195 = vld [vmem:[#allocation3 + $0x10] sm:$0xff]
    %v1196 = vld [vmem:[#allocation3 + $0x18] sm:$0xff]
    %v1197 = vld [vmem:[#allocation3 + $0x20] sm:$0xff]
    %v1198 = vld [vmem:[#allocation3 + $0x28] sm:$0xff]
    %v1199 = vld [vmem:[#allocation3 + $0x30] sm:$0xff]
    %v1200 = vld [vmem:[#allocation3 + $0x38] sm:$0xff]
    %v1201 = vld [vmem:[%s4] sm:$0xff]
    %v1202 = vld [vmem:[%s4 + $0x8] sm:$0xff]
    %v1203 = vld [vmem:[%s4 + $0x10] sm:$0xff]
    %v1204 = vld [vmem:[%s4 + $0x18] sm:$0xff]
    %v1205 = vld [vmem:[%s6] sm:$0x1]
    %v1207 = vlaneseq
    %v1208 = vshrl.u32 %v1207, 7
    %v1209 = vsub.s32 0, %v1208
    %v1210 = vrot.slane %v1205, %v1209
    %v1213 = vsel %vm200, %v1193, 0
    %v1216 = vsel %vm200, %v1194, 0
    %v1219 = vsel %vm200, %v1195, 0
    %v1222 = vsel %vm200, %v1196, 0
    %v1225 = vsel %vm200, %v1197, 0
    %v1228 = vsel %vm200, %v1198, 0
    %v1231 = vsel %vm200, %v1199, 0
    %v1234 = vsel %vm200, %v1200, 0
    %1236 = vmatprep.subr.mxu0 0.0
    %1237 = vmatpush1.msra.mxu0 %v1201
    %1238 = vmatprep.subr.mxu0 0.0
    %1239 = vmatpush1.msra.mxu0 %v1202
    %1240 = vmatprep.subr.mxu0 0.0
    %1241 = vmatpush1.msra.mxu0 %v1203
    %1242 = vmatprep.subr.mxu0 0.0
    %1243 = vmatpush1.msra.mxu0 %v1204
    %1244 = vmatprep.subr.mxu0 0.0
    %1245 = vmatpush1.msra.mxu0 0.0
    %1246 = vmatprep.subr.mxu0 0.0
    %1247 = vmatpush1.msra.mxu0 0.0
    %1248 = vmatprep.subr.mxu0 0.0
    %1249 = vmatpush1.msra.mxu0 0.0
    %1250 = vmatprep.subr.mxu0 0.0
    %1251 = vmatpush1.msra.mxu0 0.0
    %1252 = vmatprep.subr.mxu0 0.0
    %1253 = vmatpush1.msra.mxu0 0.0
    %1254 = vmatprep.subr.mxu0 0.0
    %1255 = vmatpush1.msra.mxu0 0.0
    %1256 = vmatprep.subr.mxu0 0.0
    %1257 = vmatpush1.msra.mxu0 0.0
    %1258 = vmatprep.subr.mxu0 0.0
    %1259 = vmatpush1.msra.mxu0 0.0
    %1260 = vmatprep.subr.mxu0 0.0
    %1261 = vmatpush1.msra.mxu0 0.0
    %1262 = vmatprep.subr.mxu0 0.0
    %1263 = vmatpush1.msra.mxu0 0.0
    %1264 = vmatprep.subr.mxu0 0.0
    %1265 = vmatpush1.msra.mxu0 0.0
    %1266 = vmatprep.subr.mxu0 0.0
    %1267 = vmatpush1.msra.mxu0 0.0
    %1268 = vmatprep.subr.mxu0 0.0
    %1269 = vmatpush1.msra.mxu0 0.0
    %1270 = vmatprep.subr.mxu0 0.0
    %1271 = vmatpush1.msra.mxu0 0.0
    %1272 = vmatprep.subr.mxu0 0.0
    %1273 = vmatpush1.msra.mxu0 0.0
    %1274 = vmatprep.subr.mxu0 0.0
    %1275 = vmatpush1.msra.mxu0 0.0
    %1276 = vmatprep.subr.mxu0 0.0
    %1277 = vmatpush1.msra.mxu0 0.0
    %1278 = vmatprep.subr.mxu0 0.0
    %1279 = vmatpush1.msra.mxu0 0.0
    %1280 = vmatprep.subr.mxu0 0.0
    %1281 = vmatpush1.msra.mxu0 0.0
    %1282 = vmatprep.subr.mxu0 0.0
    %1283 = vmatpush1.msra.mxu0 0.0
    %1284 = vmatprep.subr.mxu0 0.0
    %1285 = vmatpush1.msra.mxu0 0.0
    %1286 = vmatprep.subr.mxu0 0.0
    %1287 = vmatpush1.msra.mxu0 0.0
    %1288 = vmatprep.subr.mxu0 0.0
    %1289 = vmatpush1.msra.mxu0 0.0
    %1290 = vmatprep.subr.mxu0 0.0
    %1291 = vmatpush1.msra.mxu0 0.0
    %1292 = vmatprep.subr.mxu0 0.0
    %1293 = vmatpush1.msra.mxu0 0.0
    %1294 = vmatprep.subr.mxu0 0.0
    %1295 = vmatpush1.msra.mxu0 0.0
    %1296 = vmatprep.subr.mxu0 0.0
    %1297 = vmatpush1.msra.mxu0 0.0
    %1298 = vmatprep.subr.mxu0 0.0
    %1299 = vmatpush1.msra.mxu0 0.0
    %1300 = vmatprep.mubr.f32.mxu0 0.0
    %1301 = vmatmul.mubr.f32.gmra.mrb[0].mxu0 %v1213
    %v1302 = vpop.f32.mrb[0].mxu0
    %v1303 = vadd.f32 %v1210, %v1302
    %v1304 = vpop.f32.mrb[0].mxu0
    %1305 = vmatprep.mubr.f32.mxu0 0.0
    %1306 = vmatmul.mubr.f32.gmra.mrb[0].mxu0 %v1216
    %v1307 = vpop.f32.mrb[0].mxu0
    %v1308 = vadd.f32 %v1210, %v1307
    %v1309 = vpop.f32.mrb[0].mxu0
    %1310 = vmatprep.mubr.f32.mxu0 0.0
    %1311 = vmatmul.mubr.f32.gmra.mrb[0].mxu0 %v1219
    %v1312 = vpop.f32.mrb[0].mxu0
    %v1313 = vadd.f32 %v1210, %v1312
    %v1314 = vpop.f32.mrb[0].mxu0
    %1315 = vmatprep.mubr.f32.mxu0 0.0
    %1316 = vmatmul.mubr.f32.gmra.mrb[0].mxu0 %v1222
    %v1317 = vpop.f32.mrb[0].mxu0
    %v1318 = vadd.f32 %v1210, %v1317
    %v1319 = vpop.f32.mrb[0].mxu0
    %1320 = vmatprep.mubr.f32.mxu0 0.0
    %1321 = vmatmul.mubr.f32.gmra.mrb[0].mxu0 %v1225
    %v1322 = vpop.f32.mrb[0].mxu0
    %v1323 = vadd.f32 %v1210, %v1322
    %v1324 = vpop.f32.mrb[0].mxu0
    %1325 = vmatprep.mubr.f32.mxu0 0.0
    %1326 = vmatmul.mubr.f32.gmra.mrb[0].mxu0 %v1228
    %v1327 = vpop.f32.mrb[0].mxu0
    %v1328 = vadd.f32 %v1210, %v1327
    %v1329 = vpop.f32.mrb[0].mxu0
    %1330 = vmatprep.mubr.f32.mxu0 0.0
    %1331 = vmatmul.mubr.f32.gmra.mrb[0].mxu0 %v1231
    %v1332 = vpop.f32.mrb[0].mxu0
    %v1333 = vadd.f32 %v1210, %v1332
    %v1334 = vpop.f32.mrb[0].mxu0
    %1335 = vmatprep.mubr.f32.mxu0 0.0
    %1336 = vmatmul.mubr.f32.gmra.mrb[0].mxu0 %v1234
    %v1337 = vpop.f32.mrb[0].mxu0
    %v1338 = vadd.f32 %v1210, %v1337
    %v1339 = vpop.f32.mrb[0].mxu0
    %1340 = vdwg.mxu0
    %1341 = vst [vmem:[#allocation2] sm:$0xff] %v1303
    %1342 = vst [vmem:[#allocation2 + $0x8] sm:$0xff] %v1308
    %1343 = vst [vmem:[#allocation2 + $0x10] sm:$0xff] %v1313
    %1344 = vst [vmem:[#allocation2 + $0x18] sm:$0xff] %v1318
    %1345 = vst [vmem:[#allocation2 + $0x20] sm:$0xff] %v1323
    %1346 = vst [vmem:[#allocation2 + $0x28] sm:$0xff] %v1328
    %1347 = vst [vmem:[#allocation2 + $0x30] sm:$0xff] %v1333
    %1348 = vst [vmem:[#allocation2 + $0x38] sm:$0xff] %v1338
    %1349 = vst.msk [vmem:[#allocation4] sm:$0xff] %vm200, 0.0
    %1350 = vst.msk [vmem:[#allocation5] sm:$0xff] %vm200, 0.0
    %v1351 = vld [vmem:[#allocation2] sm:$0xff]
    %v1352 = vld [vmem:[#allocation4] sm:$0xff]
    %v1353 = vld [vmem:[%s5] sm:$0xff]
    %v1354 = vld [vmem:[%s5 + $0x8] sm:$0xff]
    %v1355 = vld [vmem:[%s5 + $0x10] sm:$0xff]
    %v1356 = vld [vmem:[%s5 + $0x18] sm:$0xff]
    %v1358 = vsel %vm200, %v1352, 0
    %1360 = vmatprep.subr.mxu0 0.0
    %1361 = vmatpush1.msra.mxu0 %v1353
    %1362 = vmatprep.subr.mxu0 0.0
    %1363 = vmatpush1.msra.mxu0 %v1354
    %1364 = vmatprep.subr.mxu0 0.0
    %1365 = vmatpush1.msra.mxu0 %v1355
    %1366 = vmatprep.subr.mxu0 0.0
    %1367 = vmatpush1.msra.mxu0 %v1356
    %1368 = vmatprep.subr.mxu0 0.0
    %1369 = vmatpush1.msra.mxu0 0.0
    %1370 = vmatprep.subr.mxu0 0.0
    %1371 = vmatpush1.msra.mxu0 0.0
    %1372 = vmatprep.subr.mxu0 0.0
    %1373 = vmatpush1.msra.mxu0 0.0
    %1374 = vmatprep.subr.mxu0 0.0
    %1375 = vmatpush1.msra.mxu0 0.0
    %1376 = vmatprep.subr.mxu0 0.0
    %1377 = vmatpush1.msra.mxu0 0.0
    %1378 = vmatprep.subr.mxu0 0.0
    %1379 = vmatpush1.msra.mxu0 0.0
    %1380 = vmatprep.subr.mxu0 0.0
    %1381 = vmatpush1.msra.mxu0 0.0
    %1382 = vmatprep.subr.mxu0 0.0
    %1383 = vmatpush1.msra.mxu0 0.0
    %1384 = vmatprep.subr.mxu0 0.0
    %1385 = vmatpush1.msra.mxu0 0.0
    %1386 = vmatprep.subr.mxu0 0.0
    %1387 = vmatpush1.msra.mxu0 0.0
    %1388 = vmatprep.subr.mxu0 0.0
    %1389 = vmatpush1.msra.mxu0 0.0
    %1390 = vmatprep.subr.mxu0 0.0
    %1391 = vmatpush1.msra.mxu0 0.0
    %1392 = vmatprep.subr.mxu0 0.0
    %1393 = vmatpush1.msra.mxu0 0.0
    %1394 = vmatprep.subr.mxu0 0.0
    %1395 = vmatpush1.msra.mxu0 0.0
    %1396 = vmatprep.subr.mxu0 0.0
    %1397 = vmatpush1.msra.mxu0 0.0
    %1398 = vmatprep.subr.mxu0 0.0
    %1399 = vmatpush1.msra.mxu0 0.0
    %1400 = vmatprep.subr.mxu0 0.0
    %1401 = vmatpush1.msra.mxu0 0.0
    %1402 = vmatprep.subr.mxu0 0.0
    %1403 = vmatpush1.msra.mxu0 0.0
    %1404 = vmatprep.subr.mxu0 0.0
    %1405 = vmatpush1.msra.mxu0 0.0
    %1406 = vmatprep.subr.mxu0 0.0
    %1407 = vmatpush1.msra.mxu0 0.0
    %1408 = vmatprep.subr.mxu0 0.0
    %1409 = vmatpush1.msra.mxu0 0.0
    %1410 = vmatprep.subr.mxu0 0.0
    %1411 = vmatpush1.msra.mxu0 0.0
    %1412 = vmatprep.subr.mxu0 0.0
    %1413 = vmatpush1.msra.mxu0 0.0
    %1414 = vmatprep.subr.mxu0 0.0
    %1415 = vmatpush1.msra.mxu0 0.0
    %1416 = vmatprep.subr.mxu0 0.0
    %1417 = vmatpush1.msra.mxu0 0.0
    %1418 = vmatprep.subr.mxu0 0.0
    %1419 = vmatpush1.msra.mxu0 0.0
    %1420 = vmatprep.subr.mxu0 0.0
    %1421 = vmatpush1.msra.mxu0 0.0
    %1422 = vmatprep.subr.mxu0 0.0
    %1423 = vmatpush1.msra.mxu0 0.0
    %1424 = vmatprep.mubr.f32.mxu0 0.0
    %1425 = vmatmul.mubr.f32.gmra.mrb[0].mxu0 %v1358
    %v1426 = vpop.f32.mrb[0].mxu0
    %v1427 = vadd.f32 0.0, %v1426
    %v1428 = vpop.f32.mrb[0].mxu0
    %1429 = vdwg.mxu0
    %v1430 = vadd.f32 %v1351, %v1427
    %v1431 = vxor.u32 %v1430, 2147483648
    %v1432 = vmul.f32 %v1431, 1.442695
    %v1433 = vpow.pop %v1432
    %v1434 = vadd.f32 %v1433, 1.0
    %v1435 = vrcp.pop %v1434
    %v1436 = vmul.f32 1.0, %v1435
    %v1437 = vtanh.pop %v1430
    %v1438 = vld [vmem:[#allocation5] sm:$0xff]
    %1440 = vrot.lane.b32.xlu0 %v1438, 32
    %v1441 = vpop.permute.xlu0 %1440
    %v1443 = vmul.f32 %v1436, %v1441
    %1445 = vrot.lane.b32.xlu0 %v1437, 64
    %v1446 = vpop.permute.xlu0 %1445
    %v1448 = vmul.f32 %v1436, %v1446
    %1450 = vrot.lane.b32.xlu0 %v1448, 32
    %v1451 = vpop.permute.xlu0 %1450
    %v1453 = vadd.f32 %v1443, %v1451
    %v1454 = vtanh.pop %v1453
    %1456 = vrot.lane.b32.xlu0 %v1454, 64
    %v1457 = vpop.permute.xlu0 %1456
    %v1459 = vmul.f32 %v1436, %v1457
    %1461 = vrot.lane.b32.xlu0 %v1453, 96
    %v1462 = vpop.permute.xlu0 %1461
    %1464 = vst.msk [vmem:[#allocation5] sm:$0xff] %vm200, %v1462
    %1466 = vrot.lane.b32.xlu0 %v1459, 32
    %v1467 = vpop.permute.xlu0 %1466
    %1469 = vst.msk [vmem:[#allocation4] sm:$0xff] %vm200, %v1467
    %1470 = vst.msk [vmem:[#allocation3] sm:$0xff] %vm200, %v1467
    %v1471 = vld [vmem:[%s323] sm:$0xff]
    %v1472 = vld [vmem:[#allocation4] sm:$0xff]
    %v1473 = vld [vmem:[%s5] sm:$0xff]
    %v1474 = vld [vmem:[%s5 + $0x8] sm:$0xff]
    %v1475 = vld [vmem:[%s5 + $0x10] sm:$0xff]
    %v1476 = vld [vmem:[%s5 + $0x18] sm:$0xff]
    %v1478 = vsel %vm200, %v1472, 0
    %1480 = vmatprep.subr.mxu0 0.0
    %1481 = vmatpush1.msra.mxu0 %v1473
    %1482 = vmatprep.subr.mxu0 0.0
    %1483 = vmatpush1.msra.mxu0 %v1474
    %1484 = vmatprep.subr.mxu0 0.0
    %1485 = vmatpush1.msra.mxu0 %v1475
    %1486 = vmatprep.subr.mxu0 0.0
    %1487 = vmatpush1.msra.mxu0 %v1476
    %1488 = vmatprep.subr.mxu0 0.0
    %1489 = vmatpush1.msra.mxu0 0.0
    %1490 = vmatprep.subr.mxu0 0.0
    %1491 = vmatpush1.msra.mxu0 0.0
    %1492 = vmatprep.subr.mxu0 0.0
    %1493 = vmatpush1.msra.mxu0 0.0
    %1494 = vmatprep.subr.mxu0 0.0
    %1495 = vmatpush1.msra.mxu0 0.0
    %1496 = vmatprep.subr.mxu0 0.0
    %1497 = vmatpush1.msra.mxu0 0.0
    %1498 = vmatprep.subr.mxu0 0.0
    %1499 = vmatpush1.msra.mxu0 0.0
    %1500 = vmatprep.subr.mxu0 0.0
    %1501 = vmatpush1.msra.mxu0 0.0
    %1502 = vmatprep.subr.mxu0 0.0
    %1503 = vmatpush1.msra.mxu0 0.0
    %1504 = vmatprep.subr.mxu0 0.0
    %1505 = vmatpush1.msra.mxu0 0.0
    %1506 = vmatprep.subr.mxu0 0.0
    %1507 = vmatpush1.msra.mxu0 0.0
    %1508 = vmatprep.subr.mxu0 0.0
    %1509 = vmatpush1.msra.mxu0 0.0
    %1510 = vmatprep.subr.mxu0 0.0
    %1511 = vmatpush1.msra.mxu0 0.0
    %1512 = vmatprep.subr.mxu0 0.0
    %1513 = vmatpush1.msra.mxu0 0.0
    %1514 = vmatprep.subr.mxu0 0.0
    %1515 = vmatpush1.msra.mxu0 0.0
    %1516 = vmatprep.subr.mxu0 0.0
    %1517 = vmatpush1.msra.mxu0 0.0
    %1518 = vmatprep.subr.mxu0 0.0
    %1519 = vmatpush1.msra.mxu0 0.0
    %1520 = vmatprep.subr.mxu0 0.0
    %1521 = vmatpush1.msra.mxu0 0.0
    %1522 = vmatprep.subr.mxu0 0.0
    %1523 = vmatpush1.msra.mxu0 0.0
    %1524 = vmatprep.subr.mxu0 0.0
    %1525 = vmatpush1.msra.mxu0 0.0
    %1526 = vmatprep.subr.mxu0 0.0
    %1527 = vmatpush1.msra.mxu0 0.0
    %1528 = vmatprep.subr.mxu0 0.0
    %1529 = vmatpush1.msra.mxu0 0.0
    %1530 = vmatprep.subr.mxu0 0.0
    %1531 = vmatpush1.msra.mxu0 0.0
    %1532 = vmatprep.subr.mxu0 0.0
    %1533 = vmatpush1.msra.mxu0 0.0
    %1534 = vmatprep.subr.mxu0 0.0
    %1535 = vmatpush1.msra.mxu0 0.0
    %1536 = vmatprep.subr.mxu0 0.0
    %1537 = vmatpush1.msra.mxu0 0.0
    %1538 = vmatprep.subr.mxu0 0.0
    %1539 = vmatpush1.msra.mxu0 0.0
    %1540 = vmatprep.subr.mxu0 0.0
    %1541 = vmatpush1.msra.mxu0 0.0
    %1542 = vmatprep.subr.mxu0 0.0
    %1543 = vmatpush1.msra.mxu0 0.0
    %1544 = vmatprep.mubr.f32.mxu0 0.0
    %1545 = vmatmul.mubr.f32.gmra.mrb[0].mxu0 %v1478
    %v1546 = vpop.f32.mrb[0].mxu0
    %v1547 = vadd.f32 0.0, %v1546
    %v1548 = vpop.f32.mrb[0].mxu0
    %1549 = vdwg.mxu0
    %v1550 = vadd.f32 %v1471, %v1547
    %v1551 = vxor.u32 %v1550, 2147483648
    %v1552 = vmul.f32 %v1551, 1.442695
    %v1553 = vpow.pop %v1552
    %v1554 = vadd.f32 %v1553, 1.0
    %v1555 = vrcp.pop %v1554
    %v1556 = vmul.f32 1.0, %v1555
    %v1557 = vtanh.pop %v1550
    %v1558 = vld [vmem:[#allocation5] sm:$0xff]
    %1560 = vrot.lane.b32.xlu0 %v1558, 32
    %v1561 = vpop.permute.xlu0 %1560
    %v1563 = vmul.f32 %v1556, %v1561
    %1565 = vrot.lane.b32.xlu0 %v1557, 64
    %v1566 = vpop.permute.xlu0 %1565
    %v1568 = vmul.f32 %v1556, %v1566
    %1570 = vrot.lane.b32.xlu0 %v1568, 32
    %v1571 = vpop.permute.xlu0 %1570
    %v1573 = vadd.f32 %v1563, %v1571
    %v1574 = vtanh.pop %v1573
    %1576 = vrot.lane.b32.xlu0 %v1574, 64
    %v1577 = vpop.permute.xlu0 %1576
    %v1579 = vmul.f32 %v1556, %v1577
    %1581 = vrot.lane.b32.xlu0 %v1573, 96
    %v1582 = vpop.permute.xlu0 %1581
    %1584 = vst.msk [vmem:[#allocation5] sm:$0xff] %vm200, %v1582
    %1586 = vrot.lane.b32.xlu0 %v1579, 32
    %v1587 = vpop.permute.xlu0 %1586
    %1589 = vst.msk [vmem:[#allocation4] sm:$0xff] %vm200, %v1587
    %1590 = vst.msk [vmem:[%s443] sm:$0xff] %vm200, %v1587
    %v1591 = vld [vmem:[%s445] sm:$0xff]
    %v1592 = vld [vmem:[#allocation4] sm:$0xff]
    %v1593 = vld [vmem:[%s5] sm:$0xff]
    %v1594 = vld [vmem:[%s5 + $0x8] sm:$0xff]
    %v1595 = vld [vmem:[%s5 + $0x10] sm:$0xff]
    %v1596 = vld [vmem:[%s5 + $0x18] sm:$0xff]
    %v1598 = vsel %vm200, %v1592, 0
    %1600 = vmatprep.subr.mxu0 0.0
    %1601 = vmatpush1.msra.mxu0 %v1593
    %1602 = vmatprep.subr.mxu0 0.0
    %1603 = vmatpush1.msra.mxu0 %v1594
    %1604 = vmatprep.subr.mxu0 0.0
    %1605 = vmatpush1.msra.mxu0 %v1595
    %1606 = vmatprep.subr.mxu0 0.0
    %1607 = vmatpush1.msra.mxu0 %v1596
    %1608 = vmatprep.subr.mxu0 0.0
    %1609 = vmatpush1.msra.mxu0 0.0
    %1610 = vmatprep.subr.mxu0 0.0
    %1611 = vmatpush1.msra.mxu0 0.0
    %1612 = vmatprep.subr.mxu0 0.0
    %1613 = vmatpush1.msra.mxu0 0.0
    %1614 = vmatprep.subr.mxu0 0.0
    %1615 = vmatpush1.msra.mxu0 0.0
    %1616 = vmatprep.subr.mxu0 0.0
    %1617 = vmatpush1.msra.mxu0 0.0
    %1618 = vmatprep.subr.mxu0 0.0
    %1619 = vmatpush1.msra.mxu0 0.0
    %1620 = vmatprep.subr.mxu0 0.0
    %1621 = vmatpush1.msra.mxu0 0.0
    %1622 = vmatprep.subr.mxu0 0.0
    %1623 = vmatpush1.msra.mxu0 0.0
    %1624 = vmatprep.subr.mxu0 0.0
    %1625 = vmatpush1.msra.mxu0 0.0
    %1626 = vmatprep.subr.mxu0 0.0
    %1627 = vmatpush1.msra.mxu0 0.0
    %1628 = vmatprep.subr.mxu0 0.0
    %1629 = vmatpush1.msra.mxu0 0.0
    %1630 = vmatprep.subr.mxu0 0.0
    %1631 = vmatpush1.msra.mxu0 0.0
    %1632 = vmatprep.subr.mxu0 0.0
    %1633 = vmatpush1.msra.mxu0 0.0
    %1634 = vmatprep.subr.mxu0 0.0
    %1635 = vmatpush1.msra.mxu0 0.0
    %1636 = vmatprep.subr.mxu0 0.0
    %1637 = vmatpush1.msra.mxu0 0.0
    %1638 = vmatprep.subr.mxu0 0.0
    %1639 = vmatpush1.msra.mxu0 0.0
    %1640 = vmatprep.subr.mxu0 0.0
    %1641 = vmatpush1.msra.mxu0 0.0
    %1642 = vmatprep.subr.mxu0 0.0
    %1643 = vmatpush1.msra.mxu0 0.0
    %1644 = vmatprep.subr.mxu0 0.0
    %1645 = vmatpush1.msra.mxu0 0.0
    %1646 = vmatprep.subr.mxu0 0.0
    %1647 = vmatpush1.msra.mxu0 0.0
    %1648 = vmatprep.subr.mxu0 0.0
    %1649 = vmatpush1.msra.mxu0 0.0
    %1650 = vmatprep.subr.mxu0 0.0
    %1651 = vmatpush1.msra.mxu0 0.0
    %1652 = vmatprep.subr.mxu0 0.0
    %1653 = vmatpush1.msra.mxu0 0.0
    %1654 = vmatprep.subr.mxu0 0.0
    %1655 = vmatpush1.msra.mxu0 0.0
    %1656 = vmatprep.subr.mxu0 0.0
    %1657 = vmatpush1.msra.mxu0 0.0
    %1658 = vmatprep.subr.mxu0 0.0
    %1659 = vmatpush1.msra.mxu0 0.0
    %1660 = vmatprep.subr.mxu0 0.0
    %1661 = vmatpush1.msra.mxu0 0.0
    %1662 = vmatprep.subr.mxu0 0.0
    %1663 = vmatpush1.msra.mxu0 0.0
    %1664 = vmatprep.mubr.f32.mxu0 0.0
    %1665 = vmatmul.mubr.f32.gmra.mrb[0].mxu0 %v1598
    %v1666 = vpop.f32.mrb[0].mxu0
    %v1667 = vadd.f32 0.0, %v1666
    %v1668 = vpop.f32.mrb[0].mxu0
    %1669 = vdwg.mxu0
    %v1670 = vadd.f32 %v1591, %v1667
    %v1671 = vxor.u32 %v1670, 2147483648
    %v1672 = vmul.f32 %v1671, 1.442695
    %v1673 = vpow.pop %v1672
    %v1674 = vadd.f32 %v1673, 1.0
    %v1675 = vrcp.pop %v1674
    %v1676 = vmul.f32 1.0, %v1675
    %v1677 = vtanh.pop %v1670
    %v1678 = vld [vmem:[#allocation5] sm:$0xff]
    %1680 = vrot.lane.b32.xlu0 %v1678, 32
    %v1681 = vpop.permute.xlu0 %1680
    %v1683 = vmul.f32 %v1676, %v1681
    %1685 = vrot.lane.b32.xlu0 %v1677, 64
    %v1686 = vpop.permute.xlu0 %1685
    %v1688 = vmul.f32 %v1676, %v1686
    %1690 = vrot.lane.b32.xlu0 %v1688, 32
    %v1691 = vpop.permute.xlu0 %1690
    %v1693 = vadd.f32 %v1683, %v1691
    %v1694 = vtanh.pop %v1693
    %1696 = vrot.lane.b32.xlu0 %v1694, 64
    %v1697 = vpop.permute.xlu0 %1696
    %v1699 = vmul.f32 %v1676, %v1697
    %1701 = vrot.lane.b32.xlu0 %v1693, 96
    %v1702 = vpop.permute.xlu0 %1701
    %1704 = vst.msk [vmem:[#allocation5] sm:$0xff] %vm200, %v1702
    %1706 = vrot.lane.b32.xlu0 %v1699, 32
    %v1707 = vpop.permute.xlu0 %1706
    %1709 = vst.msk [vmem:[#allocation4] sm:$0xff] %vm200, %v1707
    %1710 = vst.msk [vmem:[%s565] sm:$0xff] %vm200, %v1707
    %v1711 = vld [vmem:[%s567] sm:$0xff]
    %v1712 = vld [vmem:[#allocation4] sm:$0xff]
    %v1713 = vld [vmem:[%s5] sm:$0xff]
    %v1714 = vld [vmem:[%s5 + $0x8] sm:$0xff]
    %v1715 = vld [vmem:[%s5 + $0x10] sm:$0xff]
    %v1716 = vld [vmem:[%s5 + $0x18] sm:$0xff]
    %v1718 = vsel %vm200, %v1712, 0
    %1720 = vmatprep.subr.mxu0 0.0
    %1721 = vmatpush1.msra.mxu0 %v1713
    %1722 = vmatprep.subr.mxu0 0.0
    %1723 = vmatpush1.msra.mxu0 %v1714
    %1724 = vmatprep.subr.mxu0 0.0
    %1725 = vmatpush1.msra.mxu0 %v1715
    %1726 = vmatprep.subr.mxu0 0.0
    %1727 = vmatpush1.msra.mxu0 %v1716
    %1728 = vmatprep.subr.mxu0 0.0
    %1729 = vmatpush1.msra.mxu0 0.0
    %1730 = vmatprep.subr.mxu0 0.0
    %1731 = vmatpush1.msra.mxu0 0.0
    %1732 = vmatprep.subr.mxu0 0.0
    %1733 = vmatpush1.msra.mxu0 0.0
    %1734 = vmatprep.subr.mxu0 0.0
    %1735 = vmatpush1.msra.mxu0 0.0
    %1736 = vmatprep.subr.mxu0 0.0
    %1737 = vmatpush1.msra.mxu0 0.0
    %1738 = vmatprep.subr.mxu0 0.0
    %1739 = vmatpush1.msra.mxu0 0.0
    %1740 = vmatprep.subr.mxu0 0.0
    %1741 = vmatpush1.msra.mxu0 0.0
    %1742 = vmatprep.subr.mxu0 0.0
    %1743 = vmatpush1.msra.mxu0 0.0
    %1744 = vmatprep.subr.mxu0 0.0
    %1745 = vmatpush1.msra.mxu0 0.0
    %1746 = vmatprep.subr.mxu0 0.0
    %1747 = vmatpush1.msra.mxu0 0.0
    %1748 = vmatprep.subr.mxu0 0.0
    %1749 = vmatpush1.msra.mxu0 0.0
    %1750 = vmatprep.subr.mxu0 0.0
    %1751 = vmatpush1.msra.mxu0 0.0
    %1752 = vmatprep.subr.mxu0 0.0
    %1753 = vmatpush1.msra.mxu0 0.0
    %1754 = vmatprep.subr.mxu0 0.0
    %1755 = vmatpush1.msra.mxu0 0.0
    %1756 = vmatprep.subr.mxu0 0.0
    %1757 = vmatpush1.msra.mxu0 0.0
    %1758 = vmatprep.subr.mxu0 0.0
    %1759 = vmatpush1.msra.mxu0 0.0
    %1760 = vmatprep.subr.mxu0 0.0
    %1761 = vmatpush1.msra.mxu0 0.0
    %1762 = vmatprep.subr.mxu0 0.0
    %1763 = vmatpush1.msra.mxu0 0.0
    %1764 = vmatprep.subr.mxu0 0.0
    %1765 = vmatpush1.msra.mxu0 0.0
    %1766 = vmatprep.subr.mxu0 0.0
    %1767 = vmatpush1.msra.mxu0 0.0
    %1768 = vmatprep.subr.mxu0 0.0
    %1769 = vmatpush1.msra.mxu0 0.0
    %1770 = vmatprep.subr.mxu0 0.0
    %1771 = vmatpush1.msra.mxu0 0.0
    %1772 = vmatprep.subr.mxu0 0.0
    %1773 = vmatpush1.msra.mxu0 0.0
    %1774 = vmatprep.subr.mxu0 0.0
    %1775 = vmatpush1.msra.mxu0 0.0
    %1776 = vmatprep.subr.mxu0 0.0
    %1777 = vmatpush1.msra.mxu0 0.0
    %1778 = vmatprep.subr.mxu0 0.0
    %1779 = vmatpush1.msra.mxu0 0.0
    %1780 = vmatprep.subr.mxu0 0.0
    %1781 = vmatpush1.msra.mxu0 0.0
    %1782 = vmatprep.subr.mxu0 0.0
    %1783 = vmatpush1.msra.mxu0 0.0
    %1784 = vmatprep.mubr.f32.mxu0 0.0
    %1785 = vmatmul.mubr.f32.gmra.mrb[0].mxu0 %v1718
    %v1786 = vpop.f32.mrb[0].mxu0
    %v1787 = vadd.f32 0.0, %v1786
    %v1788 = vpop.f32.mrb[0].mxu0
    %1789 = vdwg.mxu0
    %v1790 = vadd.f32 %v1711, %v1787
    %v1791 = vxor.u32 %v1790, 2147483648
    %v1792 = vmul.f32 %v1791, 1.442695
    %v1793 = vpow.pop %v1792
    %v1794 = vadd.f32 %v1793, 1.0
    %v1795 = vrcp.pop %v1794
    %v1796 = vmul.f32 1.0, %v1795
    %v1797 = vtanh.pop %v1790
    %v1798 = vld [vmem:[#allocation5] sm:$0xff]
    %1800 = vrot.lane.b32.xlu0 %v1798, 32
    %v1801 = vpop.permute.xlu0 %1800
    %v1803 = vmul.f32 %v1796, %v1801
    %1805 = vrot.lane.b32.xlu0 %v1797, 64
    %v1806 = vpop.permute.xlu0 %1805
    %v1808 = vmul.f32 %v1796, %v1806
    %1810 = vrot.lane.b32.xlu0 %v1808, 32
    %v1811 = vpop.permute.xlu0 %1810
    %v1813 = vadd.f32 %v1803, %v1811
    %v1814 = vtanh.pop %v1813
    %1816 = vrot.lane.b32.xlu0 %v1814, 64
    %v1817 = vpop.permute.xlu0 %1816
    %v1819 = vmul.f32 %v1796, %v1817
    %1821 = vrot.lane.b32.xlu0 %v1813, 96
    %v1822 = vpop.permute.xlu0 %1821
    %1824 = vst.msk [vmem:[#allocation5] sm:$0xff] %vm200, %v1822
    %1826 = vrot.lane.b32.xlu0 %v1819, 32
    %v1827 = vpop.permute.xlu0 %1826
    %1829 = vst.msk [vmem:[#allocation4] sm:$0xff] %vm200, %v1827
    %1830 = vst.msk [vmem:[%s687] sm:$0xff] %vm200, %v1827
    %v1831 = vld [vmem:[%s689] sm:$0xff]
    %v1832 = vld [vmem:[#allocation4] sm:$0xff]
    %v1833 = vld [vmem:[%s5] sm:$0xff]
    %v1834 = vld [vmem:[%s5 + $0x8] sm:$0xff]
    %v1835 = vld [vmem:[%s5 + $0x10] sm:$0xff]
    %v1836 = vld [vmem:[%s5 + $0x18] sm:$0xff]
    %v1838 = vsel %vm200, %v1832, 0
    %1840 = vmatprep.subr.mxu0 0.0
    %1841 = vmatpush1.msra.mxu0 %v1833
    %1842 = vmatprep.subr.mxu0 0.0
    %1843 = vmatpush1.msra.mxu0 %v1834
    %1844 = vmatprep.subr.mxu0 0.0
    %1845 = vmatpush1.msra.mxu0 %v1835
    %1846 = vmatprep.subr.mxu0 0.0
    %1847 = vmatpush1.msra.mxu0 %v1836
    %1848 = vmatprep.subr.mxu0 0.0
    %1849 = vmatpush1.msra.mxu0 0.0
    %1850 = vmatprep.subr.mxu0 0.0
    %1851 = vmatpush1.msra.mxu0 0.0
    %1852 = vmatprep.subr.mxu0 0.0
    %1853 = vmatpush1.msra.mxu0 0.0
    %1854 = vmatprep.subr.mxu0 0.0
    %1855 = vmatpush1.msra.mxu0 0.0
    %1856 = vmatprep.subr.mxu0 0.0
    %1857 = vmatpush1.msra.mxu0 0.0
    %1858 = vmatprep.subr.mxu0 0.0
    %1859 = vmatpush1.msra.mxu0 0.0
    %1860 = vmatprep.subr.mxu0 0.0
    %1861 = vmatpush1.msra.mxu0 0.0
    %1862 = vmatprep.subr.mxu0 0.0
    %1863 = vmatpush1.msra.mxu0 0.0
    %1864 = vmatprep.subr.mxu0 0.0
    %1865 = vmatpush1.msra.mxu0 0.0
    %1866 = vmatprep.subr.mxu0 0.0
    %1867 = vmatpush1.msra.mxu0 0.0
    %1868 = vmatprep.subr.mxu0 0.0
    %1869 = vmatpush1.msra.mxu0 0.0
    %1870 = vmatprep.subr.mxu0 0.0
    %1871 = vmatpush1.msra.mxu0 0.0
    %1872 = vmatprep.subr.mxu0 0.0
    %1873 = vmatpush1.msra.mxu0 0.0
    %1874 = vmatprep.subr.mxu0 0.0
    %1875 = vmatpush1.msra.mxu0 0.0
    %1876 = vmatprep.subr.mxu0 0.0
    %1877 = vmatpush1.msra.mxu0 0.0
    %1878 = vmatprep.subr.mxu0 0.0
    %1879 = vmatpush1.msra.mxu0 0.0
    %1880 = vmatprep.subr.mxu0 0.0
    %1881 = vmatpush1.msra.mxu0 0.0
    %1882 = vmatprep.subr.mxu0 0.0
    %1883 = vmatpush1.msra.mxu0 0.0
    %1884 = vmatprep.subr.mxu0 0.0
    %1885 = vmatpush1.msra.mxu0 0.0
    %1886 = vmatprep.subr.mxu0 0.0
    %1887 = vmatpush1.msra.mxu0 0.0
    %1888 = vmatprep.subr.mxu0 0.0
    %1889 = vmatpush1.msra.mxu0 0.0
    %1890 = vmatprep.subr.mxu0 0.0
    %1891 = vmatpush1.msra.mxu0 0.0
    %1892 = vmatprep.subr.mxu0 0.0
    %1893 = vmatpush1.msra.mxu0 0.0
    %1894 = vmatprep.subr.mxu0 0.0
    %1895 = vmatpush1.msra.mxu0 0.0
    %1896 = vmatprep.subr.mxu0 0.0
    %1897 = vmatpush1.msra.mxu0 0.0
    %1898 = vmatprep.subr.mxu0 0.0
    %1899 = vmatpush1.msra.mxu0 0.0
    %1900 = vmatprep.subr.mxu0 0.0
    %1901 = vmatpush1.msra.mxu0 0.0
    %1902 = vmatprep.subr.mxu0 0.0
    %1903 = vmatpush1.msra.mxu0 0.0
    %1904 = vmatprep.mubr.f32.mxu0 0.0
    %1905 = vmatmul.mubr.f32.gmra.mrb[0].mxu0 %v1838
    %v1906 = vpop.f32.mrb[0].mxu0
    %v1907 = vadd.f32 0.0, %v1906
    %v1908 = vpop.f32.mrb[0].mxu0
    %1909 = vdwg.mxu0
    %v1910 = vadd.f32 %v1831, %v1907
    %v1911 = vxor.u32 %v1910, 2147483648
    %v1912 = vmul.f32 %v1911, 1.442695
    %v1913 = vpow.pop %v1912
    %v1914 = vadd.f32 %v1913, 1.0
    %v1915 = vrcp.pop %v1914
    %v1916 = vmul.f32 1.0, %v1915
    %v1917 = vtanh.pop %v1910
    %v1918 = vld [vmem:[#allocation5] sm:$0xff]
    %1920 = vrot.lane.b32.xlu0 %v1918, 32
    %v1921 = vpop.permute.xlu0 %1920
    %v1923 = vmul.f32 %v1916, %v1921
    %1925 = vrot.lane.b32.xlu0 %v1917, 64
    %v1926 = vpop.permute.xlu0 %1925
    %v1928 = vmul.f32 %v1916, %v1926
    %1930 = vrot.lane.b32.xlu0 %v1928, 32
    %v1931 = vpop.permute.xlu0 %1930
    %v1933 = vadd.f32 %v1923, %v1931
    %v1934 = vtanh.pop %v1933
    %1936 = vrot.lane.b32.xlu0 %v1934, 64
    %v1937 = vpop.permute.xlu0 %1936
    %v1939 = vmul.f32 %v1916, %v1937
    %1941 = vrot.lane.b32.xlu0 %v1933, 96
    %v1942 = vpop.permute.xlu0 %1941
    %1944 = vst.msk [vmem:[#allocation5] sm:$0xff] %vm200, %v1942
    %1946 = vrot.lane.b32.xlu0 %v1939, 32
    %v1947 = vpop.permute.xlu0 %1946
    %1949 = vst.msk [vmem:[#allocation4] sm:$0xff] %vm200, %v1947
    %1950 = vst.msk [vmem:[%s809] sm:$0xff] %vm200, %v1947
    %v1951 = vld [vmem:[%s811] sm:$0xff]
    %v1952 = vld [vmem:[#allocation4] sm:$0xff]
    %v1953 = vld [vmem:[%s5] sm:$0xff]
    %v1954 = vld [vmem:[%s5 + $0x8] sm:$0xff]
    %v1955 = vld [vmem:[%s5 + $0x10] sm:$0xff]
    %v1956 = vld [vmem:[%s5 + $0x18] sm:$0xff]
    %v1958 = vsel %vm200, %v1952, 0
    %1960 = vmatprep.subr.mxu0 0.0
    %1961 = vmatpush1.msra.mxu0 %v1953
    %1962 = vmatprep.subr.mxu0 0.0
    %1963 = vmatpush1.msra.mxu0 %v1954
    %1964 = vmatprep.subr.mxu0 0.0
    %1965 = vmatpush1.msra.mxu0 %v1955
    %1966 = vmatprep.subr.mxu0 0.0
    %1967 = vmatpush1.msra.mxu0 %v1956
    %1968 = vmatprep.subr.mxu0 0.0
    %1969 = vmatpush1.msra.mxu0 0.0
    %1970 = vmatprep.subr.mxu0 0.0
    %1971 = vmatpush1.msra.mxu0 0.0
    %1972 = vmatprep.subr.mxu0 0.0
    %1973 = vmatpush1.msra.mxu0 0.0
    %1974 = vmatprep.subr.mxu0 0.0
    %1975 = vmatpush1.msra.mxu0 0.0
    %1976 = vmatprep.subr.mxu0 0.0
    %1977 = vmatpush1.msra.mxu0 0.0
    %1978 = vmatprep.subr.mxu0 0.0
    %1979 = vmatpush1.msra.mxu0 0.0
    %1980 = vmatprep.subr.mxu0 0.0
    %1981 = vmatpush1.msra.mxu0 0.0
    %1982 = vmatprep.subr.mxu0 0.0
    %1983 = vmatpush1.msra.mxu0 0.0
    %1984 = vmatprep.subr.mxu0 0.0
    %1985 = vmatpush1.msra.mxu0 0.0
    %1986 = vmatprep.subr.mxu0 0.0
    %1987 = vmatpush1.msra.mxu0 0.0
    %1988 = vmatprep.subr.mxu0 0.0
    %1989 = vmatpush1.msra.mxu0 0.0
    %1990 = vmatprep.subr.mxu0 0.0
    %1991 = vmatpush1.msra.mxu0 0.0
    %1992 = vmatprep.subr.mxu0 0.0
    %1993 = vmatpush1.msra.mxu0 0.0
    %1994 = vmatprep.subr.mxu0 0.0
    %1995 = vmatpush1.msra.mxu0 0.0
    %1996 = vmatprep.subr.mxu0 0.0
    %1997 = vmatpush1.msra.mxu0 0.0
    %1998 = vmatprep.subr.mxu0 0.0
    %1999 = vmatpush1.msra.mxu0 0.0
    %2000 = vmatprep.subr.mxu0 0.0
    %2001 = vmatpush1.msra.mxu0 0.0
    %2002 = vmatprep.subr.mxu0 0.0
    %2003 = vmatpush1.msra.mxu0 0.0
    %2004 = vmatprep.subr.mxu0 0.0
    %2005 = vmatpush1.msra.mxu0 0.0
    %2006 = vmatprep.subr.mxu0 0.0
    %2007 = vmatpush1.msra.mxu0 0.0
    %2008 = vmatprep.subr.mxu0 0.0
    %2009 = vmatpush1.msra.mxu0 0.0
    %2010 = vmatprep.subr.mxu0 0.0
    %2011 = vmatpush1.msra.mxu0 0.0
    %2012 = vmatprep.subr.mxu0 0.0
    %2013 = vmatpush1.msra.mxu0 0.0
    %2014 = vmatprep.subr.mxu0 0.0
    %2015 = vmatpush1.msra.mxu0 0.0
    %2016 = vmatprep.subr.mxu0 0.0
    %2017 = vmatpush1.msra.mxu0 0.0
    %2018 = vmatprep.subr.mxu0 0.0
    %2019 = vmatpush1.msra.mxu0 0.0
    %2020 = vmatprep.subr.mxu0 0.0
    %2021 = vmatpush1.msra.mxu0 0.0
    %2022 = vmatprep.subr.mxu0 0.0
    %2023 = vmatpush1.msra.mxu0 0.0
    %2024 = vmatprep.mubr.f32.mxu0 0.0
    %2025 = vmatmul.mubr.f32.gmra.mrb[0].mxu0 %v1958
    %v2026 = vpop.f32.mrb[0].mxu0
    %v2027 = vadd.f32 0.0, %v2026
    %v2028 = vpop.f32.mrb[0].mxu0
    %2029 = vdwg.mxu0
    %v2030 = vadd.f32 %v1951, %v2027
    %v2031 = vxor.u32 %v2030, 2147483648
    %v2032 = vmul.f32 %v2031, 1.442695
    %v2033 = vpow.pop %v2032
    %v2034 = vadd.f32 %v2033, 1.0
    %v2035 = vrcp.pop %v2034
    %v2036 = vmul.f32 1.0, %v2035
    %v2037 = vtanh.pop %v2030
    %v2038 = vld [vmem:[#allocation5] sm:$0xff]
    %2040 = vrot.lane.b32.xlu0 %v2038, 32
    %v2041 = vpop.permute.xlu0 %2040
    %v2043 = vmul.f32 %v2036, %v2041
    %2045 = vrot.lane.b32.xlu0 %v2037, 64
    %v2046 = vpop.permute.xlu0 %2045
    %v2048 = vmul.f32 %v2036, %v2046
    %2050 = vrot.lane.b32.xlu0 %v2048, 32
    %v2051 = vpop.permute.xlu0 %2050
    %v2053 = vadd.f32 %v2043, %v2051
    %v2054 = vtanh.pop %v2053
    %2056 = vrot.lane.b32.xlu0 %v2054, 64
    %v2057 = vpop.permute.xlu0 %2056
    %v2059 = vmul.f32 %v2036, %v2057
    %2061 = vrot.lane.b32.xlu0 %v2053, 96
    %v2062 = vpop.permute.xlu0 %2061
    %2064 = vst.msk [vmem:[#allocation5] sm:$0xff] %vm200, %v2062
    %2066 = vrot.lane.b32.xlu0 %v2059, 32
    %v2067 = vpop.permute.xlu0 %2066
    %2069 = vst.msk [vmem:[#allocation4] sm:$0xff] %vm200, %v2067
    %2070 = vst.msk [vmem:[%s931] sm:$0xff] %vm200, %v2067
    %v2071 = vld [vmem:[%s933] sm:$0xff]
    %v2072 = vld [vmem:[#allocation4] sm:$0xff]
    %v2073 = vld [vmem:[%s5] sm:$0xff]
    %v2074 = vld [vmem:[%s5 + $0x8] sm:$0xff]
    %v2075 = vld [vmem:[%s5 + $0x10] sm:$0xff]
    %v2076 = vld [vmem:[%s5 + $0x18] sm:$0xff]
    %v2078 = vsel %vm200, %v2072, 0
    %2080 = vmatprep.subr.mxu0 0.0
    %2081 = vmatpush1.msra.mxu0 %v2073
    %2082 = vmatprep.subr.mxu0 0.0
    %2083 = vmatpush1.msra.mxu0 %v2074
    %2084 = vmatprep.subr.mxu0 0.0
    %2085 = vmatpush1.msra.mxu0 %v2075
    %2086 = vmatprep.subr.mxu0 0.0
    %2087 = vmatpush1.msra.mxu0 %v2076
    %2088 = vmatprep.subr.mxu0 0.0
    %2089 = vmatpush1.msra.mxu0 0.0
    %2090 = vmatprep.subr.mxu0 0.0
    %2091 = vmatpush1.msra.mxu0 0.0
    %2092 = vmatprep.subr.mxu0 0.0
    %2093 = vmatpush1.msra.mxu0 0.0
    %2094 = vmatprep.subr.mxu0 0.0
    %2095 = vmatpush1.msra.mxu0 0.0
    %2096 = vmatprep.subr.mxu0 0.0
    %2097 = vmatpush1.msra.mxu0 0.0
    %2098 = vmatprep.subr.mxu0 0.0
    %2099 = vmatpush1.msra.mxu0 0.0
    %2100 = vmatprep.subr.mxu0 0.0
    %2101 = vmatpush1.msra.mxu0 0.0
    %2102 = vmatprep.subr.mxu0 0.0
    %2103 = vmatpush1.msra.mxu0 0.0
    %2104 = vmatprep.subr.mxu0 0.0
    %2105 = vmatpush1.msra.mxu0 0.0
    %2106 = vmatprep.subr.mxu0 0.0
    %2107 = vmatpush1.msra.mxu0 0.0
    %2108 = vmatprep.subr.mxu0 0.0
    %2109 = vmatpush1.msra.mxu0 0.0
    %2110 = vmatprep.subr.mxu0 0.0
    %2111 = vmatpush1.msra.mxu0 0.0
    %2112 = vmatprep.subr.mxu0 0.0
    %2113 = vmatpush1.msra.mxu0 0.0
    %2114 = vmatprep.subr.mxu0 0.0
    %2115 = vmatpush1.msra.mxu0 0.0
    %2116 = vmatprep.subr.mxu0 0.0
    %2117 = vmatpush1.msra.mxu0 0.0
    %2118 = vmatprep.subr.mxu0 0.0
    %2119 = vmatpush1.msra.mxu0 0.0
    %2120 = vmatprep.subr.mxu0 0.0
    %2121 = vmatpush1.msra.mxu0 0.0
    %2122 = vmatprep.subr.mxu0 0.0
    %2123 = vmatpush1.msra.mxu0 0.0
    %2124 = vmatprep.subr.mxu0 0.0
    %2125 = vmatpush1.msra.mxu0 0.0
    %2126 = vmatprep.subr.mxu0 0.0
    %2127 = vmatpush1.msra.mxu0 0.0
    %2128 = vmatprep.subr.mxu0 0.0
    %2129 = vmatpush1.msra.mxu0 0.0
    %2130 = vmatprep.subr.mxu0 0.0
    %2131 = vmatpush1.msra.mxu0 0.0
    %2132 = vmatprep.subr.mxu0 0.0
    %2133 = vmatpush1.msra.mxu0 0.0
    %2134 = vmatprep.subr.mxu0 0.0
    %2135 = vmatpush1.msra.mxu0 0.0
    %2136 = vmatprep.subr.mxu0 0.0
    %2137 = vmatpush1.msra.mxu0 0.0
    %2138 = vmatprep.subr.mxu0 0.0
    %2139 = vmatpush1.msra.mxu0 0.0
    %2140 = vmatprep.subr.mxu0 0.0
    %2141 = vmatpush1.msra.mxu0 0.0
    %2142 = vmatprep.subr.mxu0 0.0
    %2143 = vmatpush1.msra.mxu0 0.0
    %2144 = vmatprep.mubr.f32.mxu0 0.0
    %2145 = vmatmul.mubr.f32.gmra.mrb[0].mxu0 %v2078
    %v2146 = vpop.f32.mrb[0].mxu0
    %v2147 = vadd.f32 0.0, %v2146
    %v2148 = vpop.f32.mrb[0].mxu0
    %2149 = vdwg.mxu0
    %v2150 = vadd.f32 %v2071, %v2147
    %v2151 = vxor.u32 %v2150, 2147483648
    %v2152 = vmul.f32 %v2151, 1.442695
    %v2153 = vpow.pop %v2152
    %v2154 = vadd.f32 %v2153, 1.0
    %v2155 = vrcp.pop %v2154
    %v2156 = vmul.f32 1.0, %v2155
    %v2157 = vtanh.pop %v2150
    %v2158 = vld [vmem:[#allocation5] sm:$0xff]
    %2160 = vrot.lane.b32.xlu0 %v2158, 32
    %v2161 = vpop.permute.xlu0 %2160
    %v2163 = vmul.f32 %v2156, %v2161
    %2165 = vrot.lane.b32.xlu0 %v2157, 64
    %v2166 = vpop.permute.xlu0 %2165
    %v2168 = vmul.f32 %v2156, %v2166
    %2170 = vrot.lane.b32.xlu0 %v2168, 32
    %v2171 = vpop.permute.xlu0 %2170
    %v2173 = vadd.f32 %v2163, %v2171
    %v2174 = vtanh.pop %v2173
    %2176 = vrot.lane.b32.xlu0 %v2174, 64
    %v2177 = vpop.permute.xlu0 %2176
    %v2179 = vmul.f32 %v2156, %v2177
    %2181 = vrot.lane.b32.xlu0 %v2173, 96
    %v2182 = vpop.permute.xlu0 %2181
    %2184 = vst.msk [vmem:[#allocation5] sm:$0xff] %vm200, %v2182
    %2186 = vrot.lane.b32.xlu0 %v2179, 32
    %v2187 = vpop.permute.xlu0 %2186
    %2189 = vst.msk [vmem:[#allocation4] sm:$0xff] %vm200, %v2187
    %2190 = vst.msk [vmem:[%s1053] sm:$0xff] %vm200, %v2187
    %v2191 = vld [vmem:[%s1055] sm:$0xff]
    %v2192 = vld [vmem:[#allocation4] sm:$0xff]
    %v2193 = vld [vmem:[%s5] sm:$0xff]
    %v2194 = vld [vmem:[%s5 + $0x8] sm:$0xff]
    %v2195 = vld [vmem:[%s5 + $0x10] sm:$0xff]
    %v2196 = vld [vmem:[%s5 + $0x18] sm:$0xff]
    %v2198 = vsel %vm200, %v2192, 0
    %2200 = vmatprep.subr.mxu0 0.0
    %2201 = vmatpush1.msra.mxu0 %v2193
    %2202 = vmatprep.subr.mxu0 0.0
    %2203 = vmatpush1.msra.mxu0 %v2194
    %2204 = vmatprep.subr.mxu0 0.0
    %2205 = vmatpush1.msra.mxu0 %v2195
    %2206 = vmatprep.subr.mxu0 0.0
    %2207 = vmatpush1.msra.mxu0 %v2196
    %2208 = vmatprep.subr.mxu0 0.0
    %2209 = vmatpush1.msra.mxu0 0.0
    %2210 = vmatprep.subr.mxu0 0.0
    %2211 = vmatpush1.msra.mxu0 0.0
    %2212 = vmatprep.subr.mxu0 0.0
    %2213 = vmatpush1.msra.mxu0 0.0
    %2214 = vmatprep.subr.mxu0 0.0
    %2215 = vmatpush1.msra.mxu0 0.0
    %2216 = vmatprep.subr.mxu0 0.0
    %2217 = vmatpush1.msra.mxu0 0.0
    %2218 = vmatprep.subr.mxu0 0.0
    %2219 = vmatpush1.msra.mxu0 0.0
    %2220 = vmatprep.subr.mxu0 0.0
    %2221 = vmatpush1.msra.mxu0 0.0
    %2222 = vmatprep.subr.mxu0 0.0
    %2223 = vmatpush1.msra.mxu0 0.0
    %2224 = vmatprep.subr.mxu0 0.0
    %2225 = vmatpush1.msra.mxu0 0.0
    %2226 = vmatprep.subr.mxu0 0.0
    %2227 = vmatpush1.msra.mxu0 0.0
    %2228 = vmatprep.subr.mxu0 0.0
    %2229 = vmatpush1.msra.mxu0 0.0
    %2230 = vmatprep.subr.mxu0 0.0
    %2231 = vmatpush1.msra.mxu0 0.0
    %2232 = vmatprep.subr.mxu0 0.0
    %2233 = vmatpush1.msra.mxu0 0.0
    %2234 = vmatprep.subr.mxu0 0.0
    %2235 = vmatpush1.msra.mxu0 0.0
    %2236 = vmatprep.subr.mxu0 0.0
    %2237 = vmatpush1.msra.mxu0 0.0
    %2238 = vmatprep.subr.mxu0 0.0
    %2239 = vmatpush1.msra.mxu0 0.0
    %2240 = vmatprep.subr.mxu0 0.0
    %2241 = vmatpush1.msra.mxu0 0.0
    %2242 = vmatprep.subr.mxu0 0.0
    %2243 = vmatpush1.msra.mxu0 0.0
    %2244 = vmatprep.subr.mxu0 0.0
    %2245 = vmatpush1.msra.mxu0 0.0
    %2246 = vmatprep.subr.mxu0 0.0
    %2247 = vmatpush1.msra.mxu0 0.0
    %2248 = vmatprep.subr.mxu0 0.0
    %2249 = vmatpush1.msra.mxu0 0.0
    %2250 = vmatprep.subr.mxu0 0.0
    %2251 = vmatpush1.msra.mxu0 0.0
    %2252 = vmatprep.subr.mxu0 0.0
    %2253 = vmatpush1.msra.mxu0 0.0
    %2254 = vmatprep.subr.mxu0 0.0
    %2255 = vmatpush1.msra.mxu0 0.0
    %2256 = vmatprep.subr.mxu0 0.0
    %2257 = vmatpush1.msra.mxu0 0.0
    %2258 = vmatprep.subr.mxu0 0.0
    %2259 = vmatpush1.msra.mxu0 0.0
    %2260 = vmatprep.subr.mxu0 0.0
    %2261 = vmatpush1.msra.mxu0 0.0
    %2262 = vmatprep.subr.mxu0 0.0
    %2263 = vmatpush1.msra.mxu0 0.0
    %2264 = vmatprep.mubr.f32.mxu0 0.0
    %2265 = vmatmul.mubr.f32.gmra.mrb[0].mxu0 %v2198
    %v2266 = vpop.f32.mrb[0].mxu0
    %v2267 = vadd.f32 0.0, %v2266
    %v2268 = vpop.f32.mrb[0].mxu0
    %2269 = vdwg.mxu0
    %v2270 = vadd.f32 %v2191, %v2267
    %v2271 = vxor.u32 %v2270, 2147483648
    %v2272 = vmul.f32 %v2271, 1.442695
    %v2273 = vpow.pop %v2272
    %v2274 = vadd.f32 %v2273, 1.0
    %v2275 = vrcp.pop %v2274
    %v2276 = vmul.f32 1.0, %v2275
    %v2277 = vtanh.pop %v2270
    %v2278 = vld [vmem:[#allocation5] sm:$0xff]
    %2280 = vrot.lane.b32.xlu0 %v2278, 32
    %v2281 = vpop.permute.xlu0 %2280
    %v2283 = vmul.f32 %v2276, %v2281
    %2285 = vrot.lane.b32.xlu0 %v2277, 64
    %v2286 = vpop.permute.xlu0 %2285
    %v2288 = vmul.f32 %v2276, %v2286
    %2290 = vrot.lane.b32.xlu0 %v2288, 32
    %v2291 = vpop.permute.xlu0 %2290
    %v2293 = vadd.f32 %v2283, %v2291
    %v2294 = vtanh.pop %v2293
    %2296 = vrot.lane.b32.xlu0 %v2294, 64
    %v2297 = vpop.permute.xlu0 %2296
    %v2299 = vmul.f32 %v2276, %v2297
    %2301 = vrot.lane.b32.xlu0 %v2293, 96
    %v2302 = vpop.permute.xlu0 %2301
    %2304 = vst.msk [vmem:[#allocation5] sm:$0xff] %vm200, %v2302
    %2306 = vrot.lane.b32.xlu0 %v2299, 32
    %v2307 = vpop.permute.xlu0 %2306
    %2309 = vst.msk [vmem:[#allocation4] sm:$0xff] %vm200, %v2307
    %2310 = vst.msk [vmem:[%s1175] sm:$0xff] %vm200, %v2307
    %v2311 = vld [vmem:[#allocation3] sm:$0xff]
    %v2312 = vld [vmem:[#allocation3 + $0x8] sm:$0xff]
    %v2313 = vld [vmem:[#allocation3 + $0x10] sm:$0xff]
    %v2314 = vld [vmem:[#allocation3 + $0x18] sm:$0xff]
    %v2315 = vld [vmem:[#allocation3 + $0x20] sm:$0xff]
    %v2316 = vld [vmem:[#allocation3 + $0x28] sm:$0xff]
    %v2317 = vld [vmem:[#allocation3 + $0x30] sm:$0xff]
    %v2318 = vld [vmem:[#allocation3 + $0x38] sm:$0xff]
    %2327 = vrot.lane.b32.xlu0 %v2311, 32
    %v2328 = vpop.permute.xlu0 %2327
    %2329 = vrot.lane.b32.xlu0 %v2312, 32
    %v2330 = vpop.permute.xlu0 %2329
    %2331 = vrot.lane.b32.xlu0 %v2313, 32
    %v2332 = vpop.permute.xlu0 %2331
    %2333 = vrot.lane.b32.xlu0 %v2314, 32
    %v2334 = vpop.permute.xlu0 %2333
    %2335 = vrot.lane.b32.xlu0 %v2315, 32
    %v2336 = vpop.permute.xlu0 %2335
    %2337 = vrot.lane.b32.xlu0 %v2316, 32
    %v2338 = vpop.permute.xlu0 %2337
    %2339 = vrot.lane.b32.xlu0 %v2317, 32
    %v2340 = vpop.permute.xlu0 %2339
    %2341 = vrot.lane.b32.xlu0 %v2318, 32
    %v2342 = vpop.permute.xlu0 %2341
    %vm2351 = vcmask 523520
    %2352 = vst.msk [vmem:[#allocation9] sm:$0xff] %vm2351, %v2328
    %2353 = vst.msk [vmem:[#allocation9 + $0x8] sm:$0xff] %vm2351, %v2330
    %2354 = vst.msk [vmem:[#allocation9 + $0x10] sm:$0xff] %vm2351, %v2332
    %2355 = vst.msk [vmem:[#allocation9 + $0x18] sm:$0xff] %vm2351, %v2334
    %2356 = vst.msk [vmem:[#allocation9 + $0x20] sm:$0xff] %vm2351, %v2336
    %2357 = vst.msk [vmem:[#allocation9 + $0x28] sm:$0xff] %vm2351, %v2338
    %2358 = vst.msk [vmem:[#allocation9 + $0x30] sm:$0xff] %vm2351, %v2340
    %2359 = vst.msk [vmem:[#allocation9 + $0x38] sm:$0xff] %vm2351, %v2342
    // Predicated region
    $region34: #{tpu_custom_call.1} parent=1 // pred_check
      _
    $region35: #{tpu_custom_call.1} parent=1 // pred_check_branch
      %2361 = sbr.rel (0) target = $region37
    $region36: #{tpu_custom_call.1} parent=1 // pred_region
      %s2363 = ssub.s32 1024, 1024
      %2364 = vsyncadd [#allocation8], %s2363
      %s2365 = sshll.u32 [#allocation9], 4
      %s2366 = int_to_ptr.vmem [resolvable:$true] %s2365
      %2371 = dma.vmem_to_hbm [thread:$0]  %s2366, 1024, %s7, [#allocation8], 128, 128, 8
    $region37: #{tpu_custom_call.1} parent=1 // pred_fallthru
      _
    // Predicated region
    $region38: #{tpu_custom_call.1} parent=1 // pred_check
      _
    $region39: #{tpu_custom_call.1} parent=1 // pred_check_branch
      %2373 = sbr.rel (0) target = $region41
    $region40: #{tpu_custom_call.1} parent=1 // pred_region
      %2374 = dma.done [#allocation8], 1024
    $region41: #{tpu_custom_call.1} parent=1 // pred_fallthru
      _
    %2375 = vsyncpa [#allocation7], 1
    %2376 = vsyncpa [#allocation8], 1

</llo_original>
